<compile_context>
chip_gen: v7x
topology: tpu7x:2x2x1
jax: 0.10.0
libtpu: 0.0.40
codegen_flags: <defaults>
</compile_context>

<pallas_src>
import functools

import jax
import jax.numpy as jnp
from jax import lax
from jax.experimental import pallas as pl
from jax.experimental.pallas import tpu as pltpu


_VMEM_LIMIT = 64 * 1024 * 1024  # <= v7x physical; v5e/v6e have 128 MiB


def _round_up(v, m):
    return ((v + m - 1) // m) * m


def _choose_tiling(n):
    """Return (n_pad, tn, tk).  Big tiles (step overhead is ~0.35us, small
    tiles leave the SAGE layers overhead-bound); n_pad >= 128 keeps the
    adjacency blocks lane-dense even for tiny graphs."""
    if n <= 256:
        n_pad = _round_up(max(n, 128), 128)      # 128 or 256, single block
        return n_pad, n_pad, n_pad
    if n <= 2048:
        n_pad = _round_up(n, 256)
        tk = 512 if n_pad % 512 == 0 else 256
        return n_pad, 256, tk
    n_pad = _round_up(n, 512)
    return n_pad, 512, 512


# ----------------------------------------------------------------------------
# kernel bodies
# ----------------------------------------------------------------------------
def _sage_layer_kernel(h_k_ref, h_i_ref, adj_ref, invdeg_ref, ws_ref, wn_ref,
                       b_ref, o_ref, agg_acc):
    """Encoder SAGE layer (relu).  int8 adjacency, degree scaling in epilogue."""
    k = pl.program_id(1)

    @pl.when(k == 0)
    def _():
        agg_acc[...] = jnp.zeros_like(agg_acc)

    adj_bf = adj_ref[...].astype(jnp.bfloat16)
    agg_acc[...] += jnp.dot(adj_bf, h_k_ref[...],
                            preferred_element_type=jnp.float32)

    @pl.when(k == pl.num_programs(1) - 1)
    def _():
        agg = (agg_acc[...] * invdeg_ref[...]).astype(jnp.bfloat16)
        out = (jnp.dot(h_i_ref[...], ws_ref[...],
                       preferred_element_type=jnp.float32)
               + jnp.dot(agg, wn_ref[...],
                         preferred_element_type=jnp.float32)
               + b_ref[...])
        o_ref[...] = jnp.maximum(out, 0.0).astype(o_ref.dtype)


def _sage_last_enc_kernel(h_k_ref, h_i_ref, adj_ref, invdeg_ref, keep_ref,
                          valid_ref, ws_ref, wn_ref, b_ref, we2d_ref,
                          rep_ref, emb_ref, agg_acc):
    """Last encoder layer fused with: mean-pool embedding partials and
    encoder_to_decoder (no bias) + re-mask rep[mask_nodes] = 0."""
    k = pl.program_id(1)

    @pl.when(k == 0)
    def _():
        agg_acc[...] = jnp.zeros_like(agg_acc)

    adj_bf = adj_ref[...].astype(jnp.bfloat16)
    agg_acc[...] += jnp.dot(adj_bf, h_k_ref[...],
                            preferred_element_type=jnp.float32)

    @pl.when(k == pl.num_programs(1) - 1)
    def _():
        agg = (agg_acc[...] * invdeg_ref[...]).astype(jnp.bfloat16)
        h = (jnp.dot(h_i_ref[...], ws_ref[...],
                     preferred_element_type=jnp.float32)
             + jnp.dot(agg, wn_ref[...],
                       preferred_element_type=jnp.float32)
             + b_ref[...])
        h = jnp.maximum(h, 0.0)                                  # (tn, dp_out) f32

        # per-row-block partial sum of the mean-pool graph embedding (row 0)
        part = jnp.sum(h * valid_ref[...], axis=0, keepdims=True)  # (1, dp_out)
        row = lax.broadcasted_iota(jnp.int32, emb_ref.shape, 0)
        emb_ref[...] = jnp.where(row == 0, part, 0.0)

        # fused encoder_to_decoder + re-mask (h never goes to HBM)
        rep = jnp.dot(h.astype(jnp.bfloat16), we2d_ref[...],
                      preferred_element_type=jnp.float32) * keep_ref[...]
        rep_ref[...] = rep.astype(rep_ref.dtype)


def _dec_sage_loss_kernel(rep_k_ref, rep_i_ref, adj_ref, invdeg_ref, x_i_ref,
                          mask_i_ref, ws_ref, wn_ref, b_ref, part_ref, agg_acc,
                          *, alpha):
    """Decoder SAGE layer (no activation) + SCE-loss partials per row block."""
    k = pl.program_id(1)

    @pl.when(k == 0)
    def _():
        agg_acc[...] = jnp.zeros_like(agg_acc)

    adj_bf = adj_ref[...].astype(jnp.bfloat16)
    agg_acc[...] += jnp.dot(adj_bf, rep_k_ref[...],
                            preferred_element_type=jnp.float32)

    @pl.when(k == pl.num_programs(1) - 1)
    def _():
        agg = (agg_acc[...] * invdeg_ref[...]).astype(jnp.bfloat16)
        recon = (jnp.dot(rep_i_ref[...], ws_ref[...],
                         preferred_element_type=jnp.float32)
                 + jnp.dot(agg, wn_ref[...],
                           preferred_element_type=jnp.float32)
                 + b_ref[...])                                   # (tn, dp_in) f32
        x = x_i_ref[...]                                         # original feats
        eps2 = 1e-24                                             # (1e-12)^2
        rn = recon * lax.rsqrt(
            jnp.maximum(jnp.sum(recon * recon, axis=-1, keepdims=True), eps2))
        xn = x * lax.rsqrt(
            jnp.maximum(jnp.sum(x * x, axis=-1, keepdims=True), eps2))
        cos = jnp.sum(rn * xn, axis=-1, keepdims=True)           # (tn, 1)
        d = 1.0 - cos
        per = d
        for _ in range(int(alpha) - 1):                          # integer power
            per = per * d
        m = mask_i_ref[...]                                      # (tn, 1)
        num = jnp.sum(per * m, axis=0, keepdims=True)            # (1, 1)
        den = jnp.sum(m, axis=0, keepdims=True)                  # (1, 1)
        row = lax.broadcasted_iota(jnp.int32, part_ref.shape, 0)
        col = lax.broadcasted_iota(jnp.int32, part_ref.shape, 1)
        part_ref[...] = (jnp.where(jnp.logical_and(row == 0, col == 0), num, 0.0)
                         + jnp.where(jnp.logical_and(row == 0, col == 1), den, 0.0))


# ----------------------------------------------------------------------------
# pallas_call wrappers
# ----------------------------------------------------------------------------
def sage_layer(h, adj_i8, invdeg, ws, wn, b, *, tn, tk):
    n_pad, dp_in = h.shape
    dp_out = ws.shape[1]
    grid = (n_pad // tn, n_pad // tk)
    return pl.pallas_call(
        _sage_layer_kernel,
        out_shape=jax.ShapeDtypeStruct((n_pad, dp_out), jnp.bfloat16),
        grid=grid,
        in_specs=[
            pl.BlockSpec((tk, dp_in), lambda i, k: (k, 0)),           # H K-tile
            pl.BlockSpec((tn, dp_in), lambda i, k: (i, 0)),           # H row block
            pl.BlockSpec((tn, tk), lambda i, k: (i, k)),              # adj int8
            pl.BlockSpec((tn, 1), lambda i, k: (i, 0)),               # 1/deg
            pl.BlockSpec((dp_in, dp_out), lambda i, k: (0, 0)),       # W_self
            pl.BlockSpec((dp_in, dp_out), lambda i, k: (0, 0)),       # W_neigh
            pl.BlockSpec((1, dp_out), lambda i, k: (0, 0)),           # bias
        ],
        out_specs=pl.BlockSpec((tn, dp_out), lambda i, k: (i, 0)),
        scratch_shapes=[pltpu.VMEM((tn, dp_in), jnp.float32)],
        compiler_params=pltpu.CompilerParams(
            dimension_semantics=("parallel", "arbitrary"),
            vmem_limit_bytes=_VMEM_LIMIT),
    )(h, h, adj_i8, invdeg, ws, wn, b)


def sage_last_enc_layer(h, adj_i8, invdeg, keep_col, valid_col, ws, wn, b,
                        w_e2d, *, tn, tk):
    n_pad, dp_in = h.shape
    dp_out = ws.shape[1]
    nb = n_pad // tn
    grid = (nb, n_pad // tk)
    return pl.pallas_call(
        _sage_last_enc_kernel,
        out_shape=(jax.ShapeDtypeStruct((n_pad, dp_out), jnp.bfloat16),
                   jax.ShapeDtypeStruct((nb * 8, dp_out), jnp.float32)),
        grid=grid,
        in_specs=[
            pl.BlockSpec((tk, dp_in), lambda i, k: (k, 0)),
            pl.BlockSpec((tn, dp_in), lambda i, k: (i, 0)),
            pl.BlockSpec((tn, tk), lambda i, k: (i, k)),
            pl.BlockSpec((tn, 1), lambda i, k: (i, 0)),               # 1/deg
            pl.BlockSpec((tn, 1), lambda i, k: (i, 0)),               # keep
            pl.BlockSpec((tn, 1), lambda i, k: (i, 0)),               # valid rows
            pl.BlockSpec((dp_in, dp_out), lambda i, k: (0, 0)),
            pl.BlockSpec((dp_in, dp_out), lambda i, k: (0, 0)),
            pl.BlockSpec((1, dp_out), lambda i, k: (0, 0)),
            pl.BlockSpec((dp_out, dp_out), lambda i, k: (0, 0)),      # W_e2d^T
        ],
        out_specs=(pl.BlockSpec((tn, dp_out), lambda i, k: (i, 0)),
                   pl.BlockSpec((8, dp_out), lambda i, k: (i, 0))),
        scratch_shapes=[pltpu.VMEM((tn, dp_in), jnp.float32)],
        compiler_params=pltpu.CompilerParams(
            dimension_semantics=("parallel", "arbitrary"),
            vmem_limit_bytes=_VMEM_LIMIT),
    )(h, h, adj_i8, invdeg, keep_col, valid_col, ws, wn, b, w_e2d)


def decoder_sage_loss(rep, adj_i8, invdeg, x_f32, mask_col, ws, wn, b,
                      *, tn, tk, alpha):
    n_pad, dp_h = rep.shape
    dp_in = ws.shape[1]
    nb = n_pad // tn
    grid = (nb, n_pad // tk)
    partials = pl.pallas_call(
        functools.partial(_dec_sage_loss_kernel, alpha=alpha),
        out_shape=jax.ShapeDtypeStruct((nb * 8, 128), jnp.float32),
        grid=grid,
        in_specs=[
            pl.BlockSpec((tk, dp_h), lambda i, k: (k, 0)),            # rep K-tile
            pl.BlockSpec((tn, dp_h), lambda i, k: (i, 0)),            # rep rows
            pl.BlockSpec((tn, tk), lambda i, k: (i, k)),              # adj int8
            pl.BlockSpec((tn, 1), lambda i, k: (i, 0)),               # 1/deg
            pl.BlockSpec((tn, dp_in), lambda i, k: (i, 0)),           # x rows (f32)
            pl.BlockSpec((tn, 1), lambda i, k: (i, 0)),               # mask rows
            pl.BlockSpec((dp_h, dp_in), lambda i, k: (0, 0)),
            pl.BlockSpec((dp_h, dp_in), lambda i, k: (0, 0)),
            pl.BlockSpec((1, dp_in), lambda i, k: (0, 0)),
        ],
        out_specs=pl.BlockSpec((8, 128), lambda i, k: (i, 0)),
        scratch_shapes=[pltpu.VMEM((tn, dp_h), jnp.float32)],
        compiler_params=pltpu.CompilerParams(
            dimension_semantics=("parallel", "arbitrary"),
            vmem_limit_bytes=_VMEM_LIMIT),
    )(rep, rep, adj_i8, invdeg, x_f32, mask_col, ws, wn, b)
    num = jnp.sum(partials[:, 0])
    den = jnp.sum(partials[:, 1])
    return num / jnp.maximum(den, 1.0)


# ----------------------------------------------------------------------------
# parameters (module-faithful, unpadded f32) + padding helpers
# ----------------------------------------------------------------------------
def init_premodel_params(key, in_dim, num_hidden, num_layers):
    ks = jax.random.split(key, num_layers + 2)

    def lin(k, fan_in, fan_out):
        return (jax.random.normal(k, (fan_in, fan_out), jnp.float32)
                / jnp.sqrt(jnp.float32(fan_in)))

    params = {}
    enc = []
    d_in = in_dim
    for l in range(num_layers):
        k1, k2 = jax.random.split(ks[l], 2)
        enc.append({"w_self": lin(k1, d_in, num_hidden),
                    "w_neigh": lin(k2, d_in, num_hidden),
                    "bias": jnp.zeros((1, num_hidden), jnp.float32)})
        d_in = num_hidden
    params["encoder"] = enc
    k1, k2 = jax.random.split(ks[num_layers], 2)
    params["decoder"] = {"w_self": lin(k1, num_hidden, in_dim),
                         "w_neigh": lin(k2, num_hidden, in_dim),
                         "bias": jnp.zeros((1, in_dim), jnp.float32)}
    # encoder_to_decoder: Linear(hidden, hidden, bias=False), stored as W^T
    params["enc2dec_wT"] = lin(ks[num_layers + 1], num_hidden, num_hidden)
    # enc_mask_token = zeros(1, in_dim) exactly as in __init__
    params["enc_mask_token"] = jnp.zeros((1, in_dim), jnp.float32)
    return params


def _pad_sage_weights(w_self, w_neigh, bias, dp_in, dp_out):
    """Zero-pad self/neigh weights to (dp_in, dp_out) bf16 + bias to (1, dp_out)."""
    d_in, d_out = w_self.shape
    ws = (jnp.zeros((dp_in, dp_out), jnp.bfloat16)
          .at[:d_in, :d_out].set(w_self.astype(jnp.bfloat16)))
    wn = (jnp.zeros((dp_in, dp_out), jnp.bfloat16)
          .at[:d_in, :d_out].set(w_neigh.astype(jnp.bfloat16)))
    b = jnp.zeros((1, dp_out), jnp.float32).at[:, :d_out].set(bias)
    return ws, wn, b


# ----------------------------------------------------------------------------
# PreModel forward (mask_attr_prediction): returns (loss, graph_emb)
# ----------------------------------------------------------------------------
def premodel_forward(params, adj01, x, mask_nodes, alpha_l=2):
    n, in_dim = x.shape
    num_hidden = params["encoder"][0]["w_self"].shape[1]
    num_layers = len(params["encoder"])

    dp_in = _round_up(in_dim, 128)
    dp_h = _round_up(num_hidden, 128)
    n_pad, tn, tk = _choose_tiling(n)

    # --- graph packing: 0/1 int8 adjacency + f32 inverse degree (exact mean) ---
    adj_i8 = (jnp.zeros((n_pad, n_pad), jnp.int8)
              .at[:n, :n].set(adj01.astype(jnp.int8)))
    deg = jnp.sum(adj01.astype(jnp.float32), axis=1)
    invdeg = (jnp.zeros((n_pad, 1), jnp.float32)
              .at[:n, 0].set(1.0 / jnp.maximum(deg, 1.0)))

    # --- node masks ---
    mask_col = jnp.zeros((n_pad, 1), jnp.float32).at[mask_nodes, 0].set(1.0)
    keep_col = 1.0 - mask_col
    valid_col = (jnp.arange(n_pad) < n).astype(jnp.float32)[:, None]

    # --- features: mask-token substitution (encoding_mask_noise) is folded into
    #     the one-pass padded bf16 build; original f32 x kept for the loss ---
    tok = jnp.broadcast_to(params["enc_mask_token"], (n, in_dim))
    x_use = jnp.where(mask_col[:n] > 0.5, tok, x)
    x_use_bf = (jnp.zeros((n_pad, dp_in), jnp.bfloat16)
                .at[:n, :in_dim].set(x_use.astype(jnp.bfloat16)))
    x_pad = jnp.zeros((n_pad, dp_in), jnp.float32).at[:n, :in_dim].set(x)

    # --- encoder (GSAGE + relu); last layer fuses mean-pool embedding partials
    #     and encoder_to_decoder + re-mask (h never written to HBM) ---
    h = x_use_bf
    d_prev = dp_in
    rep = None
    emb_part = None
    for li, layer in enumerate(params["encoder"]):
        ws, wn, b = _pad_sage_weights(layer["w_self"], layer["w_neigh"],
                                      layer["bias"], d_prev, dp_h)
        if li == num_layers - 1:
            w_e2d = (jnp.zeros((dp_h, dp_h), jnp.bfloat16)
                     .at[:num_hidden, :num_hidden]
                     .set(params["enc2dec_wT"].astype(jnp.bfloat16)))
            rep, emb_part = sage_last_enc_layer(
                h, adj_i8, invdeg, keep_col, valid_col, ws, wn, b, w_e2d,
                tn=tn, tk=tk)
        else:
            h = sage_layer(h, adj_i8, invdeg, ws, wn, b, tn=tn, tk=tk)
        d_prev = dp_h

    graph_emb = (jnp.sum(emb_part, axis=0, keepdims=True)
                 * (1.0 / n))[:, :num_hidden]

    # --- decoder (GSAGE, no activation) fused with SCE loss on masked rows ---
    dec = params["decoder"]
    wds, wdn, bd = _pad_sage_weights(dec["w_self"], dec["w_neigh"], dec["bias"],
                                     dp_h, dp_in)
    loss = decoder_sage_loss(rep, adj_i8, invdeg, x_pad, mask_col, wds, wdn, bd,
                             tn=tn, tk=tk, alpha=int(alpha_l))
    return loss, graph_emb


# ----------------------------------------------------------------------------
# pure-jnp reference with bf16 rounding at the same points as the kernels
# ----------------------------------------------------------------------------
def _reference_forward(params, adj01, x, mask_nodes, alpha_l=2):
    bf = lambda a: a.astype(jnp.bfloat16).astype(jnp.float32)
    n, _ = x.shape
    invdeg = 1.0 / jnp.maximum(jnp.sum(adj01, axis=1, keepdims=True), 1.0)
    mask = jnp.zeros((n, 1), jnp.float32).at[mask_nodes, 0].set(1.0)
    tok = jnp.broadcast_to(params["enc_mask_token"], x.shape)
    h = bf(jnp.where(mask > 0.5, tok, x))
    num_layers = len(params["encoder"])
    graph_emb, rep = None, None
    for li, layer in enumerate(params["encoder"]):
        ws, wn = bf(layer["w_self"]), bf(layer["w_neigh"])
        agg = bf((adj01 @ h) * invdeg)
        hf = jnp.maximum(h @ ws + agg @ wn + layer["bias"], 0.0)
        if li == num_layers - 1:
            graph_emb = jnp.sum(hf, axis=0, keepdims=True) * (1.0 / n)
            rep = bf((bf(hf) @ bf(params["enc2dec_wT"])) * (1.0 - mask))
        else:
            h = bf(hf)
    dec = params["decoder"]
    aggd = bf((adj01 @ rep) * invdeg)
    recon = rep @ bf(dec["w_self"]) + aggd @ bf(dec["w_neigh"]) + dec["bias"]
    xr, xi = recon[mask_nodes], x[mask_nodes]
    xr = xr / jnp.maximum(jnp.linalg.norm(xr, axis=-1, keepdims=True), 1e-12)
    xi = xi / jnp.maximum(jnp.linalg.norm(xi, axis=-1, keepdims=True), 1e-12)
    loss = jnp.mean((1.0 - jnp.sum(xr * xi, axis=-1)) ** alpha_l)
    return loss, graph_emb


# ----------------------------------------------------------------------------
if __name__ == "__main__":
    # Small module-consistent shapes: N=16 nodes, in_dim=16, hidden=32, 2 layers.
    N, IN_DIM, HIDDEN, NUM_LAYERS = 16, 16, 32, 2
    MASK_RATE = 0.3

    key = jax.random.PRNGKey(0)
    k_x, k_adj, k_perm, k_param = jax.random.split(key, 4)

    # node features
    x = jax.random.normal(k_x, (N, IN_DIM), jnp.float32)

    # deterministic undirected 0/1 adjacency with self-loops
    a = (jax.random.uniform(k_adj, (N, N)) > 0.7).astype(jnp.float32)
    a = jnp.maximum(a, a.T)
    a = jnp.maximum(a, jnp.eye(N, dtype=jnp.float32))

    # encoding_mask_noise permutation (torch.randperm equivalent, done in glue)
    perm = jax.random.permutation(k_perm, N)
    num_mask = int(MASK_RATE * N)
    mask_nodes = perm[:num_mask]

    params = init_premodel_params(k_param, IN_DIM, HIDDEN, NUM_LAYERS)

    fwd = jax.jit(functools.partial(premodel_forward, alpha_l=2))
    loss, graph_emb = fwd(params, a, x, mask_nodes)
    jax.block_until_ready((loss, graph_emb))

    # forward() returns (loss, {'loss': loss.item()}, graph_emb)
    loss_item = {"loss": float(loss)}

    # sanity check against the quantization-matched pure-jnp reference
    ref_loss, ref_emb = _reference_forward(params, a, x, mask_nodes, alpha_l=2)
    assert abs(float(loss) - float(ref_loss)) < 1e-2, (float(loss), float(ref_loss))
    assert float(jnp.max(jnp.abs(graph_emb - ref_emb))) < 1e-2

    print("KERNEL_OK")
</pallas_src>

<mosaic_0001>
module attributes {stable_mosaic.version = 11 : i64} {
  func.func @_sage_layer_kernel(%arg0: i32, %arg1: i32, %arg2: memref<128x128xbf16, #tpu.memory_space<vmem>>, %arg3: memref<128x128xbf16, #tpu.memory_space<vmem>>, %arg4: memref<128x128xi8, #tpu.memory_space<vmem>>, %arg5: memref<128x1xf32, #tpu.memory_space<vmem>>, %arg6: memref<128x128xbf16, #tpu.memory_space<vmem>>, %arg7: memref<128x128xbf16, #tpu.memory_space<vmem>>, %arg8: memref<1x128xf32, #tpu.memory_space<vmem>>, %arg9: memref<128x128xbf16, #tpu.memory_space<vmem>>, %arg10: memref<128x128xf32, #tpu.memory_space<vmem>>) attributes {dimension_semantics = [#tpu.dimension_semantics<parallel>, #tpu.dimension_semantics<arbitrary>], iteration_bounds = array<i64: 1, 1>, scalar_prefetch = 0 : i64, scratch_operands = 1 : i64, tpu.core_type = #tpu.core_type<tc>, window_params = [{transform_indices = @transform_0, window_bounds = array<i64: 128, 128>}, {transform_indices = @transform_1, window_bounds = array<i64: 128, 128>}, {transform_indices = @transform_2, window_bounds = array<i64: 128, 128>}, {transform_indices = @transform_3, window_bounds = array<i64: 128, 1>}, {pipeline_mode = #tpu.pipeline_mode<synchronous>, transform_indices = @transform_4, window_bounds = array<i64: 128, 128>}, {pipeline_mode = #tpu.pipeline_mode<synchronous>, transform_indices = @transform_5, window_bounds = array<i64: 128, 128>}, {pipeline_mode = #tpu.pipeline_mode<synchronous>, transform_indices = @transform_6, window_bounds = array<i64: 1, 128>}, {transform_indices = @transform_7, window_bounds = array<i64: 128, 128>}]} {
    %c0_i32 = arith.constant 0 : i32
    %0 = arith.cmpi eq, %arg1, %c0_i32 : i32
    %1 = arith.extui %0 : i1 to i32
    %c0_i32_0 = arith.constant 0 : i32
    %2 = arith.cmpi ne, %1, %c0_i32_0 : i32
    scf.if %2 {
      %cst_10 = arith.constant 0.000000e+00 : f32
      %13 = vector.broadcast %cst_10 : f32 to vector<128x128xf32>
      %c0_11 = arith.constant 0 : index
      %c0_12 = arith.constant 0 : index
      %14 = vector.load %arg10[%c0_11, %c0_12] : memref<128x128xf32, #tpu.memory_space<vmem>>, vector<128x128xf32>
      tpu.vector_store %arg10[%c0_11, %c0_12], %13 {strides = array<i32>} : memref<128x128xf32, #tpu.memory_space<vmem>>, vector<128x128xf32>,
    } else {
    }
    %c0 = arith.constant 0 : index
    %c0_1 = arith.constant 0 : index
    %3 = vector.load %arg4[%c0, %c0_1] : memref<128x128xi8, #tpu.memory_space<vmem>>, vector<128x128xi8>
    %4 = arith.sitofp %3 : vector<128x128xi8> to vector<128x128xbf16>
    %c0_2 = arith.constant 0 : index
    %c0_3 = arith.constant 0 : index
    %5 = vector.load %arg10[%c0_2, %c0_3] : memref<128x128xf32, #tpu.memory_space<vmem>>, vector<128x128xf32>
    %c0_4 = arith.constant 0 : index
    %c0_5 = arith.constant 0 : index
    %6 = vector.load %arg2[%c0_4, %c0_5] : memref<128x128xbf16, #tpu.memory_space<vmem>>, vector<128x128xbf16>
    %cst = arith.constant dense<0.000000e+00> : vector<128x128xf32>
    %7 = tpu.matmul %4, %6, %cst {dimension_numbers = #tpu.dot_dimension_numbers<[1], [0], [0], [1], [0, 0, 1, 1], [], []>} : vector<128x128xbf16>, vector<128x128xbf16>, vector<128x128xf32> -> vector<128x128xf32>
    %8 = arith.addf %5, %7 : vector<128x128xf32>
    %c0_6 = arith.constant 0 : index
    %c0_7 = arith.constant 0 : index
    %9 = vector.load %arg10[%c0_6, %c0_7] : memref<128x128xf32, #tpu.memory_space<vmem>>, vector<128x128xf32>
    tpu.vector_store %arg10[%c0_6, %c0_7], %8 {strides = array<i32>} : memref<128x128xf32, #tpu.memory_space<vmem>>, vector<128x128xf32>,
    %c0_i32_8 = arith.constant 0 : i32
    %10 = arith.cmpi eq, %arg1, %c0_i32_8 : i32
    %11 = arith.extui %10 : i1 to i32
    %c0_i32_9 = arith.constant 0 : i32
    %12 = arith.cmpi ne, %11, %c0_i32_9 : i32
    scf.if %12 {
      %c0_10 = arith.constant 0 : index
      %c0_11 = arith.constant 0 : index
      %13 = vector.load %arg10[%c0_10, %c0_11] : memref<128x128xf32, #tpu.memory_space<vmem>>, vector<128x128xf32>
      %c0_12 = arith.constant 0 : index
      %c0_13 = arith.constant 0 : index
      %14 = vector.load %arg5[%c0_12, %c0_13] : memref<128x1xf32, #tpu.memory_space<vmem>>, vector<128x1xf32>
      %15 = vector.broadcast %14 : vector<128x1xf32> to vector<128x128xf32>
      %16 = arith.mulf %13, %15 : vector<128x128xf32>
      %17 = arith.truncf %16 : vector<128x128xf32> to vector<128x128xbf16>
      %c0_14 = arith.constant 0 : index
      %c0_15 = arith.constant 0 : index
      %18 = vector.load %arg3[%c0_14, %c0_15] : memref<128x128xbf16, #tpu.memory_space<vmem>>, vector<128x128xbf16>
      %c0_16 = arith.constant 0 : index
      %c0_17 = arith.constant 0 : index
      %19 = vector.load %arg6[%c0_16, %c0_17] : memref<128x128xbf16, #tpu.memory_space<vmem>>, vector<128x128xbf16>
      %cst_18 = arith.constant dense<0.000000e+00> : vector<128x128xf32>
      %20 = tpu.matmul %18, %19, %cst_18 {dimension_numbers = #tpu.dot_dimension_numbers<[1], [0], [0], [1], [0, 0, 1, 1], [], []>} : vector<128x128xbf16>, vector<128x128xbf16>, vector<128x128xf32> -> vector<128x128xf32>
      %c0_19 = arith.constant 0 : index
      %c0_20 = arith.constant 0 : index
      %21 = vector.load %arg7[%c0_19, %c0_20] : memref<128x128xbf16, #tpu.memory_space<vmem>>, vector<128x128xbf16>
      %cst_21 = arith.constant dense<0.000000e+00> : vector<128x128xf32>
      %22 = tpu.matmul %17, %21, %cst_21 {dimension_numbers = #tpu.dot_dimension_numbers<[1], [0], [0], [1], [0, 0, 1, 1], [], []>} : vector<128x128xbf16>, vector<128x128xbf16>, vector<128x128xf32> -> vector<128x128xf32>
      %23 = arith.addf %20, %22 : vector<128x128xf32>
      %c0_22 = arith.constant 0 : index
      %c0_23 = arith.constant 0 : index
      %24 = vector.load %arg8[%c0_22, %c0_23] : memref<1x128xf32, #tpu.memory_space<vmem>>, vector<1x128xf32>
      %25 = vector.broadcast %24 : vector<1x128xf32> to vector<128x128xf32>
      %26 = arith.addf %23, %25 : vector<128x128xf32>
      %cst_24 = arith.constant 0.000000e+00 : f32
      %27 = vector.broadcast %cst_24 : f32 to vector<128x128xf32>
      %28 = arith.maximumf %26, %27 : vector<128x128xf32>
      %29 = arith.truncf %28 : vector<128x128xf32> to vector<128x128xbf16>
      %c0_25 = arith.constant 0 : index
      %c0_26 = arith.constant 0 : index
      %30 = vector.load %arg9[%c0_25, %c0_26] : memref<128x128xbf16, #tpu.memory_space<vmem>>, vector<128x128xbf16>
      tpu.vector_store %arg9[%c0_25, %c0_26], %29 {strides = array<i32>} : memref<128x128xbf16, #tpu.memory_space<vmem>>, vector<128x128xbf16>,
    } else {
    }
    return
  }
  func.func @transform_0(%arg0: i32, %arg1: i32) -> (i32, i32) {
    %c0_i32 = arith.constant 0 : i32
    %c0_i32_0 = arith.constant 0 : i32
    return %arg1, %c0_i32 : i32, i32
  }
  func.func @transform_1(%arg0: i32, %arg1: i32) -> (i32, i32) {
    %c0_i32 = arith.constant 0 : i32
    %c0_i32_0 = arith.constant 0 : i32
    return %arg0, %c0_i32 : i32, i32
  }
  func.func @transform_2(%arg0: i32, %arg1: i32) -> (i32, i32) {
    %c0_i32 = arith.constant 0 : i32
    return %arg0, %arg1 : i32, i32
  }
  func.func @transform_3(%arg0: i32, %arg1: i32) -> (i32, i32) {
    %c0_i32 = arith.constant 0 : i32
    %c0_i32_0 = arith.constant 0 : i32
    return %arg0, %c0_i32 : i32, i32
  }
  func.func @transform_4(%arg0: i32, %arg1: i32) -> (i32, i32) {
    %c0_i32 = arith.constant 0 : i32
    %c0_i32_0 = arith.constant 0 : i32
    %c0_i32_1 = arith.constant 0 : i32
    return %c0_i32, %c0_i32_0 : i32, i32
  }
  func.func @transform_5(%arg0: i32, %arg1: i32) -> (i32, i32) {
    %c0_i32 = arith.constant 0 : i32
    %c0_i32_0 = arith.constant 0 : i32
    %c0_i32_1 = arith.constant 0 : i32
    return %c0_i32, %c0_i32_0 : i32, i32
  }
  func.func @transform_6(%arg0: i32, %arg1: i32) -> (i32, i32) {
    %c0_i32 = arith.constant 0 : i32
    %c0_i32_0 = arith.constant 0 : i32
    %c0_i32_1 = arith.constant 0 : i32
    return %c0_i32, %c0_i32_0 : i32, i32
  }
  func.func @transform_7(%arg0: i32, %arg1: i32) -> (i32, i32) {
    %c0_i32 = arith.constant 0 : i32
    %c0_i32_0 = arith.constant 0 : i32
    return %arg0, %c0_i32 : i32, i32
  }
}

module attributes {stable_mosaic.version = 11 : i64} {
  func.func @_sage_last_enc_kernel(%arg0: i32, %arg1: i32, %arg2: memref<128x128xbf16, #tpu.memory_space<vmem>>, %arg3: memref<128x128xbf16, #tpu.memory_space<vmem>>, %arg4: memref<128x128xi8, #tpu.memory_space<vmem>>, %arg5: memref<128x1xf32, #tpu.memory_space<vmem>>, %arg6: memref<128x1xf32, #tpu.memory_space<vmem>>, %arg7: memref<128x1xf32, #tpu.memory_space<vmem>>, %arg8: memref<128x128xbf16, #tpu.memory_space<vmem>>, %arg9: memref<128x128xbf16, #tpu.memory_space<vmem>>, %arg10: memref<1x128xf32, #tpu.memory_space<vmem>>, %arg11: memref<128x128xbf16, #tpu.memory_space<vmem>>, %arg12: memref<128x128xbf16, #tpu.memory_space<vmem>>, %arg13: memref<8x128xf32, #tpu.memory_space<vmem>>, %arg14: memref<128x128xf32, #tpu.memory_space<vmem>>) attributes {dimension_semantics = [#tpu.dimension_semantics<parallel>, #tpu.dimension_semantics<arbitrary>], iteration_bounds = array<i64: 1, 1>, scalar_prefetch = 0 : i64, scratch_operands = 1 : i64, tpu.core_type = #tpu.core_type<tc>, window_params = [{transform_indices = @transform_0, window_bounds = array<i64: 128, 128>}, {transform_indices = @transform_1, window_bounds = array<i64: 128, 128>}, {transform_indices = @transform_2, window_bounds = array<i64: 128, 128>}, {transform_indices = @transform_3, window_bounds = array<i64: 128, 1>}, {transform_indices = @transform_4, window_bounds = array<i64: 128, 1>}, {transform_indices = @transform_5, window_bounds = array<i64: 128, 1>}, {pipeline_mode = #tpu.pipeline_mode<synchronous>, transform_indices = @transform_6, window_bounds = array<i64: 128, 128>}, {pipeline_mode = #tpu.pipeline_mode<synchronous>, transform_indices = @transform_7, window_bounds = array<i64: 128, 128>}, {pipeline_mode = #tpu.pipeline_mode<synchronous>, transform_indices = @transform_8, window_bounds = array<i64: 1, 128>}, {pipeline_mode = #tpu.pipeline_mode<synchronous>, transform_indices = @transform_9, window_bounds = array<i64: 128, 128>}, {transform_indices = @transform_10, window_bounds = array<i64: 128, 128>}, {transform_indices = @transform_11, window_bounds = array<i64: 8, 128>}]} {
    %c0_i32 = arith.constant 0 : i32
    %0 = arith.cmpi eq, %arg1, %c0_i32 : i32
    %1 = arith.extui %0 : i1 to i32
    %c0_i32_0 = arith.constant 0 : i32
    %2 = arith.cmpi ne, %1, %c0_i32_0 : i32
    scf.if %2 {
      %cst_10 = arith.constant 0.000000e+00 : f32
      %13 = vector.broadcast %cst_10 : f32 to vector<128x128xf32>
      %c0_11 = arith.constant 0 : index
      %c0_12 = arith.constant 0 : index
      %14 = vector.load %arg14[%c0_11, %c0_12] : memref<128x128xf32, #tpu.memory_space<vmem>>, vector<128x128xf32>
      tpu.vector_store %arg14[%c0_11, %c0_12], %13 {strides = array<i32>} : memref<128x128xf32, #tpu.memory_space<vmem>>, vector<128x128xf32>,
    } else {
    }
    %c0 = arith.constant 0 : index
    %c0_1 = arith.constant 0 : index
    %3 = vector.load %arg4[%c0, %c0_1] : memref<128x128xi8, #tpu.memory_space<vmem>>, vector<128x128xi8>
    %4 = arith.sitofp %3 : vector<128x128xi8> to vector<128x128xbf16>
    %c0_2 = arith.constant 0 : index
    %c0_3 = arith.constant 0 : index
    %5 = vector.load %arg14[%c0_2, %c0_3] : memref<128x128xf32, #tpu.memory_space<vmem>>, vector<128x128xf32>
    %c0_4 = arith.constant 0 : index
    %c0_5 = arith.constant 0 : index
    %6 = vector.load %arg2[%c0_4, %c0_5] : memref<128x128xbf16, #tpu.memory_space<vmem>>, vector<128x128xbf16>
    %cst = arith.constant dense<0.000000e+00> : vector<128x128xf32>
    %7 = tpu.matmul %4, %6, %cst {dimension_numbers = #tpu.dot_dimension_numbers<[1], [0], [0], [1], [0, 0, 1, 1], [], []>} : vector<128x128xbf16>, vector<128x128xbf16>, vector<128x128xf32> -> vector<128x128xf32>
    %8 = arith.addf %5, %7 : vector<128x128xf32>
    %c0_6 = arith.constant 0 : index
    %c0_7 = arith.constant 0 : index
    %9 = vector.load %arg14[%c0_6, %c0_7] : memref<128x128xf32, #tpu.memory_space<vmem>>, vector<128x128xf32>
    tpu.vector_store %arg14[%c0_6, %c0_7], %8 {strides = array<i32>} : memref<128x128xf32, #tpu.memory_space<vmem>>, vector<128x128xf32>,
    %c0_i32_8 = arith.constant 0 : i32
    %10 = arith.cmpi eq, %arg1, %c0_i32_8 : i32
    %11 = arith.extui %10 : i1 to i32
    %c0_i32_9 = arith.constant 0 : i32
    %12 = arith.cmpi ne, %11, %c0_i32_9 : i32
    scf.if %12 {
      %c0_10 = arith.constant 0 : index
      %c0_11 = arith.constant 0 : index
      %13 = vector.load %arg14[%c0_10, %c0_11] : memref<128x128xf32, #tpu.memory_space<vmem>>, vector<128x128xf32>
      %c0_12 = arith.constant 0 : index
      %c0_13 = arith.constant 0 : index
      %14 = vector.load %arg5[%c0_12, %c0_13] : memref<128x1xf32, #tpu.memory_space<vmem>>, vector<128x1xf32>
      %15 = vector.broadcast %14 : vector<128x1xf32> to vector<128x128xf32>
      %16 = arith.mulf %13, %15 : vector<128x128xf32>
      %17 = arith.truncf %16 : vector<128x128xf32> to vector<128x128xbf16>
      %c0_14 = arith.constant 0 : index
      %c0_15 = arith.constant 0 : index
      %18 = vector.load %arg3[%c0_14, %c0_15] : memref<128x128xbf16, #tpu.memory_space<vmem>>, vector<128x128xbf16>
      %c0_16 = arith.constant 0 : index
      %c0_17 = arith.constant 0 : index
      %19 = vector.load %arg8[%c0_16, %c0_17] : memref<128x128xbf16, #tpu.memory_space<vmem>>, vector<128x128xbf16>
      %cst_18 = arith.constant dense<0.000000e+00> : vector<128x128xf32>
      %20 = tpu.matmul %18, %19, %cst_18 {dimension_numbers = #tpu.dot_dimension_numbers<[1], [0], [0], [1], [0, 0, 1, 1], [], []>} : vector<128x128xbf16>, vector<128x128xbf16>, vector<128x128xf32> -> vector<128x128xf32>
      %c0_19 = arith.constant 0 : index
      %c0_20 = arith.constant 0 : index
      %21 = vector.load %arg9[%c0_19, %c0_20] : memref<128x128xbf16, #tpu.memory_space<vmem>>, vector<128x128xbf16>
      %cst_21 = arith.constant dense<0.000000e+00> : vector<128x128xf32>
      %22 = tpu.matmul %17, %21, %cst_21 {dimension_numbers = #tpu.dot_dimension_numbers<[1], [0], [0], [1], [0, 0, 1, 1], [], []>} : vector<128x128xbf16>, vector<128x128xbf16>, vector<128x128xf32> -> vector<128x128xf32>
      %23 = arith.addf %20, %22 : vector<128x128xf32>
      %c0_22 = arith.constant 0 : index
      %c0_23 = arith.constant 0 : index
      %24 = vector.load %arg10[%c0_22, %c0_23] : memref<1x128xf32, #tpu.memory_space<vmem>>, vector<1x128xf32>
      %25 = vector.broadcast %24 : vector<1x128xf32> to vector<128x128xf32>
      %26 = arith.addf %23, %25 : vector<128x128xf32>
      %cst_24 = arith.constant 0.000000e+00 : f32
      %27 = vector.broadcast %cst_24 : f32 to vector<128x128xf32>
      %28 = arith.maximumf %26, %27 : vector<128x128xf32>
      %c0_25 = arith.constant 0 : index
      %c0_26 = arith.constant 0 : index
      %29 = vector.load %arg7[%c0_25, %c0_26] : memref<128x1xf32, #tpu.memory_space<vmem>>, vector<128x1xf32>
      %30 = vector.broadcast %29 : vector<128x1xf32> to vector<128x128xf32>
      %31 = arith.mulf %28, %30 : vector<128x128xf32>
      %cst_27 = arith.constant dense<0.000000e+00> : vector<128xf32>
      %32 = vector.multi_reduction <add>, %31, %cst_27 [0] : vector<128x128xf32> to vector<128xf32>
      %33 = vector.shape_cast %32 : vector<128xf32> to vector<1x128xf32>
      %34 = tpu.iota {dimensions = array<i32: 0>} : vector<8x128xi32>
      %c0_i32_28 = arith.constant 0 : i32
      %35 = vector.broadcast %c0_i32_28 : i32 to vector<8x128xi32>
      %36 = arith.cmpi eq, %34, %35 : vector<8x128xi32>
      %cst_29 = arith.constant 0.000000e+00 : f32
      %37 = vector.shape_cast %33 : vector<1x128xf32> to vector<1x128xf32>
      %38 = vector.broadcast %37 : vector<1x128xf32> to vector<8x128xf32>
      %39 = vector.broadcast %cst_29 : f32 to vector<8x128xf32>
      %40 = arith.select %36, %38, %39 : vector<8x128xi1>, vector<8x128xf32>
      %c0_30 = arith.constant 0 : index
      %c0_31 = arith.constant 0 : index
      %41 = vector.load %arg13[%c0_30, %c0_31] : memref<8x128xf32, #tpu.memory_space<vmem>>, vector<8x128xf32>
      tpu.vector_store %arg13[%c0_30, %c0_31], %40 {strides = array<i32>} : memref<8x128xf32, #tpu.memory_space<vmem>>, vector<8x128xf32>,
      %42 = arith.truncf %28 : vector<128x128xf32> to vector<128x128xbf16>
      %c0_32 = arith.constant 0 : index
      %c0_33 = arith.constant 0 : index
      %43 = vector.load %arg11[%c0_32, %c0_33] : memref<128x128xbf16, #tpu.memory_space<vmem>>, vector<128x128xbf16>
      %cst_34 = arith.constant dense<0.000000e+00> : vector<128x128xf32>
      %44 = tpu.matmul %42, %43, %cst_34 {dimension_numbers = #tpu.dot_dimension_numbers<[1], [0], [0], [1], [0, 0, 1, 1], [], []>} : vector<128x128xbf16>, vector<128x128xbf16>, vector<128x128xf32> -> vector<128x128xf32>
      %c0_35 = arith.constant 0 : index
      %c0_36 = arith.constant 0 : index
      %45 = vector.load %arg6[%c0_35, %c0_36] : memref<128x1xf32, #tpu.memory_space<vmem>>, vector<128x1xf32>
      %46 = vector.broadcast %45 : vector<128x1xf32> to vector<128x128xf32>
      %47 = arith.mulf %44, %46 : vector<128x128xf32>
      %48 = arith.truncf %47 : vector<128x128xf32> to vector<128x128xbf16>
      %c0_37 = arith.constant 0 : index
      %c0_38 = arith.constant 0 : index
      %49 = vector.load %arg12[%c0_37, %c0_38] : memref<128x128xbf16, #tpu.memory_space<vmem>>, vector<128x128xbf16>
      tpu.vector_store %arg12[%c0_37, %c0_38], %48 {strides = array<i32>} : memref<128x128xbf16, #tpu.memory_space<vmem>>, vector<128x128xbf16>,
    } else {
    }
    return
  }
  func.func @transform_0(%arg0: i32, %arg1: i32) -> (i32, i32) {
    %c0_i32 = arith.constant 0 : i32
    %c0_i32_0 = arith.constant 0 : i32
    return %arg1, %c0_i32 : i32, i32
  }
  func.func @transform_1(%arg0: i32, %arg1: i32) -> (i32, i32) {
    %c0_i32 = arith.constant 0 : i32
    %c0_i32_0 = arith.constant 0 : i32
    return %arg0, %c0_i32 : i32, i32
  }
  func.func @transform_2(%arg0: i32, %arg1: i32) -> (i32, i32) {
    %c0_i32 = arith.constant 0 : i32
    return %arg0, %arg1 : i32, i32
  }
  func.func @transform_3(%arg0: i32, %arg1: i32) -> (i32, i32) {
    %c0_i32 = arith.constant 0 : i32
    %c0_i32_0 = arith.constant 0 : i32
    return %arg0, %c0_i32 : i32, i32
  }
  func.func @transform_4(%arg0: i32, %arg1: i32) -> (i32, i32) {
    %c0_i32 = arith.constant 0 : i32
    %c0_i32_0 = arith.constant 0 : i32
    return %arg0, %c0_i32 : i32, i32
  }
  func.func @transform_5(%arg0: i32, %arg1: i32) -> (i32, i32) {
    %c0_i32 = arith.constant 0 : i32
    %c0_i32_0 = arith.constant 0 : i32
    return %arg0, %c0_i32 : i32, i32
  }
  func.func @transform_6(%arg0: i32, %arg1: i32) -> (i32, i32) {
    %c0_i32 = arith.constant 0 : i32
    %c0_i32_0 = arith.constant 0 : i32
    %c0_i32_1 = arith.constant 0 : i32
    return %c0_i32, %c0_i32_0 : i32, i32
  }
  func.func @transform_7(%arg0: i32, %arg1: i32) -> (i32, i32) {
    %c0_i32 = arith.constant 0 : i32
    %c0_i32_0 = arith.constant 0 : i32
    %c0_i32_1 = arith.constant 0 : i32
    return %c0_i32, %c0_i32_0 : i32, i32
  }
  func.func @transform_8(%arg0: i32, %arg1: i32) -> (i32, i32) {
    %c0_i32 = arith.constant 0 : i32
    %c0_i32_0 = arith.constant 0 : i32
    %c0_i32_1 = arith.constant 0 : i32
    return %c0_i32, %c0_i32_0 : i32, i32
  }
  func.func @transform_9(%arg0: i32, %arg1: i32) -> (i32, i32) {
    %c0_i32 = arith.constant 0 : i32
    %c0_i32_0 = arith.constant 0 : i32
    %c0_i32_1 = arith.constant 0 : i32
    return %c0_i32, %c0_i32_0 : i32, i32
  }
  func.func @transform_10(%arg0: i32, %arg1: i32) -> (i32, i32) {
    %c0_i32 = arith.constant 0 : i32
    %c0_i32_0 = arith.constant 0 : i32
    return %arg0, %c0_i32 : i32, i32
  }
  func.func @transform_11(%arg0: i32, %arg1: i32) -> (i32, i32) {
    %c0_i32 = arith.constant 0 : i32
    %c0_i32_0 = arith.constant 0 : i32
    return %arg0, %c0_i32 : i32, i32
  }
}

module attributes {stable_mosaic.version = 11 : i64} {
  func.func @_dec_sage_loss_kernel(%arg0: i32, %arg1: i32, %arg2: memref<128x128xbf16, #tpu.memory_space<vmem>>, %arg3: memref<128x128xbf16, #tpu.memory_space<vmem>>, %arg4: memref<128x128xi8, #tpu.memory_space<vmem>>, %arg5: memref<128x1xf32, #tpu.memory_space<vmem>>, %arg6: memref<128x128xf32, #tpu.memory_space<vmem>>, %arg7: memref<128x1xf32, #tpu.memory_space<vmem>>, %arg8: memref<128x128xbf16, #tpu.memory_space<vmem>>, %arg9: memref<128x128xbf16, #tpu.memory_space<vmem>>, %arg10: memref<1x128xf32, #tpu.memory_space<vmem>>, %arg11: memref<8x128xf32, #tpu.memory_space<vmem>>, %arg12: memref<128x128xf32, #tpu.memory_space<vmem>>) attributes {dimension_semantics = [#tpu.dimension_semantics<parallel>, #tpu.dimension_semantics<arbitrary>], iteration_bounds = array<i64: 1, 1>, scalar_prefetch = 0 : i64, scratch_operands = 1 : i64, tpu.core_type = #tpu.core_type<tc>, window_params = [{transform_indices = @transform_0, window_bounds = array<i64: 128, 128>}, {transform_indices = @transform_1, window_bounds = array<i64: 128, 128>}, {transform_indices = @transform_2, window_bounds = array<i64: 128, 128>}, {transform_indices = @transform_3, window_bounds = array<i64: 128, 1>}, {transform_indices = @transform_4, window_bounds = array<i64: 128, 128>}, {transform_indices = @transform_5, window_bounds = array<i64: 128, 1>}, {pipeline_mode = #tpu.pipeline_mode<synchronous>, transform_indices = @transform_6, window_bounds = array<i64: 128, 128>}, {pipeline_mode = #tpu.pipeline_mode<synchronous>, transform_indices = @transform_7, window_bounds = array<i64: 128, 128>}, {pipeline_mode = #tpu.pipeline_mode<synchronous>, transform_indices = @transform_8, window_bounds = array<i64: 1, 128>}, {transform_indices = @transform_9, window_bounds = array<i64: 8, 128>}]} {
    %c0_i32 = arith.constant 0 : i32
    %0 = arith.cmpi eq, %arg1, %c0_i32 : i32
    %1 = arith.extui %0 : i1 to i32
    %c0_i32_0 = arith.constant 0 : i32
    %2 = arith.cmpi ne, %1, %c0_i32_0 : i32
    scf.if %2 {
      %cst_10 = arith.constant 0.000000e+00 : f32
      %13 = vector.broadcast %cst_10 : f32 to vector<128x128xf32>
      %c0_11 = arith.constant 0 : index
      %c0_12 = arith.constant 0 : index
      %14 = vector.load %arg12[%c0_11, %c0_12] : memref<128x128xf32, #tpu.memory_space<vmem>>, vector<128x128xf32>
      tpu.vector_store %arg12[%c0_11, %c0_12], %13 {strides = array<i32>} : memref<128x128xf32, #tpu.memory_space<vmem>>, vector<128x128xf32>,
    } else {
    }
    %c0 = arith.constant 0 : index
    %c0_1 = arith.constant 0 : index
    %3 = vector.load %arg4[%c0, %c0_1] : memref<128x128xi8, #tpu.memory_space<vmem>>, vector<128x128xi8>
    %4 = arith.sitofp %3 : vector<128x128xi8> to vector<128x128xbf16>
    %c0_2 = arith.constant 0 : index
    %c0_3 = arith.constant 0 : index
    %5 = vector.load %arg12[%c0_2, %c0_3] : memref<128x128xf32, #tpu.memory_space<vmem>>, vector<128x128xf32>
    %c0_4 = arith.constant 0 : index
    %c0_5 = arith.constant 0 : index
    %6 = vector.load %arg2[%c0_4, %c0_5] : memref<128x128xbf16, #tpu.memory_space<vmem>>, vector<128x128xbf16>
    %cst = arith.constant dense<0.000000e+00> : vector<128x128xf32>
    %7 = tpu.matmul %4, %6, %cst {dimension_numbers = #tpu.dot_dimension_numbers<[1], [0], [0], [1], [0, 0, 1, 1], [], []>} : vector<128x128xbf16>, vector<128x128xbf16>, vector<128x128xf32> -> vector<128x128xf32>
    %8 = arith.addf %5, %7 : vector<128x128xf32>
    %c0_6 = arith.constant 0 : index
    %c0_7 = arith.constant 0 : index
    %9 = vector.load %arg12[%c0_6, %c0_7] : memref<128x128xf32, #tpu.memory_space<vmem>>, vector<128x128xf32>
    tpu.vector_store %arg12[%c0_6, %c0_7], %8 {strides = array<i32>} : memref<128x128xf32, #tpu.memory_space<vmem>>, vector<128x128xf32>,
    %c0_i32_8 = arith.constant 0 : i32
    %10 = arith.cmpi eq, %arg1, %c0_i32_8 : i32
    %11 = arith.extui %10 : i1 to i32
    %c0_i32_9 = arith.constant 0 : i32
    %12 = arith.cmpi ne, %11, %c0_i32_9 : i32
    scf.if %12 {
      %c0_10 = arith.constant 0 : index
      %c0_11 = arith.constant 0 : index
      %13 = vector.load %arg12[%c0_10, %c0_11] : memref<128x128xf32, #tpu.memory_space<vmem>>, vector<128x128xf32>
      %c0_12 = arith.constant 0 : index
      %c0_13 = arith.constant 0 : index
      %14 = vector.load %arg5[%c0_12, %c0_13] : memref<128x1xf32, #tpu.memory_space<vmem>>, vector<128x1xf32>
      %15 = vector.broadcast %14 : vector<128x1xf32> to vector<128x128xf32>
      %16 = arith.mulf %13, %15 : vector<128x128xf32>
      %17 = arith.truncf %16 : vector<128x128xf32> to vector<128x128xbf16>
      %c0_14 = arith.constant 0 : index
      %c0_15 = arith.constant 0 : index
      %18 = vector.load %arg3[%c0_14, %c0_15] : memref<128x128xbf16, #tpu.memory_space<vmem>>, vector<128x128xbf16>
      %c0_16 = arith.constant 0 : index
      %c0_17 = arith.constant 0 : index
      %19 = vector.load %arg8[%c0_16, %c0_17] : memref<128x128xbf16, #tpu.memory_space<vmem>>, vector<128x128xbf16>
      %cst_18 = arith.constant dense<0.000000e+00> : vector<128x128xf32>
      %20 = tpu.matmul %18, %19, %cst_18 {dimension_numbers = #tpu.dot_dimension_numbers<[1], [0], [0], [1], [0, 0, 1, 1], [], []>} : vector<128x128xbf16>, vector<128x128xbf16>, vector<128x128xf32> -> vector<128x128xf32>
      %c0_19 = arith.constant 0 : index
      %c0_20 = arith.constant 0 : index
      %21 = vector.load %arg9[%c0_19, %c0_20] : memref<128x128xbf16, #tpu.memory_space<vmem>>, vector<128x128xbf16>
      %cst_21 = arith.constant dense<0.000000e+00> : vector<128x128xf32>
      %22 = tpu.matmul %17, %21, %cst_21 {dimension_numbers = #tpu.dot_dimension_numbers<[1], [0], [0], [1], [0, 0, 1, 1], [], []>} : vector<128x128xbf16>, vector<128x128xbf16>, vector<128x128xf32> -> vector<128x128xf32>
      %23 = arith.addf %20, %22 : vector<128x128xf32>
      %c0_22 = arith.constant 0 : index
      %c0_23 = arith.constant 0 : index
      %24 = vector.load %arg10[%c0_22, %c0_23] : memref<1x128xf32, #tpu.memory_space<vmem>>, vector<1x128xf32>
      %25 = vector.broadcast %24 : vector<1x128xf32> to vector<128x128xf32>
      %26 = arith.addf %23, %25 : vector<128x128xf32>
      %c0_24 = arith.constant 0 : index
      %c0_25 = arith.constant 0 : index
      %27 = vector.load %arg6[%c0_24, %c0_25] : memref<128x128xf32, #tpu.memory_space<vmem>>, vector<128x128xf32>
      %28 = arith.mulf %26, %26 : vector<128x128xf32>
      %cst_26 = arith.constant dense<0.000000e+00> : vector<128xf32>
      %29 = vector.multi_reduction <add>, %28, %cst_26 [1] : vector<128x128xf32> to vector<128xf32>
      %30 = vector.shape_cast %29 : vector<128xf32> to vector<128x1xf32>
      %cst_27 = arith.constant 1.000000e-24 : f32
      %31 = vector.broadcast %cst_27 : f32 to vector<128x1xf32>
      %32 = arith.maximumf %30, %31 : vector<128x1xf32>
      %33 = math.rsqrt %32 : vector<128x1xf32>
      %34 = vector.broadcast %33 : vector<128x1xf32> to vector<128x128xf32>
      %35 = arith.mulf %26, %34 : vector<128x128xf32>
      %36 = arith.mulf %27, %27 : vector<128x128xf32>
      %cst_28 = arith.constant dense<0.000000e+00> : vector<128xf32>
      %37 = vector.multi_reduction <add>, %36, %cst_28 [1] : vector<128x128xf32> to vector<128xf32>
      %38 = vector.shape_cast %37 : vector<128xf32> to vector<128x1xf32>
      %cst_29 = arith.constant 1.000000e-24 : f32
      %39 = vector.broadcast %cst_29 : f32 to vector<128x1xf32>
      %40 = arith.maximumf %38, %39 : vector<128x1xf32>
      %41 = math.rsqrt %40 : vector<128x1xf32>
      %42 = vector.broadcast %41 : vector<128x1xf32> to vector<128x128xf32>
      %43 = arith.mulf %27, %42 : vector<128x128xf32>
      %44 = arith.mulf %35, %43 : vector<128x128xf32>
      %cst_30 = arith.constant dense<0.000000e+00> : vector<128xf32>
      %45 = vector.multi_reduction <add>, %44, %cst_30 [1] : vector<128x128xf32> to vector<128xf32>
      %46 = vector.shape_cast %45 : vector<128xf32> to vector<128x1xf32>
      %cst_31 = arith.constant 1.000000e+00 : f32
      %47 = vector.broadcast %cst_31 : f32 to vector<128x1xf32>
      %48 = arith.subf %47, %46 : vector<128x1xf32>
      %49 = arith.mulf %48, %48 : vector<128x1xf32>
      %c0_32 = arith.constant 0 : index
      %c0_33 = arith.constant 0 : index
      %50 = vector.load %arg7[%c0_32, %c0_33] : memref<128x1xf32, #tpu.memory_space<vmem>>, vector<128x1xf32>
      %51 = arith.mulf %49, %50 : vector<128x1xf32>
      %cst_34 = arith.constant dense<0.000000e+00> : vector<1xf32>
      %52 = vector.multi_reduction <add>, %51, %cst_34 [0] : vector<128x1xf32> to vector<1xf32>
      %53 = vector.shape_cast %52 : vector<1xf32> to vector<1x1xf32>
      %cst_35 = arith.constant dense<0.000000e+00> : vector<1xf32>
      %54 = vector.multi_reduction <add>, %50, %cst_35 [0] : vector<128x1xf32> to vector<1xf32>
      %55 = vector.shape_cast %54 : vector<1xf32> to vector<1x1xf32>
      %56 = tpu.iota {dimensions = array<i32: 0>} : vector<8x128xi32>
      %57 = tpu.iota {dimensions = array<i32: 1>} : vector<8x128xi32>
      %c0_i32_36 = arith.constant 0 : i32
      %58 = vector.broadcast %c0_i32_36 : i32 to vector<8x128xi32>
      %59 = arith.cmpi eq, %56, %58 : vector<8x128xi32>
      %c0_i32_37 = arith.constant 0 : i32
      %60 = vector.broadcast %c0_i32_37 : i32 to vector<8x128xi32>
      %61 = arith.cmpi eq, %57, %60 : vector<8x128xi32>
      %62 = arith.andi %59, %61 : vector<8x128xi1>
      %cst_38 = arith.constant 0.000000e+00 : f32
      %63 = vector.shape_cast %53 : vector<1x1xf32> to vector<1x1xf32>
      %64 = vector.broadcast %63 : vector<1x1xf32> to vector<8x128xf32>
      %65 = vector.broadcast %cst_38 : f32 to vector<8x128xf32>
      %66 = arith.select %62, %64, %65 : vector<8x128xi1>, vector<8x128xf32>
      %c0_i32_39 = arith.constant 0 : i32
      %67 = vector.broadcast %c0_i32_39 : i32 to vector<8x128xi32>
      %68 = arith.cmpi eq, %56, %67 : vector<8x128xi32>
      %c1_i32 = arith.constant 1 : i32
      %69 = vector.broadcast %c1_i32 : i32 to vector<8x128xi32>
      %70 = arith.cmpi eq, %57, %69 : vector<8x128xi32>
      %71 = arith.andi %68, %70 : vector<8x128xi1>
      %cst_40 = arith.constant 0.000000e+00 : f32
      %72 = vector.shape_cast %55 : vector<1x1xf32> to vector<1x1xf32>
      %73 = vector.broadcast %72 : vector<1x1xf32> to vector<8x128xf32>
      %74 = vector.broadcast %cst_40 : f32 to vector<8x128xf32>
      %75 = arith.select %71, %73, %74 : vector<8x128xi1>, vector<8x128xf32>
      %76 = arith.addf %66, %75 : vector<8x128xf32>
      %c0_41 = arith.constant 0 : index
      %c0_42 = arith.constant 0 : index
      %77 = vector.load %arg11[%c0_41, %c0_42] : memref<8x128xf32, #tpu.memory_space<vmem>>, vector<8x128xf32>
      tpu.vector_store %arg11[%c0_41, %c0_42], %76 {strides = array<i32>} : memref<8x128xf32, #tpu.memory_space<vmem>>, vector<8x128xf32>,
    } else {
    }
    return
  }
  func.func @transform_0(%arg0: i32, %arg1: i32) -> (i32, i32) {
    %c0_i32 = arith.constant 0 : i32
    %c0_i32_0 = arith.constant 0 : i32
    return %arg1, %c0_i32 : i32, i32
  }
  func.func @transform_1(%arg0: i32, %arg1: i32) -> (i32, i32) {
    %c0_i32 = arith.constant 0 : i32
    %c0_i32_0 = arith.constant 0 : i32
    return %arg0, %c0_i32 : i32, i32
  }
  func.func @transform_2(%arg0: i32, %arg1: i32) -> (i32, i32) {
    %c0_i32 = arith.constant 0 : i32
    return %arg0, %arg1 : i32, i32
  }
  func.func @transform_3(%arg0: i32, %arg1: i32) -> (i32, i32) {
    %c0_i32 = arith.constant 0 : i32
    %c0_i32_0 = arith.constant 0 : i32
    return %arg0, %c0_i32 : i32, i32
  }
  func.func @transform_4(%arg0: i32, %arg1: i32) -> (i32, i32) {
    %c0_i32 = arith.constant 0 : i32
    %c0_i32_0 = arith.constant 0 : i32
    return %arg0, %c0_i32 : i32, i32
  }
  func.func @transform_5(%arg0: i32, %arg1: i32) -> (i32, i32) {
    %c0_i32 = arith.constant 0 : i32
    %c0_i32_0 = arith.constant 0 : i32
    return %arg0, %c0_i32 : i32, i32
  }
  func.func @transform_6(%arg0: i32, %arg1: i32) -> (i32, i32) {
    %c0_i32 = arith.constant 0 : i32
    %c0_i32_0 = arith.constant 0 : i32
    %c0_i32_1 = arith.constant 0 : i32
    return %c0_i32, %c0_i32_0 : i32, i32
  }
  func.func @transform_7(%arg0: i32, %arg1: i32) -> (i32, i32) {
    %c0_i32 = arith.constant 0 : i32
    %c0_i32_0 = arith.constant 0 : i32
    %c0_i32_1 = arith.constant 0 : i32
    return %c0_i32, %c0_i32_0 : i32, i32
  }
  func.func @transform_8(%arg0: i32, %arg1: i32) -> (i32, i32) {
    %c0_i32 = arith.constant 0 : i32
    %c0_i32_0 = arith.constant 0 : i32
    %c0_i32_1 = arith.constant 0 : i32
    return %c0_i32, %c0_i32_0 : i32, i32
  }
  func.func @transform_9(%arg0: i32, %arg1: i32) -> (i32, i32) {
    %c0_i32 = arith.constant 0 : i32
    %c0_i32_0 = arith.constant 0 : i32
    return %arg0, %c0_i32 : i32, i32
  }
}

</mosaic_0001>

<llo_original>
// kernel: premodel_forward.3
$region0: #{premodel_forward.3}
  #allocation0 [shape = 'u32[]', space=smem, size = 0x4, offset = 0x4, fixed_abs, tag = 'smem constant byte address 0x4 - core index']
  #allocation1 [shape = 'u32[144,128]{1,0:T(1,128)}', space=vmem, size = 0x12000, scoped, tag = 'internal scratch']
  #allocation2 [shape = 'f32[128,128]{1,0:T(8,128)}', space=vmem, size = 0x10000, scoped, tag = 'scratch operand']
  %s0 = inlined_call_operand.hbm [shape: bf16[128,128], index: 0, kind: input, shape index: {}, may-alias: {0,1}]
  %s1 = inlined_call_operand.hbm [shape: bf16[128,128], index: 1, kind: input, shape index: {}, may-alias: {0,1}]
  %s2 = inlined_call_operand.hbm [shape: s8[128,128], index: 2, kind: input, shape index: {}]
  %s3 = inlined_call_operand.hbm [shape: f32[128,1], index: 3, kind: input, shape index: {}]
  %s4 = inlined_call_operand.hbm [shape: bf16[128,128], index: 4, kind: input, shape index: {}]
  %s5 = inlined_call_operand.hbm [shape: bf16[128,128], index: 5, kind: input, shape index: {}]
  %s6 = inlined_call_operand.hbm [shape: f32[1,128], index: 6, kind: input, shape index: {}]
  %s7 = inlined_call_operand.hbm [shape: bf16[128,128], index: 7, kind: output, shape index: {}]
  %s8 = sld [smem:[#allocation0]]
  $region74: #{premodel_forward.3} parent=0
    _
  %s10 = ssub.s32 1, %s8
  %s11 = scalar_select 0, %s10, %s8
  $region1: #{premodel_forward.3} parent=0
    #allocation3 [shape = 'u8[32768]{0}', space=vmem, size = 0x8000, scoped, tag = 'input window, operand 0, single buffered']
    #allocation4 [shape = 's32[1]{0}', space=sflag, size = 0x4, scoped, tag = 'scoped memory for premodel_forward.3']
    #allocation5 [shape = 's32[1]{0}', space=sflag, size = 0x4, scoped, tag = 'scoped memory for premodel_forward.3']
    #allocation6 [shape = 'u8[32768]{0}', space=vmem, size = 0x8000, scoped, tag = 'input window, operand 1, single buffered']
    #allocation7 [shape = 's32[1]{0}', space=sflag, size = 0x4, scoped, tag = 'scoped memory for premodel_forward.3']
    #allocation8 [shape = 'u8[16384]{0}', space=vmem, size = 0x4000, scoped, tag = 'input window, operand 2, single buffered']
    #allocation9 [shape = 'u8[65536]{0}', space=vmem, size = 0x10000, scoped, tag = 'input window, operand 3, single buffered']
    #allocation10 [shape = 's32[1]{0}', space=sflag, size = 0x4, scoped, tag = 'scoped memory for premodel_forward.3']
    #allocation11 [shape = 'u8[32768]{0}', space=vmem, size = 0x8000, scoped, tag = 'input window, operand 4, single buffered']
    #allocation12 [shape = 'u8[32768]{0}', space=vmem, size = 0x8000, scoped, tag = 'input window, operand 5, single buffered']
    #allocation13 [shape = 's32[1]{0}', space=sflag, size = 0x4, scoped, tag = 'scoped memory for premodel_forward.3']
    #allocation14 [shape = 'u8[512]{0}', space=vmem, size = 0x400, scoped, tag = 'input window, operand 6, single buffered']
    #allocation15 [shape = 'u8[32768]{0}', space=vmem, size = 0x8000, scoped, tag = 'output window, operand 0, single buffered']
    %12 = vsyncpa [#allocation4], 0
    %13 = vsyncpa [#allocation7], 0
    %14 = vsyncpa [#allocation10], 0
    %15 = vsyncpa [#allocation13], 0
    %16 = vsyncpa [#allocation5], 0
    // Predicated region
    $region2: #{premodel_forward.3} parent=1 // pred_check
      _
    $region3: #{premodel_forward.3} parent=1 // pred_check_branch
      %18 = sbr.rel (0) target = $region5
    $region4: #{premodel_forward.3} parent=1 // pred_region
      %s20 = ssub.s32 1024, 1024
      %21 = vsyncadd [#allocation4], %s20
      %s22 = sshll.u32 [#allocation3], 4
      %s23 = int_to_ptr.vmem [resolvable:$true] %s22
      %28 = dma.hbm_to_vmem [thread:$0]  %s0, 1024, %s23, [#allocation4], 64, 64, 4
    $region5: #{premodel_forward.3} parent=1 // pred_fallthru
      _
    // Predicated region
    $region6: #{premodel_forward.3} parent=1 // pred_check
      _
    $region7: #{premodel_forward.3} parent=1 // pred_check_branch
      %30 = sbr.rel (0) target = $region9
    $region8: #{premodel_forward.3} parent=1 // pred_region
      %s32 = ssub.s32 1024, 1024
      %33 = vsyncadd [#allocation7], %s32
      %s34 = sshll.u32 [#allocation6], 4
      %s35 = int_to_ptr.vmem [resolvable:$true] %s34
      %40 = dma.hbm_to_vmem [thread:$0]  %s1, 1024, %s35, [#allocation7], 64, 64, 4
    $region9: #{premodel_forward.3} parent=1 // pred_fallthru
      _
    // Predicated region
    $region10: #{premodel_forward.3} parent=1 // pred_check
      _
    $region11: #{premodel_forward.3} parent=1 // pred_check_branch
      %42 = sbr.rel (0) target = $region13
    $region12: #{premodel_forward.3} parent=1 // pred_region
      %s44 = ssub.s32 512, 512
      %45 = vsyncadd [#allocation7], %s44
      %s46 = sshll.u32 [#allocation8], 4
      %s47 = int_to_ptr.vmem [resolvable:$true] %s46
      %52 = dma.hbm_to_vmem [thread:$0]  %s2, 512, %s47, [#allocation7], 128, 128, 8
    $region13: #{premodel_forward.3} parent=1 // pred_fallthru
      _
    // Predicated region
    $region14: #{premodel_forward.3} parent=1 // pred_check
      _
    $region15: #{premodel_forward.3} parent=1 // pred_check_branch
      %54 = sbr.rel (0) target = $region17
    $region16: #{premodel_forward.3} parent=1 // pred_region
      %s56 = ssub.s32 2048, 2048
      %57 = vsyncadd [#allocation10], %s56
      %s58 = sshll.u32 [#allocation9], 4
      %s59 = int_to_ptr.vmem [resolvable:$true] %s58
      %64 = dma.hbm_to_vmem [thread:$0]  %s3, 2048, %s59, [#allocation10], 128, 128, 8
    $region17: #{premodel_forward.3} parent=1 // pred_fallthru
      _
    // Predicated region
    $region18: #{premodel_forward.3} parent=1 // pred_check
      _
    $region19: #{premodel_forward.3} parent=1 // pred_check_branch
      %66 = sbr.rel (0) target = $region21
    $region20: #{premodel_forward.3} parent=1 // pred_region
      %s68 = ssub.s32 1024, 1024
      %69 = vsyncadd [#allocation10], %s68
      %s70 = sshll.u32 [#allocation11], 4
      %s71 = int_to_ptr.vmem [resolvable:$true] %s70
      %76 = dma.hbm_to_vmem [thread:$0]  %s4, 1024, %s71, [#allocation10], 64, 64, 4
    $region21: #{premodel_forward.3} parent=1 // pred_fallthru
      _
    // Predicated region
    $region22: #{premodel_forward.3} parent=1 // pred_check
      _
    $region23: #{premodel_forward.3} parent=1 // pred_check_branch
      %78 = sbr.rel (0) target = $region25
    $region24: #{premodel_forward.3} parent=1 // pred_region
      %s80 = ssub.s32 1024, 1024
      %81 = vsyncadd [#allocation13], %s80
      %s82 = sshll.u32 [#allocation12], 4
      %s83 = int_to_ptr.vmem [resolvable:$true] %s82
      %88 = dma.hbm_to_vmem [thread:$0]  %s5, 1024, %s83, [#allocation13], 64, 64, 4
    $region25: #{premodel_forward.3} parent=1 // pred_fallthru
      _
    // Predicated region
    $region26: #{premodel_forward.3} parent=1 // pred_check
      _
    $region27: #{premodel_forward.3} parent=1 // pred_check_branch
      %90 = sbr.rel (0) target = $region29
    $region28: #{premodel_forward.3} parent=1 // pred_region
      %s92 = ssub.s32 16, 16
      %93 = vsyncadd [#allocation13], %s92
      %s95 = sshll.u32 [#allocation14], 4
      %s96 = int_to_ptr.vmem [resolvable:$true] %s95
      %98 = dma.hbm_to_vmem [thread:$0]  %s6, 16, %s96, [#allocation13]
    $region29: #{premodel_forward.3} parent=1 // pred_fallthru
      _
    // Predicated region
    $region30: #{premodel_forward.3} parent=1 // pred_check
      _
    $region31: #{premodel_forward.3} parent=1 // pred_check_branch
      %100 = sbr.rel (0) target = $region33
    $region32: #{premodel_forward.3} parent=1 // pred_region
      %101 = dma.done [#allocation4], 1024
    $region33: #{premodel_forward.3} parent=1 // pred_fallthru
      _
    // Predicated region
    $region34: #{premodel_forward.3} parent=1 // pred_check
      _
    $region35: #{premodel_forward.3} parent=1 // pred_check_branch
      %103 = sbr.rel (0) target = $region37
    $region36: #{premodel_forward.3} parent=1 // pred_region
      %104 = dma.done [#allocation7], 1024
    $region37: #{premodel_forward.3} parent=1 // pred_fallthru
      _
    // Predicated region
    $region38: #{premodel_forward.3} parent=1 // pred_check
      _
    $region39: #{premodel_forward.3} parent=1 // pred_check_branch
      %106 = sbr.rel (0) target = $region41
    $region40: #{premodel_forward.3} parent=1 // pred_region
      %107 = dma.done [#allocation7], 512
    $region41: #{premodel_forward.3} parent=1 // pred_fallthru
      _
    // Predicated region
    $region42: #{premodel_forward.3} parent=1 // pred_check
      _
    $region43: #{premodel_forward.3} parent=1 // pred_check_branch
      %109 = sbr.rel (0) target = $region45
    $region44: #{premodel_forward.3} parent=1 // pred_region
      %110 = dma.done [#allocation10], 2048
    $region45: #{premodel_forward.3} parent=1 // pred_fallthru
      _
    // Predicated region
    $region46: #{premodel_forward.3} parent=1 // pred_check
      _
    $region47: #{premodel_forward.3} parent=1 // pred_check_branch
      %112 = sbr.rel (0) target = $region49
    $region48: #{premodel_forward.3} parent=1 // pred_region
      %113 = dma.done [#allocation10], 1024
    $region49: #{premodel_forward.3} parent=1 // pred_fallthru
      _
    // Predicated region
    $region50: #{premodel_forward.3} parent=1 // pred_check
      _
    $region51: #{premodel_forward.3} parent=1 // pred_check_branch
      %115 = sbr.rel (0) target = $region53
    $region52: #{premodel_forward.3} parent=1 // pred_region
      %116 = dma.done [#allocation13], 1024
    $region53: #{premodel_forward.3} parent=1 // pred_fallthru
      _
    // Predicated region
    $region54: #{premodel_forward.3} parent=1 // pred_check
      _
    $region55: #{premodel_forward.3} parent=1 // pred_check_branch
      %118 = sbr.rel (0) target = $region57
    $region56: #{premodel_forward.3} parent=1 // pred_region
      %119 = dma.done [#allocation13], 16
    $region57: #{premodel_forward.3} parent=1 // pred_fallthru
      _
    %p121 = scmp.eq.s32.totalorder 0, 0
    // Predicated region
    $region58: #{premodel_forward.3} parent=1 // pred_check
      %p122 = pneg %p121
    $region59: #{premodel_forward.3} parent=1 // pred_check_branch
      %124 = sbr.rel (%p122) target = $region61
    $region60: #{premodel_forward.3} parent=1 // pred_region
      %125 = vst [vmem:[#allocation2] sm:$0xff] 0.0
      %126 = vst [vmem:[#allocation2 + $0x8] sm:$0xff] 0.0
      %127 = vst [vmem:[#allocation2 + $0x10] sm:$0xff] 0.0
      %128 = vst [vmem:[#allocation2 + $0x18] sm:$0xff] 0.0
      %129 = vst [vmem:[#allocation2 + $0x20] sm:$0xff] 0.0
      %130 = vst [vmem:[#allocation2 + $0x28] sm:$0xff] 0.0
      %131 = vst [vmem:[#allocation2 + $0x30] sm:$0xff] 0.0
      %132 = vst [vmem:[#allocation2 + $0x38] sm:$0xff] 0.0
      %133 = vst [vmem:[#allocation2 + $0x40] sm:$0xff] 0.0
      %134 = vst [vmem:[#allocation2 + $0x48] sm:$0xff] 0.0
      %135 = vst [vmem:[#allocation2 + $0x50] sm:$0xff] 0.0
      %136 = vst [vmem:[#allocation2 + $0x58] sm:$0xff] 0.0
      %137 = vst [vmem:[#allocation2 + $0x60] sm:$0xff] 0.0
      %138 = vst [vmem:[#allocation2 + $0x68] sm:$0xff] 0.0
      %139 = vst [vmem:[#allocation2 + $0x70] sm:$0xff] 0.0
      %140 = vst [vmem:[#allocation2 + $0x78] sm:$0xff] 0.0
    $region61: #{premodel_forward.3} parent=1 // pred_fallthru
      _
    %v141 = vld [vmem:[#allocation8] sm:$0xff]
    %v142 = vld [vmem:[#allocation8 + $0x8] sm:$0xff]
    %v143 = vld [vmem:[#allocation8 + $0x10] sm:$0xff]
    %v144 = vld [vmem:[#allocation8 + $0x18] sm:$0xff]
    %v145 = vunpack.c.l.s8.bf16 %v141
    %v146 = vunpack.c.h.s8.bf16 %v141
    %v147 = vunpack.c.l.s8.bf16 %v142
    %v148 = vunpack.c.h.s8.bf16 %v142
    %v149 = vunpack.c.l.s8.bf16 %v143
    %v150 = vunpack.c.h.s8.bf16 %v143
    %v151 = vunpack.c.l.s8.bf16 %v144
    %v152 = vunpack.c.h.s8.bf16 %v144
    %v153 = vld [vmem:[#allocation2] sm:$0xff]
    %v154 = vld [vmem:[#allocation2 + $0x8] sm:$0xff]
    %v155 = vld [vmem:[#allocation2 + $0x10] sm:$0xff]
    %v156 = vld [vmem:[#allocation2 + $0x18] sm:$0xff]
    %v157 = vld [vmem:[#allocation2 + $0x20] sm:$0xff]
    %v158 = vld [vmem:[#allocation2 + $0x28] sm:$0xff]
    %v159 = vld [vmem:[#allocation2 + $0x30] sm:$0xff]
    %v160 = vld [vmem:[#allocation2 + $0x38] sm:$0xff]
    %v161 = vld [vmem:[#allocation2 + $0x40] sm:$0xff]
    %v162 = vld [vmem:[#allocation2 + $0x48] sm:$0xff]
    %v163 = vld [vmem:[#allocation2 + $0x50] sm:$0xff]
    %v164 = vld [vmem:[#allocation2 + $0x58] sm:$0xff]
    %v165 = vld [vmem:[#allocation2 + $0x60] sm:$0xff]
    %v166 = vld [vmem:[#allocation2 + $0x68] sm:$0xff]
    %v167 = vld [vmem:[#allocation2 + $0x70] sm:$0xff]
    %v168 = vld [vmem:[#allocation2 + $0x78] sm:$0xff]
    %v169 = vld [vmem:[#allocation3] sm:$0xf]
    %v170 = vld [vmem:[#allocation3 + $0x4] sm:$0xf]
    %v171 = vld [vmem:[#allocation3 + $0x8] sm:$0xf]
    %v172 = vld [vmem:[#allocation3 + $0xc] sm:$0xf]
    %v173 = vld [vmem:[#allocation3 + $0x10] sm:$0xf]
    %v174 = vld [vmem:[#allocation3 + $0x14] sm:$0xf]
    %v175 = vld [vmem:[#allocation3 + $0x18] sm:$0xf]
    %v176 = vld [vmem:[#allocation3 + $0x1c] sm:$0xf]
    %v177 = vld [vmem:[#allocation3 + $0x20] sm:$0xf]
    %v178 = vld [vmem:[#allocation3 + $0x24] sm:$0xf]
    %v179 = vld [vmem:[#allocation3 + $0x28] sm:$0xf]
    %v180 = vld [vmem:[#allocation3 + $0x2c] sm:$0xf]
    %v181 = vld [vmem:[#allocation3 + $0x30] sm:$0xf]
    %v182 = vld [vmem:[#allocation3 + $0x34] sm:$0xf]
    %v183 = vld [vmem:[#allocation3 + $0x38] sm:$0xf]
    %v184 = vld [vmem:[#allocation3 + $0x3c] sm:$0xf]
    %v201 = vunpack.c.l.b16 %v169
    %v202 = vunpack.c.l.b16 %v170
    %v203 = vunpack.c.l.b16 %v171
    %v204 = vunpack.c.l.b16 %v172
    %v205 = vunpack.c.l.b16 %v173
    %v206 = vunpack.c.l.b16 %v174
    %v207 = vunpack.c.l.b16 %v175
    %v208 = vunpack.c.l.b16 %v176
    %v209 = vunpack.c.l.b16 %v177
    %v210 = vunpack.c.l.b16 %v178
    %v211 = vunpack.c.l.b16 %v179
    %v212 = vunpack.c.l.b16 %v180
    %v213 = vunpack.c.l.b16 %v181
    %v214 = vunpack.c.l.b16 %v182
    %v215 = vunpack.c.l.b16 %v183
    %v216 = vunpack.c.l.b16 %v184
    %v217 = vpack.c.b16 %v202, %v201
    %v218 = vpack.c.b16 %v204, %v203
    %v219 = vpack.c.b16 %v206, %v205
    %v220 = vpack.c.b16 %v208, %v207
    %v221 = vpack.c.b16 %v210, %v209
    %v222 = vpack.c.b16 %v212, %v211
    %v223 = vpack.c.b16 %v214, %v213
    %v224 = vpack.c.b16 %v216, %v215
    %233 = vmatprep.subr.bf16.mxu0 0
    %234 = vmatpush1.bf16.msra.mxu0 %v217
    %235 = vmatprep.subr.bf16.mxu0 0
    %236 = vmatpush1.bf16.msra.mxu0 %v218
    %237 = vmatprep.subr.bf16.mxu0 0
    %238 = vmatpush1.bf16.msra.mxu0 %v219
    %239 = vmatprep.subr.bf16.mxu0 0
    %240 = vmatpush1.bf16.msra.mxu0 %v220
    %241 = vmatprep.subr.bf16.mxu0 0
    %242 = vmatpush1.bf16.msra.mxu0 %v221
    %243 = vmatprep.subr.bf16.mxu0 0
    %244 = vmatpush1.bf16.msra.mxu0 %v222
    %245 = vmatprep.subr.bf16.mxu0 0
    %246 = vmatpush1.bf16.msra.mxu0 %v223
    %247 = vmatprep.subr.bf16.mxu0 0
    %248 = vmatpush1.bf16.msra.mxu0 %v224
    %249 = vmatprep.subr.bf16.mxu0 0
    %250 = vmatpush1.bf16.msra.mxu0 0
    %251 = vmatprep.subr.bf16.mxu0 0
    %252 = vmatpush1.bf16.msra.mxu0 0
    %253 = vmatprep.subr.bf16.mxu0 0
    %254 = vmatpush1.bf16.msra.mxu0 0
    %255 = vmatprep.subr.bf16.mxu0 0
    %256 = vmatpush1.bf16.msra.mxu0 0
    %257 = vmatprep.subr.bf16.mxu0 0
    %258 = vmatpush1.bf16.msra.mxu0 0
    %259 = vmatprep.subr.bf16.mxu0 0
    %260 = vmatpush1.bf16.msra.mxu0 0
    %261 = vmatprep.subr.bf16.mxu0 0
    %262 = vmatpush1.bf16.msra.mxu0 0
    %263 = vmatprep.subr.bf16.mxu0 0
    %264 = vmatpush1.bf16.msra.mxu0 0
    %265 = vmatprep.mubr.bf16.mxu0 0
    %266 = vmatmul.mubr.bf16.gmra.mrb[0].mxu0 %v145
    %v267 = vpop.f32.mrb[0].mxu0
    %v268 = vadd.f32 0.0, %v267
    %v269 = vpop.f32.mrb[0].mxu0
    %v270 = vpop.f32.mrb[0].mxu0
    %v271 = vadd.f32 0.0, %v270
    %v272 = vpop.f32.mrb[0].mxu0
    %273 = vmatprep.mubr.bf16.mxu0 0
    %274 = vmatmul.mubr.bf16.gmra.mrb[0].mxu0 %v146
    %v275 = vpop.f32.mrb[0].mxu0
    %v276 = vadd.f32 0.0, %v275
    %v277 = vpop.f32.mrb[0].mxu0
    %v278 = vpop.f32.mrb[0].mxu0
    %v279 = vadd.f32 0.0, %v278
    %v280 = vpop.f32.mrb[0].mxu0
    %281 = vmatprep.mubr.bf16.mxu0 0
    %282 = vmatmul.mubr.bf16.gmra.mrb[0].mxu0 %v147
    %v283 = vpop.f32.mrb[0].mxu0
    %v284 = vadd.f32 0.0, %v283
    %v285 = vpop.f32.mrb[0].mxu0
    %v286 = vpop.f32.mrb[0].mxu0
    %v287 = vadd.f32 0.0, %v286
    %v288 = vpop.f32.mrb[0].mxu0
    %289 = vmatprep.mubr.bf16.mxu0 0
    %290 = vmatmul.mubr.bf16.gmra.mrb[0].mxu0 %v148
    %v291 = vpop.f32.mrb[0].mxu0
    %v292 = vadd.f32 0.0, %v291
    %v293 = vpop.f32.mrb[0].mxu0
    %v294 = vpop.f32.mrb[0].mxu0
    %v295 = vadd.f32 0.0, %v294
    %v296 = vpop.f32.mrb[0].mxu0
    %297 = vmatprep.mubr.bf16.mxu0 0
    %298 = vmatmul.mubr.bf16.gmra.mrb[0].mxu0 %v149
    %v299 = vpop.f32.mrb[0].mxu0
    %v300 = vadd.f32 0.0, %v299
    %v301 = vpop.f32.mrb[0].mxu0
    %v302 = vpop.f32.mrb[0].mxu0
    %v303 = vadd.f32 0.0, %v302
    %v304 = vpop.f32.mrb[0].mxu0
    %305 = vmatprep.mubr.bf16.mxu0 0
    %306 = vmatmul.mubr.bf16.gmra.mrb[0].mxu0 %v150
    %v307 = vpop.f32.mrb[0].mxu0
    %v308 = vadd.f32 0.0, %v307
    %v309 = vpop.f32.mrb[0].mxu0
    %v310 = vpop.f32.mrb[0].mxu0
    %v311 = vadd.f32 0.0, %v310
    %v312 = vpop.f32.mrb[0].mxu0
    %313 = vmatprep.mubr.bf16.mxu0 0
    %314 = vmatmul.mubr.bf16.gmra.mrb[0].mxu0 %v151
    %v315 = vpop.f32.mrb[0].mxu0
    %v316 = vadd.f32 0.0, %v315
    %v317 = vpop.f32.mrb[0].mxu0
    %v318 = vpop.f32.mrb[0].mxu0
    %v319 = vadd.f32 0.0, %v318
    %v320 = vpop.f32.mrb[0].mxu0
    %321 = vmatprep.mubr.bf16.mxu0 0
    %322 = vmatmul.mubr.bf16.gmra.mrb[0].mxu0 %v152
    %v323 = vpop.f32.mrb[0].mxu0
    %v324 = vadd.f32 0.0, %v323
    %v325 = vpop.f32.mrb[0].mxu0
    %v326 = vpop.f32.mrb[0].mxu0
    %v327 = vadd.f32 0.0, %v326
    %v328 = vpop.f32.mrb[0].mxu0
    %329 = vdwg.mxu0
    %v330 = vadd.f32 %v153, %v268
    %v331 = vadd.f32 %v154, %v271
    %v332 = vadd.f32 %v155, %v276
    %v333 = vadd.f32 %v156, %v279
    %v334 = vadd.f32 %v157, %v284
    %v335 = vadd.f32 %v158, %v287
    %v336 = vadd.f32 %v159, %v292
    %v337 = vadd.f32 %v160, %v295
    %v338 = vadd.f32 %v161, %v300
    %v339 = vadd.f32 %v162, %v303
    %v340 = vadd.f32 %v163, %v308
    %v341 = vadd.f32 %v164, %v311
    %v342 = vadd.f32 %v165, %v316
    %v343 = vadd.f32 %v166, %v319
    %v344 = vadd.f32 %v167, %v324
    %v345 = vadd.f32 %v168, %v327
    %346 = vst [vmem:[#allocation2] sm:$0xff] %v330
    %347 = vst [vmem:[#allocation2 + $0x8] sm:$0xff] %v331
    %348 = vst [vmem:[#allocation2 + $0x10] sm:$0xff] %v332
    %349 = vst [vmem:[#allocation2 + $0x18] sm:$0xff] %v333
    %350 = vst [vmem:[#allocation2 + $0x20] sm:$0xff] %v334
    %351 = vst [vmem:[#allocation2 + $0x28] sm:$0xff] %v335
    %352 = vst [vmem:[#allocation2 + $0x30] sm:$0xff] %v336
    %353 = vst [vmem:[#allocation2 + $0x38] sm:$0xff] %v337
    %354 = vst [vmem:[#allocation2 + $0x40] sm:$0xff] %v338
    %355 = vst [vmem:[#allocation2 + $0x48] sm:$0xff] %v339
    %356 = vst [vmem:[#allocation2 + $0x50] sm:$0xff] %v340
    %357 = vst [vmem:[#allocation2 + $0x58] sm:$0xff] %v341
    %358 = vst [vmem:[#allocation2 + $0x60] sm:$0xff] %v342
    %359 = vst [vmem:[#allocation2 + $0x68] sm:$0xff] %v343
    %360 = vst [vmem:[#allocation2 + $0x70] sm:$0xff] %v344
    %361 = vst [vmem:[#allocation2 + $0x78] sm:$0xff] %v345
    // Predicated region
    $region62: #{premodel_forward.3} parent=1 // pred_check
      %p362 = pneg %p121
    $region63: #{premodel_forward.3} parent=1 // pred_check_branch
      %364 = sbr.rel (%p362) target = $region65
    $region64: #{premodel_forward.3} parent=1 // pred_region
      %v365 = vld [vmem:[#allocation2] sm:$0xff]
      %v366 = vld [vmem:[#allocation2 + $0x8] sm:$0xff]
      %v367 = vld [vmem:[#allocation2 + $0x10] sm:$0xff]
      %v368 = vld [vmem:[#allocation2 + $0x18] sm:$0xff]
      %v369 = vld [vmem:[#allocation2 + $0x20] sm:$0xff]
      %v370 = vld [vmem:[#allocation2 + $0x28] sm:$0xff]
      %v371 = vld [vmem:[#allocation2 + $0x30] sm:$0xff]
      %v372 = vld [vmem:[#allocation2 + $0x38] sm:$0xff]
      %v373 = vld [vmem:[#allocation2 + $0x40] sm:$0xff]
      %v374 = vld [vmem:[#allocation2 + $0x48] sm:$0xff]
      %v375 = vld [vmem:[#allocation2 + $0x50] sm:$0xff]
      %v376 = vld [vmem:[#allocation2 + $0x58] sm:$0xff]
      %v377 = vld [vmem:[#allocation2 + $0x60] sm:$0xff]
      %v378 = vld [vmem:[#allocation2 + $0x68] sm:$0xff]
      %v379 = vld [vmem:[#allocation2 + $0x70] sm:$0xff]
      %v380 = vld [vmem:[#allocation2 + $0x78] sm:$0xff]
      %v381 = vld [vmem:[#allocation9] sm:$0xff]
      %v382 = vld [vmem:[#allocation9 + $0x8] sm:$0xff]
      %v383 = vld [vmem:[#allocation9 + $0x10] sm:$0xff]
      %v384 = vld [vmem:[#allocation9 + $0x18] sm:$0xff]
      %v385 = vld [vmem:[#allocation9 + $0x20] sm:$0xff]
      %v386 = vld [vmem:[#allocation9 + $0x28] sm:$0xff]
      %v387 = vld [vmem:[#allocation9 + $0x30] sm:$0xff]
      %v388 = vld [vmem:[#allocation9 + $0x38] sm:$0xff]
      %v389 = vld [vmem:[#allocation9 + $0x40] sm:$0xff]
      %v390 = vld [vmem:[#allocation9 + $0x48] sm:$0xff]
      %v391 = vld [vmem:[#allocation9 + $0x50] sm:$0xff]
      %v392 = vld [vmem:[#allocation9 + $0x58] sm:$0xff]
      %v393 = vld [vmem:[#allocation9 + $0x60] sm:$0xff]
      %v394 = vld [vmem:[#allocation9 + $0x68] sm:$0xff]
      %v395 = vld [vmem:[#allocation9 + $0x70] sm:$0xff]
      %v396 = vld [vmem:[#allocation9 + $0x78] sm:$0xff]
      %398 = vset.pattern.permute.xlu0 0
      %399 = vperm.xlu0 %398, %v381
      %v400 = vpop.permute.xlu0 %399
      %403 = vset.pattern.permute.xlu0 0
      %404 = vperm.xlu0 %403, %v382
      %v405 = vpop.permute.xlu0 %404
      %408 = vset.pattern.permute.xlu0 0
      %409 = vperm.xlu0 %408, %v383
      %v410 = vpop.permute.xlu0 %409
      %413 = vset.pattern.permute.xlu0 0
      %414 = vperm.xlu0 %413, %v384
      %v415 = vpop.permute.xlu0 %414
      %418 = vset.pattern.permute.xlu0 0
      %419 = vperm.xlu0 %418, %v385
      %v420 = vpop.permute.xlu0 %419
      %423 = vset.pattern.permute.xlu0 0
      %424 = vperm.xlu0 %423, %v386
      %v425 = vpop.permute.xlu0 %424
      %428 = vset.pattern.permute.xlu0 0
      %429 = vperm.xlu0 %428, %v387
      %v430 = vpop.permute.xlu0 %429
      %433 = vset.pattern.permute.xlu0 0
      %434 = vperm.xlu0 %433, %v388
      %v435 = vpop.permute.xlu0 %434
      %438 = vset.pattern.permute.xlu0 0
      %439 = vperm.xlu0 %438, %v389
      %v440 = vpop.permute.xlu0 %439
      %443 = vset.pattern.permute.xlu0 0
      %444 = vperm.xlu0 %443, %v390
      %v445 = vpop.permute.xlu0 %444
      %448 = vset.pattern.permute.xlu0 0
      %449 = vperm.xlu0 %448, %v391
      %v450 = vpop.permute.xlu0 %449
      %453 = vset.pattern.permute.xlu0 0
      %454 = vperm.xlu0 %453, %v392
      %v455 = vpop.permute.xlu0 %454
      %458 = vset.pattern.permute.xlu0 0
      %459 = vperm.xlu0 %458, %v393
      %v460 = vpop.permute.xlu0 %459
      %463 = vset.pattern.permute.xlu0 0
      %464 = vperm.xlu0 %463, %v394
      %v465 = vpop.permute.xlu0 %464
      %468 = vset.pattern.permute.xlu0 0
      %469 = vperm.xlu0 %468, %v395
      %v470 = vpop.permute.xlu0 %469
      %473 = vset.pattern.permute.xlu0 0
      %474 = vperm.xlu0 %473, %v396
      %v475 = vpop.permute.xlu0 %474
      %v477 = vmul.f32 %v365, %v400
      %v478 = vmul.f32 %v366, %v405
      %v479 = vmul.f32 %v367, %v410
      %v480 = vmul.f32 %v368, %v415
      %v481 = vmul.f32 %v369, %v420
      %v482 = vmul.f32 %v370, %v425
      %v483 = vmul.f32 %v371, %v430
      %v484 = vmul.f32 %v372, %v435
      %v485 = vmul.f32 %v373, %v440
      %v486 = vmul.f32 %v374, %v445
      %v487 = vmul.f32 %v375, %v450
      %v488 = vmul.f32 %v376, %v455
      %v489 = vmul.f32 %v377, %v460
      %v490 = vmul.f32 %v378, %v465
      %v491 = vmul.f32 %v379, %v470
      %v492 = vmul.f32 %v380, %v475
      %v493 = vpack.c.bf16 %v478, %v477
      %v494 = vpack.c.bf16 %v480, %v479
      %v495 = vpack.c.bf16 %v482, %v481
      %v496 = vpack.c.bf16 %v484, %v483
      %v497 = vpack.c.bf16 %v486, %v485
      %v498 = vpack.c.bf16 %v488, %v487
      %v499 = vpack.c.bf16 %v490, %v489
      %v500 = vpack.c.bf16 %v492, %v491
      %v501 = vld [vmem:[#allocation6] sm:$0xf]
      %v502 = vld [vmem:[#allocation6 + $0x4] sm:$0xf]
      %v503 = vld [vmem:[#allocation6 + $0x8] sm:$0xf]
      %v504 = vld [vmem:[#allocation6 + $0xc] sm:$0xf]
      %v505 = vld [vmem:[#allocation6 + $0x10] sm:$0xf]
      %v506 = vld [vmem:[#allocation6 + $0x14] sm:$0xf]
      %v507 = vld [vmem:[#allocation6 + $0x18] sm:$0xf]
      %v508 = vld [vmem:[#allocation6 + $0x1c] sm:$0xf]
      %v509 = vld [vmem:[#allocation6 + $0x20] sm:$0xf]
      %v510 = vld [vmem:[#allocation6 + $0x24] sm:$0xf]
      %v511 = vld [vmem:[#allocation6 + $0x28] sm:$0xf]
      %v512 = vld [vmem:[#allocation6 + $0x2c] sm:$0xf]
      %v513 = vld [vmem:[#allocation6 + $0x30] sm:$0xf]
      %v514 = vld [vmem:[#allocation6 + $0x34] sm:$0xf]
      %v515 = vld [vmem:[#allocation6 + $0x38] sm:$0xf]
      %v516 = vld [vmem:[#allocation6 + $0x3c] sm:$0xf]
      %v517 = vld [vmem:[#allocation11] sm:$0xf]
      %v518 = vld [vmem:[#allocation11 + $0x4] sm:$0xf]
      %v519 = vld [vmem:[#allocation11 + $0x8] sm:$0xf]
      %v520 = vld [vmem:[#allocation11 + $0xc] sm:$0xf]
      %v521 = vld [vmem:[#allocation11 + $0x10] sm:$0xf]
      %v522 = vld [vmem:[#allocation11 + $0x14] sm:$0xf]
      %v523 = vld [vmem:[#allocation11 + $0x18] sm:$0xf]
      %v524 = vld [vmem:[#allocation11 + $0x1c] sm:$0xf]
      %v525 = vld [vmem:[#allocation11 + $0x20] sm:$0xf]
      %v526 = vld [vmem:[#allocation11 + $0x24] sm:$0xf]
      %v527 = vld [vmem:[#allocation11 + $0x28] sm:$0xf]
      %v528 = vld [vmem:[#allocation11 + $0x2c] sm:$0xf]
      %v529 = vld [vmem:[#allocation11 + $0x30] sm:$0xf]
      %v530 = vld [vmem:[#allocation11 + $0x34] sm:$0xf]
      %v531 = vld [vmem:[#allocation11 + $0x38] sm:$0xf]
      %v532 = vld [vmem:[#allocation11 + $0x3c] sm:$0xf]
      %v533 = vld [vmem:[#allocation12] sm:$0xf]
      %v534 = vld [vmem:[#allocation12 + $0x4] sm:$0xf]
      %v535 = vld [vmem:[#allocation12 + $0x8] sm:$0xf]
      %v536 = vld [vmem:[#allocation12 + $0xc] sm:$0xf]
      %v537 = vld [vmem:[#allocation12 + $0x10] sm:$0xf]
      %v538 = vld [vmem:[#allocation12 + $0x14] sm:$0xf]
      %v539 = vld [vmem:[#allocation12 + $0x18] sm:$0xf]
      %v540 = vld [vmem:[#allocation12 + $0x1c] sm:$0xf]
      %v541 = vld [vmem:[#allocation12 + $0x20] sm:$0xf]
      %v542 = vld [vmem:[#allocation12 + $0x24] sm:$0xf]
      %v543 = vld [vmem:[#allocation12 + $0x28] sm:$0xf]
      %v544 = vld [vmem:[#allocation12 + $0x2c] sm:$0xf]
      %v545 = vld [vmem:[#allocation12 + $0x30] sm:$0xf]
      %v546 = vld [vmem:[#allocation12 + $0x34] sm:$0xf]
      %v547 = vld [vmem:[#allocation12 + $0x38] sm:$0xf]
      %v548 = vld [vmem:[#allocation12 + $0x3c] sm:$0xf]
      %v565 = vunpack.c.l.b16 %v533
      %v566 = vunpack.c.l.b16 %v534
      %v567 = vunpack.c.l.b16 %v535
      %v568 = vunpack.c.l.b16 %v536
      %v569 = vunpack.c.l.b16 %v537
      %v570 = vunpack.c.l.b16 %v538
      %v571 = vunpack.c.l.b16 %v539
      %v572 = vunpack.c.l.b16 %v540
      %v573 = vunpack.c.l.b16 %v541
      %v574 = vunpack.c.l.b16 %v542
      %v575 = vunpack.c.l.b16 %v543
      %v576 = vunpack.c.l.b16 %v544
      %v577 = vunpack.c.l.b16 %v545
      %v578 = vunpack.c.l.b16 %v546
      %v579 = vunpack.c.l.b16 %v547
      %v580 = vunpack.c.l.b16 %v548
      %v581 = vpack.c.b16 %v566, %v565
      %v582 = vpack.c.b16 %v568, %v567
      %v583 = vpack.c.b16 %v570, %v569
      %v584 = vpack.c.b16 %v572, %v571
      %v585 = vpack.c.b16 %v574, %v573
      %v586 = vpack.c.b16 %v576, %v575
      %v587 = vpack.c.b16 %v578, %v577
      %v588 = vpack.c.b16 %v580, %v579
      %597 = vmatprep.subr.bf16.mxu0 0
      %598 = vmatpush1.bf16.msra.mxu0 %v581
      %599 = vmatprep.subr.bf16.mxu0 0
      %600 = vmatpush1.bf16.msra.mxu0 %v582
      %601 = vmatprep.subr.bf16.mxu0 0
      %602 = vmatpush1.bf16.msra.mxu0 %v583
      %603 = vmatprep.subr.bf16.mxu0 0
      %604 = vmatpush1.bf16.msra.mxu0 %v584
      %605 = vmatprep.subr.bf16.mxu0 0
      %606 = vmatpush1.bf16.msra.mxu0 %v585
      %607 = vmatprep.subr.bf16.mxu0 0
      %608 = vmatpush1.bf16.msra.mxu0 %v586
      %609 = vmatprep.subr.bf16.mxu0 0
      %610 = vmatpush1.bf16.msra.mxu0 %v587
      %611 = vmatprep.subr.bf16.mxu0 0
      %612 = vmatpush1.bf16.msra.mxu0 %v588
      %613 = vmatprep.subr.bf16.mxu0 0
      %614 = vmatpush1.bf16.msra.mxu0 0
      %615 = vmatprep.subr.bf16.mxu0 0
      %616 = vmatpush1.bf16.msra.mxu0 0
      %617 = vmatprep.subr.bf16.mxu0 0
      %618 = vmatpush1.bf16.msra.mxu0 0
      %619 = vmatprep.subr.bf16.mxu0 0
      %620 = vmatpush1.bf16.msra.mxu0 0
      %621 = vmatprep.subr.bf16.mxu0 0
      %622 = vmatpush1.bf16.msra.mxu0 0
      %623 = vmatprep.subr.bf16.mxu0 0
      %624 = vmatpush1.bf16.msra.mxu0 0
      %625 = vmatprep.subr.bf16.mxu0 0
      %626 = vmatpush1.bf16.msra.mxu0 0
      %627 = vmatprep.subr.bf16.mxu0 0
      %628 = vmatpush1.bf16.msra.mxu0 0
      %629 = vmatprep.mubr.bf16.mxu0 0
      %630 = vmatmul.mubr.bf16.gmra.mrb[0].mxu0 %v493
      %v631 = vpop.f32.mrb[0].mxu0
      %v632 = vadd.f32 0.0, %v631
      %v633 = vpop.f32.mrb[0].mxu0
      %v634 = vpop.f32.mrb[0].mxu0
      %v635 = vadd.f32 0.0, %v634
      %v636 = vpop.f32.mrb[0].mxu0
      %637 = vmatprep.mubr.bf16.mxu0 0
      %638 = vmatmul.mubr.bf16.gmra.mrb[0].mxu0 %v494
      %v639 = vpop.f32.mrb[0].mxu0
      %v640 = vadd.f32 0.0, %v639
      %v641 = vpop.f32.mrb[0].mxu0
      %v642 = vpop.f32.mrb[0].mxu0
      %v643 = vadd.f32 0.0, %v642
      %v644 = vpop.f32.mrb[0].mxu0
      %645 = vmatprep.mubr.bf16.mxu0 0
      %646 = vmatmul.mubr.bf16.gmra.mrb[0].mxu0 %v495
      %v647 = vpop.f32.mrb[0].mxu0
      %v648 = vadd.f32 0.0, %v647
      %v649 = vpop.f32.mrb[0].mxu0
      %v650 = vpop.f32.mrb[0].mxu0
      %v651 = vadd.f32 0.0, %v650
      %v652 = vpop.f32.mrb[0].mxu0
      %653 = vmatprep.mubr.bf16.mxu0 0
      %654 = vmatmul.mubr.bf16.gmra.mrb[0].mxu0 %v496
      %v655 = vpop.f32.mrb[0].mxu0
      %v656 = vadd.f32 0.0, %v655
      %v657 = vpop.f32.mrb[0].mxu0
      %v658 = vpop.f32.mrb[0].mxu0
      %v659 = vadd.f32 0.0, %v658
      %v660 = vpop.f32.mrb[0].mxu0
      %661 = vmatprep.mubr.bf16.mxu0 0
      %662 = vmatmul.mubr.bf16.gmra.mrb[0].mxu0 %v497
      %v663 = vpop.f32.mrb[0].mxu0
      %v664 = vadd.f32 0.0, %v663
      %v665 = vpop.f32.mrb[0].mxu0
      %v666 = vpop.f32.mrb[0].mxu0
      %v667 = vadd.f32 0.0, %v666
      %v668 = vpop.f32.mrb[0].mxu0
      %669 = vmatprep.mubr.bf16.mxu0 0
      %670 = vmatmul.mubr.bf16.gmra.mrb[0].mxu0 %v498
      %v671 = vpop.f32.mrb[0].mxu0
      %v672 = vadd.f32 0.0, %v671
      %v673 = vpop.f32.mrb[0].mxu0
      %v674 = vpop.f32.mrb[0].mxu0
      %v675 = vadd.f32 0.0, %v674
      %v676 = vpop.f32.mrb[0].mxu0
      %677 = vmatprep.mubr.bf16.mxu0 0
      %678 = vmatmul.mubr.bf16.gmra.mrb[0].mxu0 %v499
      %v679 = vpop.f32.mrb[0].mxu0
      %v680 = vadd.f32 0.0, %v679
      %v681 = vpop.f32.mrb[0].mxu0
      %v682 = vpop.f32.mrb[0].mxu0
      %v683 = vadd.f32 0.0, %v682
      %v684 = vpop.f32.mrb[0].mxu0
      %685 = vmatprep.mubr.bf16.mxu0 0
      %686 = vmatmul.mubr.bf16.gmra.mrb[0].mxu0 %v500
      %v687 = vpop.f32.mrb[0].mxu0
      %v688 = vadd.f32 0.0, %v687
      %v689 = vpop.f32.mrb[0].mxu0
      %v690 = vpop.f32.mrb[0].mxu0
      %v691 = vadd.f32 0.0, %v690
      %v692 = vpop.f32.mrb[0].mxu0
      %693 = vdwg.mxu0
      %v710 = vunpack.c.l.b16 %v501
      %v711 = vunpack.c.l.b16 %v502
      %v712 = vunpack.c.l.b16 %v503
      %v713 = vunpack.c.l.b16 %v504
      %v714 = vunpack.c.l.b16 %v505
      %v715 = vunpack.c.l.b16 %v506
      %v716 = vunpack.c.l.b16 %v507
      %v717 = vunpack.c.l.b16 %v508
      %v718 = vunpack.c.l.b16 %v509
      %v719 = vunpack.c.l.b16 %v510
      %v720 = vunpack.c.l.b16 %v511
      %v721 = vunpack.c.l.b16 %v512
      %v722 = vunpack.c.l.b16 %v513
      %v723 = vunpack.c.l.b16 %v514
      %v724 = vunpack.c.l.b16 %v515
      %v725 = vunpack.c.l.b16 %v516
      %v726 = vpack.c.b16 %v711, %v710
      %v727 = vpack.c.b16 %v713, %v712
      %v728 = vpack.c.b16 %v715, %v714
      %v729 = vpack.c.b16 %v717, %v716
      %v730 = vpack.c.b16 %v719, %v718
      %v731 = vpack.c.b16 %v721, %v720
      %v732 = vpack.c.b16 %v723, %v722
      %v733 = vpack.c.b16 %v725, %v724
      %v758 = vunpack.c.l.b16 %v517
      %v759 = vunpack.c.l.b16 %v518
      %v760 = vunpack.c.l.b16 %v519
      %v761 = vunpack.c.l.b16 %v520
      %v762 = vunpack.c.l.b16 %v521
      %v763 = vunpack.c.l.b16 %v522
      %v764 = vunpack.c.l.b16 %v523
      %v765 = vunpack.c.l.b16 %v524
      %v766 = vunpack.c.l.b16 %v525
      %v767 = vunpack.c.l.b16 %v526
      %v768 = vunpack.c.l.b16 %v527
      %v769 = vunpack.c.l.b16 %v528
      %v770 = vunpack.c.l.b16 %v529
      %v771 = vunpack.c.l.b16 %v530
      %v772 = vunpack.c.l.b16 %v531
      %v773 = vunpack.c.l.b16 %v532
      %v774 = vpack.c.b16 %v759, %v758
      %v775 = vpack.c.b16 %v761, %v760
      %v776 = vpack.c.b16 %v763, %v762
      %v777 = vpack.c.b16 %v765, %v764
      %v778 = vpack.c.b16 %v767, %v766
      %v779 = vpack.c.b16 %v769, %v768
      %v780 = vpack.c.b16 %v771, %v770
      %v781 = vpack.c.b16 %v773, %v772
      %790 = vmatprep.subr.bf16.mxu0 0
      %791 = vmatpush1.bf16.msra.mxu0 %v774
      %792 = vmatprep.subr.bf16.mxu0 0
      %793 = vmatpush1.bf16.msra.mxu0 %v775
      %794 = vmatprep.subr.bf16.mxu0 0
      %795 = vmatpush1.bf16.msra.mxu0 %v776
      %796 = vmatprep.subr.bf16.mxu0 0
      %797 = vmatpush1.bf16.msra.mxu0 %v777
      %798 = vmatprep.subr.bf16.mxu0 0
      %799 = vmatpush1.bf16.msra.mxu0 %v778
      %800 = vmatprep.subr.bf16.mxu0 0
      %801 = vmatpush1.bf16.msra.mxu0 %v779
      %802 = vmatprep.subr.bf16.mxu0 0
      %803 = vmatpush1.bf16.msra.mxu0 %v780
      %804 = vmatprep.subr.bf16.mxu0 0
      %805 = vmatpush1.bf16.msra.mxu0 %v781
      %806 = vmatprep.subr.bf16.mxu0 0
      %807 = vmatpush1.bf16.msra.mxu0 0
      %808 = vmatprep.subr.bf16.mxu0 0
      %809 = vmatpush1.bf16.msra.mxu0 0
      %810 = vmatprep.subr.bf16.mxu0 0
      %811 = vmatpush1.bf16.msra.mxu0 0
      %812 = vmatprep.subr.bf16.mxu0 0
      %813 = vmatpush1.bf16.msra.mxu0 0
      %814 = vmatprep.subr.bf16.mxu0 0
      %815 = vmatpush1.bf16.msra.mxu0 0
      %816 = vmatprep.subr.bf16.mxu0 0
      %817 = vmatpush1.bf16.msra.mxu0 0
      %818 = vmatprep.subr.bf16.mxu0 0
      %819 = vmatpush1.bf16.msra.mxu0 0
      %820 = vmatprep.subr.bf16.mxu0 0
      %821 = vmatpush1.bf16.msra.mxu0 0
      %822 = vmatprep.mubr.bf16.mxu0 0
      %823 = vmatmul.mubr.bf16.gmra.mrb[0].mxu0 %v726
      %v824 = vpop.f32.mrb[0].mxu0
      %v825 = vadd.f32 %v632, %v824
      %v826 = vpop.f32.mrb[0].mxu0
      %v827 = vpop.f32.mrb[0].mxu0
      %v828 = vadd.f32 %v635, %v827
      %v829 = vpop.f32.mrb[0].mxu0
      %830 = vmatprep.mubr.bf16.mxu0 0
      %831 = vmatmul.mubr.bf16.gmra.mrb[0].mxu0 %v727
      %v832 = vpop.f32.mrb[0].mxu0
      %v833 = vadd.f32 %v640, %v832
      %v834 = vpop.f32.mrb[0].mxu0
      %v835 = vpop.f32.mrb[0].mxu0
      %v836 = vadd.f32 %v643, %v835
      %v837 = vpop.f32.mrb[0].mxu0
      %838 = vmatprep.mubr.bf16.mxu0 0
      %839 = vmatmul.mubr.bf16.gmra.mrb[0].mxu0 %v728
      %v840 = vpop.f32.mrb[0].mxu0
      %v841 = vadd.f32 %v648, %v840
      %v842 = vpop.f32.mrb[0].mxu0
      %v843 = vpop.f32.mrb[0].mxu0
      %v844 = vadd.f32 %v651, %v843
      %v845 = vpop.f32.mrb[0].mxu0
      %846 = vmatprep.mubr.bf16.mxu0 0
      %847 = vmatmul.mubr.bf16.gmra.mrb[0].mxu0 %v729
      %v848 = vpop.f32.mrb[0].mxu0
      %v849 = vadd.f32 %v656, %v848
      %v850 = vpop.f32.mrb[0].mxu0
      %v851 = vpop.f32.mrb[0].mxu0
      %v852 = vadd.f32 %v659, %v851
      %v853 = vpop.f32.mrb[0].mxu0
      %854 = vmatprep.mubr.bf16.mxu0 0
      %855 = vmatmul.mubr.bf16.gmra.mrb[0].mxu0 %v730
      %v856 = vpop.f32.mrb[0].mxu0
      %v857 = vadd.f32 %v664, %v856
      %v858 = vpop.f32.mrb[0].mxu0
      %v859 = vpop.f32.mrb[0].mxu0
      %v860 = vadd.f32 %v667, %v859
      %v861 = vpop.f32.mrb[0].mxu0
      %862 = vmatprep.mubr.bf16.mxu0 0
      %863 = vmatmul.mubr.bf16.gmra.mrb[0].mxu0 %v731
      %v864 = vpop.f32.mrb[0].mxu0
      %v865 = vadd.f32 %v672, %v864
      %v866 = vpop.f32.mrb[0].mxu0
      %v867 = vpop.f32.mrb[0].mxu0
      %v868 = vadd.f32 %v675, %v867
      %v869 = vpop.f32.mrb[0].mxu0
      %870 = vmatprep.mubr.bf16.mxu0 0
      %871 = vmatmul.mubr.bf16.gmra.mrb[0].mxu0 %v732
      %v872 = vpop.f32.mrb[0].mxu0
      %v873 = vadd.f32 %v680, %v872
      %v874 = vpop.f32.mrb[0].mxu0
      %v875 = vpop.f32.mrb[0].mxu0
      %v876 = vadd.f32 %v683, %v875
      %v877 = vpop.f32.mrb[0].mxu0
      %878 = vmatprep.mubr.bf16.mxu0 0
      %879 = vmatmul.mubr.bf16.gmra.mrb[0].mxu0 %v733
      %v880 = vpop.f32.mrb[0].mxu0
      %v881 = vadd.f32 %v688, %v880
      %v882 = vpop.f32.mrb[0].mxu0
      %v883 = vpop.f32.mrb[0].mxu0
      %v884 = vadd.f32 %v691, %v883
      %v885 = vpop.f32.mrb[0].mxu0
      %886 = vdwg.mxu0
      %v887 = vld [vmem:[#allocation14] sm:$0x1]
      %v889 = vlaneseq
      %v890 = vshrl.u32 %v889, 7
      %v891 = vsub.s32 0, %v890
      %v892 = vrot.slane %v887, %v891
      %v894 = vadd.f32 %v825, %v892
      %v895 = vadd.f32 %v828, %v892
      %v896 = vadd.f32 %v833, %v892
      %v897 = vadd.f32 %v836, %v892
      %v898 = vadd.f32 %v841, %v892
      %v899 = vadd.f32 %v844, %v892
      %v900 = vadd.f32 %v849, %v892
      %v901 = vadd.f32 %v852, %v892
      %v902 = vadd.f32 %v857, %v892
      %v903 = vadd.f32 %v860, %v892
      %v904 = vadd.f32 %v865, %v892
      %v905 = vadd.f32 %v868, %v892
      %v906 = vadd.f32 %v873, %v892
      %v907 = vadd.f32 %v876, %v892
      %v908 = vadd.f32 %v881, %v892
      %v909 = vadd.f32 %v884, %v892
      %v910 = vmax.f32 %v894, 0.0
      %v911 = vmax.f32 %v895, 0.0
      %v912 = vmax.f32 %v896, 0.0
      %v913 = vmax.f32 %v897, 0.0
      %v914 = vmax.f32 %v898, 0.0
      %v915 = vmax.f32 %v899, 0.0
      %v916 = vmax.f32 %v900, 0.0
      %v917 = vmax.f32 %v901, 0.0
      %v918 = vmax.f32 %v902, 0.0
      %v919 = vmax.f32 %v903, 0.0
      %v920 = vmax.f32 %v904, 0.0
      %v921 = vmax.f32 %v905, 0.0
      %v922 = vmax.f32 %v906, 0.0
      %v923 = vmax.f32 %v907, 0.0
      %v924 = vmax.f32 %v908, 0.0
      %v925 = vmax.f32 %v909, 0.0
      %v926 = vpack.c.bf16 %v911, %v910
      %v927 = vpack.c.bf16 %v913, %v912
      %v928 = vpack.c.bf16 %v915, %v914
      %v929 = vpack.c.bf16 %v917, %v916
      %v930 = vpack.c.bf16 %v919, %v918
      %v931 = vpack.c.bf16 %v921, %v920
      %v932 = vpack.c.bf16 %v923, %v922
      %v933 = vpack.c.bf16 %v925, %v924
      %v942 = vunpack.c.l.b16 %v926
      %v943 = vunpack.c.h.b16 %v926
      %v944 = vunpack.c.l.b16 %v927
      %v945 = vunpack.c.h.b16 %v927
      %v946 = vunpack.c.l.b16 %v928
      %v947 = vunpack.c.h.b16 %v928
      %v948 = vunpack.c.l.b16 %v929
      %v949 = vunpack.c.h.b16 %v929
      %v950 = vunpack.c.l.b16 %v930
      %v951 = vunpack.c.h.b16 %v930
      %v952 = vunpack.c.l.b16 %v931
      %v953 = vunpack.c.h.b16 %v931
      %v954 = vunpack.c.l.b16 %v932
      %v955 = vunpack.c.h.b16 %v932
      %v956 = vunpack.c.l.b16 %v933
      %v957 = vunpack.c.h.b16 %v933
      %v958 = vpack.c.b16 %v942, %v942
      %v959 = vpack.c.b16 %v943, %v943
      %v960 = vpack.c.b16 %v944, %v944
      %v961 = vpack.c.b16 %v945, %v945
      %v962 = vpack.c.b16 %v946, %v946
      %v963 = vpack.c.b16 %v947, %v947
      %v964 = vpack.c.b16 %v948, %v948
      %v965 = vpack.c.b16 %v949, %v949
      %v966 = vpack.c.b16 %v950, %v950
      %v967 = vpack.c.b16 %v951, %v951
      %v968 = vpack.c.b16 %v952, %v952
      %v969 = vpack.c.b16 %v953, %v953
      %v970 = vpack.c.b16 %v954, %v954
      %v971 = vpack.c.b16 %v955, %v955
      %v972 = vpack.c.b16 %v956, %v956
      %v973 = vpack.c.b16 %v957, %v957
      %990 = vst [vmem:[#allocation15] sm:$0xf] %v958
      %991 = vst [vmem:[#allocation15 + $0x4] sm:$0xf] %v959
      %992 = vst [vmem:[#allocation15 + $0x8] sm:$0xf] %v960
      %993 = vst [vmem:[#allocation15 + $0xc] sm:$0xf] %v961
      %994 = vst [vmem:[#allocation15 + $0x10] sm:$0xf] %v962
      %995 = vst [vmem:[#allocation15 + $0x14] sm:$0xf] %v963
      %996 = vst [vmem:[#allocation15 + $0x18] sm:$0xf] %v964
      %997 = vst [vmem:[#allocation15 + $0x1c] sm:$0xf] %v965
      %998 = vst [vmem:[#allocation15 + $0x20] sm:$0xf] %v966
      %999 = vst [vmem:[#allocation15 + $0x24] sm:$0xf] %v967
      %1000 = vst [vmem:[#allocation15 + $0x28] sm:$0xf] %v968
      %1001 = vst [vmem:[#allocation15 + $0x2c] sm:$0xf] %v969
      %1002 = vst [vmem:[#allocation15 + $0x30] sm:$0xf] %v970
      %1003 = vst [vmem:[#allocation15 + $0x34] sm:$0xf] %v971
      %1004 = vst [vmem:[#allocation15 + $0x38] sm:$0xf] %v972
      %1005 = vst [vmem:[#allocation15 + $0x3c] sm:$0xf] %v973
    $region65: #{premodel_forward.3} parent=1 // pred_fallthru
      _
    // Predicated region
    $region66: #{premodel_forward.3} parent=1 // pred_check
      _
    $region67: #{premodel_forward.3} parent=1 // pred_check_branch
      %1007 = sbr.rel (0) target = $region69
    $region68: #{premodel_forward.3} parent=1 // pred_region
      %s1009 = ssub.s32 1024, 1024
      %1010 = vsyncadd [#allocation5], %s1009
      %s1011 = sshll.u32 [#allocation15], 4
      %s1012 = int_to_ptr.vmem [resolvable:$true] %s1011
      %1017 = dma.vmem_to_hbm [thread:$0]  %s1012, 1024, %s7, [#allocation5], 64, 64, 4
    $region69: #{premodel_forward.3} parent=1 // pred_fallthru
      _
    // Predicated region
    $region70: #{premodel_forward.3} parent=1 // pred_check
      _
    $region71: #{premodel_forward.3} parent=1 // pred_check_branch
      %1019 = sbr.rel (0) target = $region73
    $region72: #{premodel_forward.3} parent=1 // pred_region
      %1020 = dma.done [#allocation5], 1024
    $region73: #{premodel_forward.3} parent=1 // pred_fallthru
      _
    %1021 = vsyncpa [#allocation4], 1
    %1022 = vsyncpa [#allocation7], 1
    %1023 = vsyncpa [#allocation10], 1
    %1024 = vsyncpa [#allocation13], 1
    %1025 = vsyncpa [#allocation5], 1

// kernel: premodel_forward.4
$region0: #{premodel_forward.4}
  #allocation0 [shape = 'u32[]', space=smem, size = 0x4, offset = 0x4, fixed_abs, tag = 'smem constant byte address 0x4 - core index']
  #allocation1 [shape = 'u32[144,128]{1,0:T(1,128)}', space=vmem, size = 0x12000, scoped, tag = 'internal scratch']
  #allocation2 [shape = 'f32[128,128]{1,0:T(8,128)}', space=vmem, size = 0x10000, scoped, tag = 'scratch operand']
  %s0 = inlined_call_operand.hbm [shape: bf16[128,128], index: 0, kind: input, shape index: {}, may-alias: {0,1}]
  %s1 = inlined_call_operand.hbm [shape: bf16[128,128], index: 1, kind: input, shape index: {}, may-alias: {0,1}]
  %s2 = inlined_call_operand.hbm [shape: s8[128,128], index: 2, kind: input, shape index: {}]
  %s3 = inlined_call_operand.hbm [shape: f32[128,1], index: 3, kind: input, shape index: {}]
  %s4 = inlined_call_operand.hbm [shape: f32[128,1], index: 4, kind: input, shape index: {}]
  %s5 = inlined_call_operand.hbm [shape: f32[128,1], index: 5, kind: input, shape index: {}]
  %s6 = inlined_call_operand.hbm [shape: bf16[128,128], index: 6, kind: input, shape index: {}]
  %s7 = inlined_call_operand.hbm [shape: bf16[128,128], index: 7, kind: input, shape index: {}]
  %s8 = inlined_call_operand.hbm [shape: f32[1,128], index: 8, kind: input, shape index: {}]
  %s9 = inlined_call_operand.hbm [shape: bf16[128,128], index: 9, kind: input, shape index: {}]
  %s10 = inlined_call_operand.hbm [shape: bf16[128,128], index: 10, kind: output, shape index: {0}]
  %s11 = inlined_call_operand.hbm [shape: f32[8,128], index: 11, kind: output, shape index: {1}]
  %12 = xla_tuple %s10, %s11
  %s13 = sld [smem:[#allocation0]]
  $region106: #{premodel_forward.4} parent=0
    _
  %s15 = ssub.s32 1, %s13
  %s16 = scalar_select 0, %s15, %s13
  $region1: #{premodel_forward.4} parent=0
    #allocation3 [shape = 'u8[32768]{0}', space=vmem, size = 0x8000, scoped, tag = 'input window, operand 0, single buffered']
    #allocation4 [shape = 's32[1]{0}', space=sflag, size = 0x4, scoped, tag = 'scoped memory for premodel_forward.4']
    #allocation5 [shape = 's32[1]{0}', space=sflag, size = 0x4, scoped, tag = 'scoped memory for premodel_forward.4']
    #allocation6 [shape = 'u8[32768]{0}', space=vmem, size = 0x8000, scoped, tag = 'input window, operand 1, single buffered']
    #allocation7 [shape = 's32[1]{0}', space=sflag, size = 0x4, scoped, tag = 'scoped memory for premodel_forward.4']
    #allocation8 [shape = 'u8[16384]{0}', space=vmem, size = 0x4000, scoped, tag = 'input window, operand 2, single buffered']
    #allocation9 [shape = 'u8[65536]{0}', space=vmem, size = 0x10000, scoped, tag = 'input window, operand 3, single buffered']
    #allocation10 [shape = 's32[1]{0}', space=sflag, size = 0x4, scoped, tag = 'scoped memory for premodel_forward.4']
    #allocation11 [shape = 'u8[65536]{0}', space=vmem, size = 0x10000, scoped, tag = 'input window, operand 4, single buffered']
    #allocation12 [shape = 'u8[65536]{0}', space=vmem, size = 0x10000, scoped, tag = 'input window, operand 5, single buffered']
    #allocation13 [shape = 's32[1]{0}', space=sflag, size = 0x4, scoped, tag = 'scoped memory for premodel_forward.4']
    #allocation14 [shape = 'u8[32768]{0}', space=vmem, size = 0x8000, scoped, tag = 'input window, operand 6, single buffered']
    #allocation15 [shape = 'u8[32768]{0}', space=vmem, size = 0x8000, scoped, tag = 'input window, operand 7, single buffered']
    #allocation16 [shape = 's32[1]{0}', space=sflag, size = 0x4, scoped, tag = 'scoped memory for premodel_forward.4']
    #allocation17 [shape = 'u8[512]{0}', space=vmem, size = 0x400, scoped, tag = 'input window, operand 8, single buffered']
    #allocation18 [shape = 'u8[32768]{0}', space=vmem, size = 0x8000, scoped, tag = 'input window, operand 9, single buffered']
    #allocation19 [shape = 's32[1]{0}', space=sflag, size = 0x4, scoped, tag = 'scoped memory for premodel_forward.4']
    #allocation20 [shape = 'u8[32768]{0}', space=vmem, size = 0x8000, scoped, tag = 'output window, operand 0, single buffered']
    #allocation21 [shape = 'u8[4096]{0}', space=vmem, size = 0x1000, scoped, tag = 'output window, operand 1, single buffered']
    #allocation22 [shape = 's32[1]{0}', space=sflag, size = 0x4, scoped, tag = 'scoped memory for premodel_forward.4']
    %17 = vsyncpa [#allocation4], 0
    %18 = vsyncpa [#allocation7], 0
    %19 = vsyncpa [#allocation10], 0
    %20 = vsyncpa [#allocation13], 0
    %21 = vsyncpa [#allocation16], 0
    %22 = vsyncpa [#allocation19], 0
    %23 = vsyncpa [#allocation5], 0
    %24 = vsyncpa [#allocation22], 0
    // Predicated region
    $region2: #{premodel_forward.4} parent=1 // pred_check
      _
    $region3: #{premodel_forward.4} parent=1 // pred_check_branch
      %26 = sbr.rel (0) target = $region5
    $region4: #{premodel_forward.4} parent=1 // pred_region
      %s28 = ssub.s32 1024, 1024
      %29 = vsyncadd [#allocation4], %s28
      %s30 = sshll.u32 [#allocation3], 4
      %s31 = int_to_ptr.vmem [resolvable:$true] %s30
      %36 = dma.hbm_to_vmem [thread:$0]  %s0, 1024, %s31, [#allocation4], 64, 64, 4
    $region5: #{premodel_forward.4} parent=1 // pred_fallthru
      _
    // Predicated region
    $region6: #{premodel_forward.4} parent=1 // pred_check
      _
    $region7: #{premodel_forward.4} parent=1 // pred_check_branch
      %38 = sbr.rel (0) target = $region9
    $region8: #{premodel_forward.4} parent=1 // pred_region
      %s40 = ssub.s32 1024, 1024
      %41 = vsyncadd [#allocation7], %s40
      %s42 = sshll.u32 [#allocation6], 4
      %s43 = int_to_ptr.vmem [resolvable:$true] %s42
      %48 = dma.hbm_to_vmem [thread:$0]  %s1, 1024, %s43, [#allocation7], 64, 64, 4
    $region9: #{premodel_forward.4} parent=1 // pred_fallthru
      _
    // Predicated region
    $region10: #{premodel_forward.4} parent=1 // pred_check
      _
    $region11: #{premodel_forward.4} parent=1 // pred_check_branch
      %50 = sbr.rel (0) target = $region13
    $region12: #{premodel_forward.4} parent=1 // pred_region
      %s52 = ssub.s32 512, 512
      %53 = vsyncadd [#allocation7], %s52
      %s54 = sshll.u32 [#allocation8], 4
      %s55 = int_to_ptr.vmem [resolvable:$true] %s54
      %60 = dma.hbm_to_vmem [thread:$0]  %s2, 512, %s55, [#allocation7], 128, 128, 8
    $region13: #{premodel_forward.4} parent=1 // pred_fallthru
      _
    // Predicated region
    $region14: #{premodel_forward.4} parent=1 // pred_check
      _
    $region15: #{premodel_forward.4} parent=1 // pred_check_branch
      %62 = sbr.rel (0) target = $region17
    $region16: #{premodel_forward.4} parent=1 // pred_region
      %s64 = ssub.s32 2048, 2048
      %65 = vsyncadd [#allocation10], %s64
      %s66 = sshll.u32 [#allocation9], 4
      %s67 = int_to_ptr.vmem [resolvable:$true] %s66
      %72 = dma.hbm_to_vmem [thread:$0]  %s3, 2048, %s67, [#allocation10], 128, 128, 8
    $region17: #{premodel_forward.4} parent=1 // pred_fallthru
      _
    // Predicated region
    $region18: #{premodel_forward.4} parent=1 // pred_check
      _
    $region19: #{premodel_forward.4} parent=1 // pred_check_branch
      %74 = sbr.rel (0) target = $region21
    $region20: #{premodel_forward.4} parent=1 // pred_region
      %s76 = ssub.s32 2048, 2048
      %77 = vsyncadd [#allocation10], %s76
      %s78 = sshll.u32 [#allocation11], 4
      %s79 = int_to_ptr.vmem [resolvable:$true] %s78
      %84 = dma.hbm_to_vmem [thread:$0]  %s4, 2048, %s79, [#allocation10], 128, 128, 8
    $region21: #{premodel_forward.4} parent=1 // pred_fallthru
      _
    // Predicated region
    $region22: #{premodel_forward.4} parent=1 // pred_check
      _
    $region23: #{premodel_forward.4} parent=1 // pred_check_branch
      %86 = sbr.rel (0) target = $region25
    $region24: #{premodel_forward.4} parent=1 // pred_region
      %s88 = ssub.s32 2048, 2048
      %89 = vsyncadd [#allocation13], %s88
      %s90 = sshll.u32 [#allocation12], 4
      %s91 = int_to_ptr.vmem [resolvable:$true] %s90
      %96 = dma.hbm_to_vmem [thread:$0]  %s5, 2048, %s91, [#allocation13], 128, 128, 8
    $region25: #{premodel_forward.4} parent=1 // pred_fallthru
      _
    // Predicated region
    $region26: #{premodel_forward.4} parent=1 // pred_check
      _
    $region27: #{premodel_forward.4} parent=1 // pred_check_branch
      %98 = sbr.rel (0) target = $region29
    $region28: #{premodel_forward.4} parent=1 // pred_region
      %s100 = ssub.s32 1024, 1024
      %101 = vsyncadd [#allocation13], %s100
      %s102 = sshll.u32 [#allocation14], 4
      %s103 = int_to_ptr.vmem [resolvable:$true] %s102
      %108 = dma.hbm_to_vmem [thread:$0]  %s6, 1024, %s103, [#allocation13], 64, 64, 4
    $region29: #{premodel_forward.4} parent=1 // pred_fallthru
      _
    // Predicated region
    $region30: #{premodel_forward.4} parent=1 // pred_check
      _
    $region31: #{premodel_forward.4} parent=1 // pred_check_branch
      %110 = sbr.rel (0) target = $region33
    $region32: #{premodel_forward.4} parent=1 // pred_region
      %s112 = ssub.s32 1024, 1024
      %113 = vsyncadd [#allocation16], %s112
      %s114 = sshll.u32 [#allocation15], 4
      %s115 = int_to_ptr.vmem [resolvable:$true] %s114
      %120 = dma.hbm_to_vmem [thread:$0]  %s7, 1024, %s115, [#allocation16], 64, 64, 4
    $region33: #{premodel_forward.4} parent=1 // pred_fallthru
      _
    // Predicated region
    $region34: #{premodel_forward.4} parent=1 // pred_check
      _
    $region35: #{premodel_forward.4} parent=1 // pred_check_branch
      %122 = sbr.rel (0) target = $region37
    $region36: #{premodel_forward.4} parent=1 // pred_region
      %s124 = ssub.s32 16, 16
      %125 = vsyncadd [#allocation16], %s124
      %s127 = sshll.u32 [#allocation17], 4
      %s128 = int_to_ptr.vmem [resolvable:$true] %s127
      %130 = dma.hbm_to_vmem [thread:$0]  %s8, 16, %s128, [#allocation16]
    $region37: #{premodel_forward.4} parent=1 // pred_fallthru
      _
    // Predicated region
    $region38: #{premodel_forward.4} parent=1 // pred_check
      _
    $region39: #{premodel_forward.4} parent=1 // pred_check_branch
      %132 = sbr.rel (0) target = $region41
    $region40: #{premodel_forward.4} parent=1 // pred_region
      %s134 = ssub.s32 1024, 1024
      %135 = vsyncadd [#allocation19], %s134
      %s136 = sshll.u32 [#allocation18], 4
      %s137 = int_to_ptr.vmem [resolvable:$true] %s136
      %142 = dma.hbm_to_vmem [thread:$0]  %s9, 1024, %s137, [#allocation19], 64, 64, 4
    $region41: #{premodel_forward.4} parent=1 // pred_fallthru
      _
    // Predicated region
    $region42: #{premodel_forward.4} parent=1 // pred_check
      _
    $region43: #{premodel_forward.4} parent=1 // pred_check_branch
      %144 = sbr.rel (0) target = $region45
    $region44: #{premodel_forward.4} parent=1 // pred_region
      %145 = dma.done [#allocation4], 1024
    $region45: #{premodel_forward.4} parent=1 // pred_fallthru
      _
    // Predicated region
    $region46: #{premodel_forward.4} parent=1 // pred_check
      _
    $region47: #{premodel_forward.4} parent=1 // pred_check_branch
      %147 = sbr.rel (0) target = $region49
    $region48: #{premodel_forward.4} parent=1 // pred_region
      %148 = dma.done [#allocation7], 1024
    $region49: #{premodel_forward.4} parent=1 // pred_fallthru
      _
    // Predicated region
    $region50: #{premodel_forward.4} parent=1 // pred_check
      _
    $region51: #{premodel_forward.4} parent=1 // pred_check_branch
      %150 = sbr.rel (0) target = $region53
    $region52: #{premodel_forward.4} parent=1 // pred_region
      %151 = dma.done [#allocation7], 512
    $region53: #{premodel_forward.4} parent=1 // pred_fallthru
      _
    // Predicated region
    $region54: #{premodel_forward.4} parent=1 // pred_check
      _
    $region55: #{premodel_forward.4} parent=1 // pred_check_branch
      %153 = sbr.rel (0) target = $region57
    $region56: #{premodel_forward.4} parent=1 // pred_region
      %154 = dma.done [#allocation10], 2048
    $region57: #{premodel_forward.4} parent=1 // pred_fallthru
      _
    // Predicated region
    $region58: #{premodel_forward.4} parent=1 // pred_check
      _
    $region59: #{premodel_forward.4} parent=1 // pred_check_branch
      %156 = sbr.rel (0) target = $region61
    $region60: #{premodel_forward.4} parent=1 // pred_region
      %157 = dma.done [#allocation10], 2048
    $region61: #{premodel_forward.4} parent=1 // pred_fallthru
      _
    // Predicated region
    $region62: #{premodel_forward.4} parent=1 // pred_check
      _
    $region63: #{premodel_forward.4} parent=1 // pred_check_branch
      %159 = sbr.rel (0) target = $region65
    $region64: #{premodel_forward.4} parent=1 // pred_region
      %160 = dma.done [#allocation13], 2048
    $region65: #{premodel_forward.4} parent=1 // pred_fallthru
      _
    // Predicated region
    $region66: #{premodel_forward.4} parent=1 // pred_check
      _
    $region67: #{premodel_forward.4} parent=1 // pred_check_branch
      %162 = sbr.rel (0) target = $region69
    $region68: #{premodel_forward.4} parent=1 // pred_region
      %163 = dma.done [#allocation13], 1024
    $region69: #{premodel_forward.4} parent=1 // pred_fallthru
      _
    // Predicated region
    $region70: #{premodel_forward.4} parent=1 // pred_check
      _
    $region71: #{premodel_forward.4} parent=1 // pred_check_branch
      %165 = sbr.rel (0) target = $region73
    $region72: #{premodel_forward.4} parent=1 // pred_region
      %166 = dma.done [#allocation16], 1024
    $region73: #{premodel_forward.4} parent=1 // pred_fallthru
      _
    // Predicated region
    $region74: #{premodel_forward.4} parent=1 // pred_check
      _
    $region75: #{premodel_forward.4} parent=1 // pred_check_branch
      %168 = sbr.rel (0) target = $region77
    $region76: #{premodel_forward.4} parent=1 // pred_region
      %169 = dma.done [#allocation16], 16
    $region77: #{premodel_forward.4} parent=1 // pred_fallthru
      _
    // Predicated region
    $region78: #{premodel_forward.4} parent=1 // pred_check
      _
    $region79: #{premodel_forward.4} parent=1 // pred_check_branch
      %171 = sbr.rel (0) target = $region81
    $region80: #{premodel_forward.4} parent=1 // pred_region
      %172 = dma.done [#allocation19], 1024
    $region81: #{premodel_forward.4} parent=1 // pred_fallthru
      _
    %p174 = scmp.eq.s32.totalorder 0, 0
    // Predicated region
    $region82: #{premodel_forward.4} parent=1 // pred_check
      %p175 = pneg %p174
    $region83: #{premodel_forward.4} parent=1 // pred_check_branch
      %177 = sbr.rel (%p175) target = $region85
    $region84: #{premodel_forward.4} parent=1 // pred_region
      %178 = vst [vmem:[#allocation2] sm:$0xff] 0.0
      %179 = vst [vmem:[#allocation2 + $0x8] sm:$0xff] 0.0
      %180 = vst [vmem:[#allocation2 + $0x10] sm:$0xff] 0.0
      %181 = vst [vmem:[#allocation2 + $0x18] sm:$0xff] 0.0
      %182 = vst [vmem:[#allocation2 + $0x20] sm:$0xff] 0.0
      %183 = vst [vmem:[#allocation2 + $0x28] sm:$0xff] 0.0
      %184 = vst [vmem:[#allocation2 + $0x30] sm:$0xff] 0.0
      %185 = vst [vmem:[#allocation2 + $0x38] sm:$0xff] 0.0
      %186 = vst [vmem:[#allocation2 + $0x40] sm:$0xff] 0.0
      %187 = vst [vmem:[#allocation2 + $0x48] sm:$0xff] 0.0
      %188 = vst [vmem:[#allocation2 + $0x50] sm:$0xff] 0.0
      %189 = vst [vmem:[#allocation2 + $0x58] sm:$0xff] 0.0
      %190 = vst [vmem:[#allocation2 + $0x60] sm:$0xff] 0.0
      %191 = vst [vmem:[#allocation2 + $0x68] sm:$0xff] 0.0
      %192 = vst [vmem:[#allocation2 + $0x70] sm:$0xff] 0.0
      %193 = vst [vmem:[#allocation2 + $0x78] sm:$0xff] 0.0
    $region85: #{premodel_forward.4} parent=1 // pred_fallthru
      _
    %v194 = vld [vmem:[#allocation8] sm:$0xff]
    %v195 = vld [vmem:[#allocation8 + $0x8] sm:$0xff]
    %v196 = vld [vmem:[#allocation8 + $0x10] sm:$0xff]
    %v197 = vld [vmem:[#allocation8 + $0x18] sm:$0xff]
    %v198 = vunpack.c.l.s8.bf16 %v194
    %v199 = vunpack.c.h.s8.bf16 %v194
    %v200 = vunpack.c.l.s8.bf16 %v195
    %v201 = vunpack.c.h.s8.bf16 %v195
    %v202 = vunpack.c.l.s8.bf16 %v196
    %v203 = vunpack.c.h.s8.bf16 %v196
    %v204 = vunpack.c.l.s8.bf16 %v197
    %v205 = vunpack.c.h.s8.bf16 %v197
    %v206 = vld [vmem:[#allocation2] sm:$0xff]
    %v207 = vld [vmem:[#allocation2 + $0x8] sm:$0xff]
    %v208 = vld [vmem:[#allocation2 + $0x10] sm:$0xff]
    %v209 = vld [vmem:[#allocation2 + $0x18] sm:$0xff]
    %v210 = vld [vmem:[#allocation2 + $0x20] sm:$0xff]
    %v211 = vld [vmem:[#allocation2 + $0x28] sm:$0xff]
    %v212 = vld [vmem:[#allocation2 + $0x30] sm:$0xff]
    %v213 = vld [vmem:[#allocation2 + $0x38] sm:$0xff]
    %v214 = vld [vmem:[#allocation2 + $0x40] sm:$0xff]
    %v215 = vld [vmem:[#allocation2 + $0x48] sm:$0xff]
    %v216 = vld [vmem:[#allocation2 + $0x50] sm:$0xff]
    %v217 = vld [vmem:[#allocation2 + $0x58] sm:$0xff]
    %v218 = vld [vmem:[#allocation2 + $0x60] sm:$0xff]
    %v219 = vld [vmem:[#allocation2 + $0x68] sm:$0xff]
    %v220 = vld [vmem:[#allocation2 + $0x70] sm:$0xff]
    %v221 = vld [vmem:[#allocation2 + $0x78] sm:$0xff]
    %v222 = vld [vmem:[#allocation3] sm:$0xf]
    %v223 = vld [vmem:[#allocation3 + $0x4] sm:$0xf]
    %v224 = vld [vmem:[#allocation3 + $0x8] sm:$0xf]
    %v225 = vld [vmem:[#allocation3 + $0xc] sm:$0xf]
    %v226 = vld [vmem:[#allocation3 + $0x10] sm:$0xf]
    %v227 = vld [vmem:[#allocation3 + $0x14] sm:$0xf]
    %v228 = vld [vmem:[#allocation3 + $0x18] sm:$0xf]
    %v229 = vld [vmem:[#allocation3 + $0x1c] sm:$0xf]
    %v230 = vld [vmem:[#allocation3 + $0x20] sm:$0xf]
    %v231 = vld [vmem:[#allocation3 + $0x24] sm:$0xf]
    %v232 = vld [vmem:[#allocation3 + $0x28] sm:$0xf]
    %v233 = vld [vmem:[#allocation3 + $0x2c] sm:$0xf]
    %v234 = vld [vmem:[#allocation3 + $0x30] sm:$0xf]
    %v235 = vld [vmem:[#allocation3 + $0x34] sm:$0xf]
    %v236 = vld [vmem:[#allocation3 + $0x38] sm:$0xf]
    %v237 = vld [vmem:[#allocation3 + $0x3c] sm:$0xf]
    %v254 = vunpack.c.l.b16 %v222
    %v255 = vunpack.c.l.b16 %v223
    %v256 = vunpack.c.l.b16 %v224
    %v257 = vunpack.c.l.b16 %v225
    %v258 = vunpack.c.l.b16 %v226
    %v259 = vunpack.c.l.b16 %v227
    %v260 = vunpack.c.l.b16 %v228
    %v261 = vunpack.c.l.b16 %v229
    %v262 = vunpack.c.l.b16 %v230
    %v263 = vunpack.c.l.b16 %v231
    %v264 = vunpack.c.l.b16 %v232
    %v265 = vunpack.c.l.b16 %v233
    %v266 = vunpack.c.l.b16 %v234
    %v267 = vunpack.c.l.b16 %v235
    %v268 = vunpack.c.l.b16 %v236
    %v269 = vunpack.c.l.b16 %v237
    %v270 = vpack.c.b16 %v255, %v254
    %v271 = vpack.c.b16 %v257, %v256
    %v272 = vpack.c.b16 %v259, %v258
    %v273 = vpack.c.b16 %v261, %v260
    %v274 = vpack.c.b16 %v263, %v262
    %v275 = vpack.c.b16 %v265, %v264
    %v276 = vpack.c.b16 %v267, %v266
    %v277 = vpack.c.b16 %v269, %v268
    %286 = vmatprep.subr.bf16.mxu0 0
    %287 = vmatpush1.bf16.msra.mxu0 %v270
    %288 = vmatprep.subr.bf16.mxu0 0
    %289 = vmatpush1.bf16.msra.mxu0 %v271
    %290 = vmatprep.subr.bf16.mxu0 0
    %291 = vmatpush1.bf16.msra.mxu0 %v272
    %292 = vmatprep.subr.bf16.mxu0 0
    %293 = vmatpush1.bf16.msra.mxu0 %v273
    %294 = vmatprep.subr.bf16.mxu0 0
    %295 = vmatpush1.bf16.msra.mxu0 %v274
    %296 = vmatprep.subr.bf16.mxu0 0
    %297 = vmatpush1.bf16.msra.mxu0 %v275
    %298 = vmatprep.subr.bf16.mxu0 0
    %299 = vmatpush1.bf16.msra.mxu0 %v276
    %300 = vmatprep.subr.bf16.mxu0 0
    %301 = vmatpush1.bf16.msra.mxu0 %v277
    %302 = vmatprep.subr.bf16.mxu0 0
    %303 = vmatpush1.bf16.msra.mxu0 0
    %304 = vmatprep.subr.bf16.mxu0 0
    %305 = vmatpush1.bf16.msra.mxu0 0
    %306 = vmatprep.subr.bf16.mxu0 0
    %307 = vmatpush1.bf16.msra.mxu0 0
    %308 = vmatprep.subr.bf16.mxu0 0
    %309 = vmatpush1.bf16.msra.mxu0 0
    %310 = vmatprep.subr.bf16.mxu0 0
    %311 = vmatpush1.bf16.msra.mxu0 0
    %312 = vmatprep.subr.bf16.mxu0 0
    %313 = vmatpush1.bf16.msra.mxu0 0
    %314 = vmatprep.subr.bf16.mxu0 0
    %315 = vmatpush1.bf16.msra.mxu0 0
    %316 = vmatprep.subr.bf16.mxu0 0
    %317 = vmatpush1.bf16.msra.mxu0 0
    %318 = vmatprep.mubr.bf16.mxu0 0
    %319 = vmatmul.mubr.bf16.gmra.mrb[0].mxu0 %v198
    %v320 = vpop.f32.mrb[0].mxu0
    %v321 = vadd.f32 0.0, %v320
    %v322 = vpop.f32.mrb[0].mxu0
    %v323 = vpop.f32.mrb[0].mxu0
    %v324 = vadd.f32 0.0, %v323
    %v325 = vpop.f32.mrb[0].mxu0
    %326 = vmatprep.mubr.bf16.mxu0 0
    %327 = vmatmul.mubr.bf16.gmra.mrb[0].mxu0 %v199
    %v328 = vpop.f32.mrb[0].mxu0
    %v329 = vadd.f32 0.0, %v328
    %v330 = vpop.f32.mrb[0].mxu0
    %v331 = vpop.f32.mrb[0].mxu0
    %v332 = vadd.f32 0.0, %v331
    %v333 = vpop.f32.mrb[0].mxu0
    %334 = vmatprep.mubr.bf16.mxu0 0
    %335 = vmatmul.mubr.bf16.gmra.mrb[0].mxu0 %v200
    %v336 = vpop.f32.mrb[0].mxu0
    %v337 = vadd.f32 0.0, %v336
    %v338 = vpop.f32.mrb[0].mxu0
    %v339 = vpop.f32.mrb[0].mxu0
    %v340 = vadd.f32 0.0, %v339
    %v341 = vpop.f32.mrb[0].mxu0
    %342 = vmatprep.mubr.bf16.mxu0 0
    %343 = vmatmul.mubr.bf16.gmra.mrb[0].mxu0 %v201
    %v344 = vpop.f32.mrb[0].mxu0
    %v345 = vadd.f32 0.0, %v344
    %v346 = vpop.f32.mrb[0].mxu0
    %v347 = vpop.f32.mrb[0].mxu0
    %v348 = vadd.f32 0.0, %v347
    %v349 = vpop.f32.mrb[0].mxu0
    %350 = vmatprep.mubr.bf16.mxu0 0
    %351 = vmatmul.mubr.bf16.gmra.mrb[0].mxu0 %v202
    %v352 = vpop.f32.mrb[0].mxu0
    %v353 = vadd.f32 0.0, %v352
    %v354 = vpop.f32.mrb[0].mxu0
    %v355 = vpop.f32.mrb[0].mxu0
    %v356 = vadd.f32 0.0, %v355
    %v357 = vpop.f32.mrb[0].mxu0
    %358 = vmatprep.mubr.bf16.mxu0 0
    %359 = vmatmul.mubr.bf16.gmra.mrb[0].mxu0 %v203
    %v360 = vpop.f32.mrb[0].mxu0
    %v361 = vadd.f32 0.0, %v360
    %v362 = vpop.f32.mrb[0].mxu0
    %v363 = vpop.f32.mrb[0].mxu0
    %v364 = vadd.f32 0.0, %v363
    %v365 = vpop.f32.mrb[0].mxu0
    %366 = vmatprep.mubr.bf16.mxu0 0
    %367 = vmatmul.mubr.bf16.gmra.mrb[0].mxu0 %v204
    %v368 = vpop.f32.mrb[0].mxu0
    %v369 = vadd.f32 0.0, %v368
    %v370 = vpop.f32.mrb[0].mxu0
    %v371 = vpop.f32.mrb[0].mxu0
    %v372 = vadd.f32 0.0, %v371
    %v373 = vpop.f32.mrb[0].mxu0
    %374 = vmatprep.mubr.bf16.mxu0 0
    %375 = vmatmul.mubr.bf16.gmra.mrb[0].mxu0 %v205
    %v376 = vpop.f32.mrb[0].mxu0
    %v377 = vadd.f32 0.0, %v376
    %v378 = vpop.f32.mrb[0].mxu0
    %v379 = vpop.f32.mrb[0].mxu0
    %v380 = vadd.f32 0.0, %v379
    %v381 = vpop.f32.mrb[0].mxu0
    %382 = vdwg.mxu0
    %v383 = vadd.f32 %v206, %v321
    %v384 = vadd.f32 %v207, %v324
    %v385 = vadd.f32 %v208, %v329
    %v386 = vadd.f32 %v209, %v332
    %v387 = vadd.f32 %v210, %v337
    %v388 = vadd.f32 %v211, %v340
    %v389 = vadd.f32 %v212, %v345
    %v390 = vadd.f32 %v213, %v348
    %v391 = vadd.f32 %v214, %v353
    %v392 = vadd.f32 %v215, %v356
    %v393 = vadd.f32 %v216, %v361
    %v394 = vadd.f32 %v217, %v364
    %v395 = vadd.f32 %v218, %v369
    %v396 = vadd.f32 %v219, %v372
    %v397 = vadd.f32 %v220, %v377
    %v398 = vadd.f32 %v221, %v380
    %399 = vst [vmem:[#allocation2] sm:$0xff] %v383
    %400 = vst [vmem:[#allocation2 + $0x8] sm:$0xff] %v384
    %401 = vst [vmem:[#allocation2 + $0x10] sm:$0xff] %v385
    %402 = vst [vmem:[#allocation2 + $0x18] sm:$0xff] %v386
    %403 = vst [vmem:[#allocation2 + $0x20] sm:$0xff] %v387
    %404 = vst [vmem:[#allocation2 + $0x28] sm:$0xff] %v388
    %405 = vst [vmem:[#allocation2 + $0x30] sm:$0xff] %v389
    %406 = vst [vmem:[#allocation2 + $0x38] sm:$0xff] %v390
    %407 = vst [vmem:[#allocation2 + $0x40] sm:$0xff] %v391
    %408 = vst [vmem:[#allocation2 + $0x48] sm:$0xff] %v392
    %409 = vst [vmem:[#allocation2 + $0x50] sm:$0xff] %v393
    %410 = vst [vmem:[#allocation2 + $0x58] sm:$0xff] %v394
    %411 = vst [vmem:[#allocation2 + $0x60] sm:$0xff] %v395
    %412 = vst [vmem:[#allocation2 + $0x68] sm:$0xff] %v396
    %413 = vst [vmem:[#allocation2 + $0x70] sm:$0xff] %v397
    %414 = vst [vmem:[#allocation2 + $0x78] sm:$0xff] %v398
    // Predicated region
    $region86: #{premodel_forward.4} parent=1 // pred_check
      %p415 = pneg %p174
    $region87: #{premodel_forward.4} parent=1 // pred_check_branch
      %417 = sbr.rel (%p415) target = $region89
    $region88: #{premodel_forward.4} parent=1 // pred_region
      %v418 = vld [vmem:[#allocation2] sm:$0xff]
      %v419 = vld [vmem:[#allocation2 + $0x8] sm:$0xff]
      %v420 = vld [vmem:[#allocation2 + $0x10] sm:$0xff]
      %v421 = vld [vmem:[#allocation2 + $0x18] sm:$0xff]
      %v422 = vld [vmem:[#allocation2 + $0x20] sm:$0xff]
      %v423 = vld [vmem:[#allocation2 + $0x28] sm:$0xff]
      %v424 = vld [vmem:[#allocation2 + $0x30] sm:$0xff]
      %v425 = vld [vmem:[#allocation2 + $0x38] sm:$0xff]
      %v426 = vld [vmem:[#allocation2 + $0x40] sm:$0xff]
      %v427 = vld [vmem:[#allocation2 + $0x48] sm:$0xff]
      %v428 = vld [vmem:[#allocation2 + $0x50] sm:$0xff]
      %v429 = vld [vmem:[#allocation2 + $0x58] sm:$0xff]
      %v430 = vld [vmem:[#allocation2 + $0x60] sm:$0xff]
      %v431 = vld [vmem:[#allocation2 + $0x68] sm:$0xff]
      %v432 = vld [vmem:[#allocation2 + $0x70] sm:$0xff]
      %v433 = vld [vmem:[#allocation2 + $0x78] sm:$0xff]
      %v434 = vld [vmem:[#allocation9] sm:$0xff]
      %v435 = vld [vmem:[#allocation9 + $0x8] sm:$0xff]
      %v436 = vld [vmem:[#allocation9 + $0x10] sm:$0xff]
      %v437 = vld [vmem:[#allocation9 + $0x18] sm:$0xff]
      %v438 = vld [vmem:[#allocation9 + $0x20] sm:$0xff]
      %v439 = vld [vmem:[#allocation9 + $0x28] sm:$0xff]
      %v440 = vld [vmem:[#allocation9 + $0x30] sm:$0xff]
      %v441 = vld [vmem:[#allocation9 + $0x38] sm:$0xff]
      %v442 = vld [vmem:[#allocation9 + $0x40] sm:$0xff]
      %v443 = vld [vmem:[#allocation9 + $0x48] sm:$0xff]
      %v444 = vld [vmem:[#allocation9 + $0x50] sm:$0xff]
      %v445 = vld [vmem:[#allocation9 + $0x58] sm:$0xff]
      %v446 = vld [vmem:[#allocation9 + $0x60] sm:$0xff]
      %v447 = vld [vmem:[#allocation9 + $0x68] sm:$0xff]
      %v448 = vld [vmem:[#allocation9 + $0x70] sm:$0xff]
      %v449 = vld [vmem:[#allocation9 + $0x78] sm:$0xff]
      %451 = vset.pattern.permute.xlu0 0
      %452 = vperm.xlu0 %451, %v434
      %v453 = vpop.permute.xlu0 %452
      %456 = vset.pattern.permute.xlu0 0
      %457 = vperm.xlu0 %456, %v435
      %v458 = vpop.permute.xlu0 %457
      %461 = vset.pattern.permute.xlu0 0
      %462 = vperm.xlu0 %461, %v436
      %v463 = vpop.permute.xlu0 %462
      %466 = vset.pattern.permute.xlu0 0
      %467 = vperm.xlu0 %466, %v437
      %v468 = vpop.permute.xlu0 %467
      %471 = vset.pattern.permute.xlu0 0
      %472 = vperm.xlu0 %471, %v438
      %v473 = vpop.permute.xlu0 %472
      %476 = vset.pattern.permute.xlu0 0
      %477 = vperm.xlu0 %476, %v439
      %v478 = vpop.permute.xlu0 %477
      %481 = vset.pattern.permute.xlu0 0
      %482 = vperm.xlu0 %481, %v440
      %v483 = vpop.permute.xlu0 %482
      %486 = vset.pattern.permute.xlu0 0
      %487 = vperm.xlu0 %486, %v441
      %v488 = vpop.permute.xlu0 %487
      %491 = vset.pattern.permute.xlu0 0
      %492 = vperm.xlu0 %491, %v442
      %v493 = vpop.permute.xlu0 %492
      %496 = vset.pattern.permute.xlu0 0
      %497 = vperm.xlu0 %496, %v443
      %v498 = vpop.permute.xlu0 %497
      %501 = vset.pattern.permute.xlu0 0
      %502 = vperm.xlu0 %501, %v444
      %v503 = vpop.permute.xlu0 %502
      %506 = vset.pattern.permute.xlu0 0
      %507 = vperm.xlu0 %506, %v445
      %v508 = vpop.permute.xlu0 %507
      %511 = vset.pattern.permute.xlu0 0
      %512 = vperm.xlu0 %511, %v446
      %v513 = vpop.permute.xlu0 %512
      %516 = vset.pattern.permute.xlu0 0
      %517 = vperm.xlu0 %516, %v447
      %v518 = vpop.permute.xlu0 %517
      %521 = vset.pattern.permute.xlu0 0
      %522 = vperm.xlu0 %521, %v448
      %v523 = vpop.permute.xlu0 %522
      %526 = vset.pattern.permute.xlu0 0
      %527 = vperm.xlu0 %526, %v449
      %v528 = vpop.permute.xlu0 %527
      %v530 = vmul.f32 %v418, %v453
      %v531 = vmul.f32 %v419, %v458
      %v532 = vmul.f32 %v420, %v463
      %v533 = vmul.f32 %v421, %v468
      %v534 = vmul.f32 %v422, %v473
      %v535 = vmul.f32 %v423, %v478
      %v536 = vmul.f32 %v424, %v483
      %v537 = vmul.f32 %v425, %v488
      %v538 = vmul.f32 %v426, %v493
      %v539 = vmul.f32 %v427, %v498
      %v540 = vmul.f32 %v428, %v503
      %v541 = vmul.f32 %v429, %v508
      %v542 = vmul.f32 %v430, %v513
      %v543 = vmul.f32 %v431, %v518
      %v544 = vmul.f32 %v432, %v523
      %v545 = vmul.f32 %v433, %v528
      %v546 = vpack.c.bf16 %v531, %v530
      %v547 = vpack.c.bf16 %v533, %v532
      %v548 = vpack.c.bf16 %v535, %v534
      %v549 = vpack.c.bf16 %v537, %v536
      %v550 = vpack.c.bf16 %v539, %v538
      %v551 = vpack.c.bf16 %v541, %v540
      %v552 = vpack.c.bf16 %v543, %v542
      %v553 = vpack.c.bf16 %v545, %v544
      %v554 = vld [vmem:[#allocation6] sm:$0xf]
      %v555 = vld [vmem:[#allocation6 + $0x4] sm:$0xf]
      %v556 = vld [vmem:[#allocation6 + $0x8] sm:$0xf]
      %v557 = vld [vmem:[#allocation6 + $0xc] sm:$0xf]
      %v558 = vld [vmem:[#allocation6 + $0x10] sm:$0xf]
      %v559 = vld [vmem:[#allocation6 + $0x14] sm:$0xf]
      %v560 = vld [vmem:[#allocation6 + $0x18] sm:$0xf]
      %v561 = vld [vmem:[#allocation6 + $0x1c] sm:$0xf]
      %v562 = vld [vmem:[#allocation6 + $0x20] sm:$0xf]
      %v563 = vld [vmem:[#allocation6 + $0x24] sm:$0xf]
      %v564 = vld [vmem:[#allocation6 + $0x28] sm:$0xf]
      %v565 = vld [vmem:[#allocation6 + $0x2c] sm:$0xf]
      %v566 = vld [vmem:[#allocation6 + $0x30] sm:$0xf]
      %v567 = vld [vmem:[#allocation6 + $0x34] sm:$0xf]
      %v568 = vld [vmem:[#allocation6 + $0x38] sm:$0xf]
      %v569 = vld [vmem:[#allocation6 + $0x3c] sm:$0xf]
      %v570 = vld [vmem:[#allocation14] sm:$0xf]
      %v571 = vld [vmem:[#allocation14 + $0x4] sm:$0xf]
      %v572 = vld [vmem:[#allocation14 + $0x8] sm:$0xf]
      %v573 = vld [vmem:[#allocation14 + $0xc] sm:$0xf]
      %v574 = vld [vmem:[#allocation14 + $0x10] sm:$0xf]
      %v575 = vld [vmem:[#allocation14 + $0x14] sm:$0xf]
      %v576 = vld [vmem:[#allocation14 + $0x18] sm:$0xf]
      %v577 = vld [vmem:[#allocation14 + $0x1c] sm:$0xf]
      %v578 = vld [vmem:[#allocation14 + $0x20] sm:$0xf]
      %v579 = vld [vmem:[#allocation14 + $0x24] sm:$0xf]
      %v580 = vld [vmem:[#allocation14 + $0x28] sm:$0xf]
      %v581 = vld [vmem:[#allocation14 + $0x2c] sm:$0xf]
      %v582 = vld [vmem:[#allocation14 + $0x30] sm:$0xf]
      %v583 = vld [vmem:[#allocation14 + $0x34] sm:$0xf]
      %v584 = vld [vmem:[#allocation14 + $0x38] sm:$0xf]
      %v585 = vld [vmem:[#allocation14 + $0x3c] sm:$0xf]
      %v586 = vld [vmem:[#allocation15] sm:$0xf]
      %v587 = vld [vmem:[#allocation15 + $0x4] sm:$0xf]
      %v588 = vld [vmem:[#allocation15 + $0x8] sm:$0xf]
      %v589 = vld [vmem:[#allocation15 + $0xc] sm:$0xf]
      %v590 = vld [vmem:[#allocation15 + $0x10] sm:$0xf]
      %v591 = vld [vmem:[#allocation15 + $0x14] sm:$0xf]
      %v592 = vld [vmem:[#allocation15 + $0x18] sm:$0xf]
      %v593 = vld [vmem:[#allocation15 + $0x1c] sm:$0xf]
      %v594 = vld [vmem:[#allocation15 + $0x20] sm:$0xf]
      %v595 = vld [vmem:[#allocation15 + $0x24] sm:$0xf]
      %v596 = vld [vmem:[#allocation15 + $0x28] sm:$0xf]
      %v597 = vld [vmem:[#allocation15 + $0x2c] sm:$0xf]
      %v598 = vld [vmem:[#allocation15 + $0x30] sm:$0xf]
      %v599 = vld [vmem:[#allocation15 + $0x34] sm:$0xf]
      %v600 = vld [vmem:[#allocation15 + $0x38] sm:$0xf]
      %v601 = vld [vmem:[#allocation15 + $0x3c] sm:$0xf]
      %v618 = vunpack.c.l.b16 %v586
      %v619 = vunpack.c.l.b16 %v587
      %v620 = vunpack.c.l.b16 %v588
      %v621 = vunpack.c.l.b16 %v589
      %v622 = vunpack.c.l.b16 %v590
      %v623 = vunpack.c.l.b16 %v591
      %v624 = vunpack.c.l.b16 %v592
      %v625 = vunpack.c.l.b16 %v593
      %v626 = vunpack.c.l.b16 %v594
      %v627 = vunpack.c.l.b16 %v595
      %v628 = vunpack.c.l.b16 %v596
      %v629 = vunpack.c.l.b16 %v597
      %v630 = vunpack.c.l.b16 %v598
      %v631 = vunpack.c.l.b16 %v599
      %v632 = vunpack.c.l.b16 %v600
      %v633 = vunpack.c.l.b16 %v601
      %v634 = vpack.c.b16 %v619, %v618
      %v635 = vpack.c.b16 %v621, %v620
      %v636 = vpack.c.b16 %v623, %v622
      %v637 = vpack.c.b16 %v625, %v624
      %v638 = vpack.c.b16 %v627, %v626
      %v639 = vpack.c.b16 %v629, %v628
      %v640 = vpack.c.b16 %v631, %v630
      %v641 = vpack.c.b16 %v633, %v632
      %650 = vmatprep.subr.bf16.mxu0 0
      %651 = vmatpush1.bf16.msra.mxu0 %v634
      %652 = vmatprep.subr.bf16.mxu0 0
      %653 = vmatpush1.bf16.msra.mxu0 %v635
      %654 = vmatprep.subr.bf16.mxu0 0
      %655 = vmatpush1.bf16.msra.mxu0 %v636
      %656 = vmatprep.subr.bf16.mxu0 0
      %657 = vmatpush1.bf16.msra.mxu0 %v637
      %658 = vmatprep.subr.bf16.mxu0 0
      %659 = vmatpush1.bf16.msra.mxu0 %v638
      %660 = vmatprep.subr.bf16.mxu0 0
      %661 = vmatpush1.bf16.msra.mxu0 %v639
      %662 = vmatprep.subr.bf16.mxu0 0
      %663 = vmatpush1.bf16.msra.mxu0 %v640
      %664 = vmatprep.subr.bf16.mxu0 0
      %665 = vmatpush1.bf16.msra.mxu0 %v641
      %666 = vmatprep.subr.bf16.mxu0 0
      %667 = vmatpush1.bf16.msra.mxu0 0
      %668 = vmatprep.subr.bf16.mxu0 0
      %669 = vmatpush1.bf16.msra.mxu0 0
      %670 = vmatprep.subr.bf16.mxu0 0
      %671 = vmatpush1.bf16.msra.mxu0 0
      %672 = vmatprep.subr.bf16.mxu0 0
      %673 = vmatpush1.bf16.msra.mxu0 0
      %674 = vmatprep.subr.bf16.mxu0 0
      %675 = vmatpush1.bf16.msra.mxu0 0
      %676 = vmatprep.subr.bf16.mxu0 0
      %677 = vmatpush1.bf16.msra.mxu0 0
      %678 = vmatprep.subr.bf16.mxu0 0
      %679 = vmatpush1.bf16.msra.mxu0 0
      %680 = vmatprep.subr.bf16.mxu0 0
      %681 = vmatpush1.bf16.msra.mxu0 0
      %682 = vmatprep.mubr.bf16.mxu0 0
      %683 = vmatmul.mubr.bf16.gmra.mrb[0].mxu0 %v546
      %v684 = vpop.f32.mrb[0].mxu0
      %v685 = vadd.f32 0.0, %v684
      %v686 = vpop.f32.mrb[0].mxu0
      %v687 = vpop.f32.mrb[0].mxu0
      %v688 = vadd.f32 0.0, %v687
      %v689 = vpop.f32.mrb[0].mxu0
      %690 = vmatprep.mubr.bf16.mxu0 0
      %691 = vmatmul.mubr.bf16.gmra.mrb[0].mxu0 %v547
      %v692 = vpop.f32.mrb[0].mxu0
      %v693 = vadd.f32 0.0, %v692
      %v694 = vpop.f32.mrb[0].mxu0
      %v695 = vpop.f32.mrb[0].mxu0
      %v696 = vadd.f32 0.0, %v695
      %v697 = vpop.f32.mrb[0].mxu0
      %698 = vmatprep.mubr.bf16.mxu0 0
      %699 = vmatmul.mubr.bf16.gmra.mrb[0].mxu0 %v548
      %v700 = vpop.f32.mrb[0].mxu0
      %v701 = vadd.f32 0.0, %v700
      %v702 = vpop.f32.mrb[0].mxu0
      %v703 = vpop.f32.mrb[0].mxu0
      %v704 = vadd.f32 0.0, %v703
      %v705 = vpop.f32.mrb[0].mxu0
      %706 = vmatprep.mubr.bf16.mxu0 0
      %707 = vmatmul.mubr.bf16.gmra.mrb[0].mxu0 %v549
      %v708 = vpop.f32.mrb[0].mxu0
      %v709 = vadd.f32 0.0, %v708
      %v710 = vpop.f32.mrb[0].mxu0
      %v711 = vpop.f32.mrb[0].mxu0
      %v712 = vadd.f32 0.0, %v711
      %v713 = vpop.f32.mrb[0].mxu0
      %714 = vmatprep.mubr.bf16.mxu0 0
      %715 = vmatmul.mubr.bf16.gmra.mrb[0].mxu0 %v550
      %v716 = vpop.f32.mrb[0].mxu0
      %v717 = vadd.f32 0.0, %v716
      %v718 = vpop.f32.mrb[0].mxu0
      %v719 = vpop.f32.mrb[0].mxu0
      %v720 = vadd.f32 0.0, %v719
      %v721 = vpop.f32.mrb[0].mxu0
      %722 = vmatprep.mubr.bf16.mxu0 0
      %723 = vmatmul.mubr.bf16.gmra.mrb[0].mxu0 %v551
      %v724 = vpop.f32.mrb[0].mxu0
      %v725 = vadd.f32 0.0, %v724
      %v726 = vpop.f32.mrb[0].mxu0
      %v727 = vpop.f32.mrb[0].mxu0
      %v728 = vadd.f32 0.0, %v727
      %v729 = vpop.f32.mrb[0].mxu0
      %730 = vmatprep.mubr.bf16.mxu0 0
      %731 = vmatmul.mubr.bf16.gmra.mrb[0].mxu0 %v552
      %v732 = vpop.f32.mrb[0].mxu0
      %v733 = vadd.f32 0.0, %v732
      %v734 = vpop.f32.mrb[0].mxu0
      %v735 = vpop.f32.mrb[0].mxu0
      %v736 = vadd.f32 0.0, %v735
      %v737 = vpop.f32.mrb[0].mxu0
      %738 = vmatprep.mubr.bf16.mxu0 0
      %739 = vmatmul.mubr.bf16.gmra.mrb[0].mxu0 %v553
      %v740 = vpop.f32.mrb[0].mxu0
      %v741 = vadd.f32 0.0, %v740
      %v742 = vpop.f32.mrb[0].mxu0
      %v743 = vpop.f32.mrb[0].mxu0
      %v744 = vadd.f32 0.0, %v743
      %v745 = vpop.f32.mrb[0].mxu0
      %746 = vdwg.mxu0
      %v763 = vunpack.c.l.b16 %v554
      %v764 = vunpack.c.l.b16 %v555
      %v765 = vunpack.c.l.b16 %v556
      %v766 = vunpack.c.l.b16 %v557
      %v767 = vunpack.c.l.b16 %v558
      %v768 = vunpack.c.l.b16 %v559
      %v769 = vunpack.c.l.b16 %v560
      %v770 = vunpack.c.l.b16 %v561
      %v771 = vunpack.c.l.b16 %v562
      %v772 = vunpack.c.l.b16 %v563
      %v773 = vunpack.c.l.b16 %v564
      %v774 = vunpack.c.l.b16 %v565
      %v775 = vunpack.c.l.b16 %v566
      %v776 = vunpack.c.l.b16 %v567
      %v777 = vunpack.c.l.b16 %v568
      %v778 = vunpack.c.l.b16 %v569
      %v779 = vpack.c.b16 %v764, %v763
      %v780 = vpack.c.b16 %v766, %v765
      %v781 = vpack.c.b16 %v768, %v767
      %v782 = vpack.c.b16 %v770, %v769
      %v783 = vpack.c.b16 %v772, %v771
      %v784 = vpack.c.b16 %v774, %v773
      %v785 = vpack.c.b16 %v776, %v775
      %v786 = vpack.c.b16 %v778, %v777
      %v811 = vunpack.c.l.b16 %v570
      %v812 = vunpack.c.l.b16 %v571
      %v813 = vunpack.c.l.b16 %v572
      %v814 = vunpack.c.l.b16 %v573
      %v815 = vunpack.c.l.b16 %v574
      %v816 = vunpack.c.l.b16 %v575
      %v817 = vunpack.c.l.b16 %v576
      %v818 = vunpack.c.l.b16 %v577
      %v819 = vunpack.c.l.b16 %v578
      %v820 = vunpack.c.l.b16 %v579
      %v821 = vunpack.c.l.b16 %v580
      %v822 = vunpack.c.l.b16 %v581
      %v823 = vunpack.c.l.b16 %v582
      %v824 = vunpack.c.l.b16 %v583
      %v825 = vunpack.c.l.b16 %v584
      %v826 = vunpack.c.l.b16 %v585
      %v827 = vpack.c.b16 %v812, %v811
      %v828 = vpack.c.b16 %v814, %v813
      %v829 = vpack.c.b16 %v816, %v815
      %v830 = vpack.c.b16 %v818, %v817
      %v831 = vpack.c.b16 %v820, %v819
      %v832 = vpack.c.b16 %v822, %v821
      %v833 = vpack.c.b16 %v824, %v823
      %v834 = vpack.c.b16 %v826, %v825
      %843 = vmatprep.subr.bf16.mxu0 0
      %844 = vmatpush1.bf16.msra.mxu0 %v827
      %845 = vmatprep.subr.bf16.mxu0 0
      %846 = vmatpush1.bf16.msra.mxu0 %v828
      %847 = vmatprep.subr.bf16.mxu0 0
      %848 = vmatpush1.bf16.msra.mxu0 %v829
      %849 = vmatprep.subr.bf16.mxu0 0
      %850 = vmatpush1.bf16.msra.mxu0 %v830
      %851 = vmatprep.subr.bf16.mxu0 0
      %852 = vmatpush1.bf16.msra.mxu0 %v831
      %853 = vmatprep.subr.bf16.mxu0 0
      %854 = vmatpush1.bf16.msra.mxu0 %v832
      %855 = vmatprep.subr.bf16.mxu0 0
      %856 = vmatpush1.bf16.msra.mxu0 %v833
      %857 = vmatprep.subr.bf16.mxu0 0
      %858 = vmatpush1.bf16.msra.mxu0 %v834
      %859 = vmatprep.subr.bf16.mxu0 0
      %860 = vmatpush1.bf16.msra.mxu0 0
      %861 = vmatprep.subr.bf16.mxu0 0
      %862 = vmatpush1.bf16.msra.mxu0 0
      %863 = vmatprep.subr.bf16.mxu0 0
      %864 = vmatpush1.bf16.msra.mxu0 0
      %865 = vmatprep.subr.bf16.mxu0 0
      %866 = vmatpush1.bf16.msra.mxu0 0
      %867 = vmatprep.subr.bf16.mxu0 0
      %868 = vmatpush1.bf16.msra.mxu0 0
      %869 = vmatprep.subr.bf16.mxu0 0
      %870 = vmatpush1.bf16.msra.mxu0 0
      %871 = vmatprep.subr.bf16.mxu0 0
      %872 = vmatpush1.bf16.msra.mxu0 0
      %873 = vmatprep.subr.bf16.mxu0 0
      %874 = vmatpush1.bf16.msra.mxu0 0
      %875 = vmatprep.mubr.bf16.mxu0 0
      %876 = vmatmul.mubr.bf16.gmra.mrb[0].mxu0 %v779
      %v877 = vpop.f32.mrb[0].mxu0
      %v878 = vadd.f32 %v685, %v877
      %v879 = vpop.f32.mrb[0].mxu0
      %v880 = vpop.f32.mrb[0].mxu0
      %v881 = vadd.f32 %v688, %v880
      %v882 = vpop.f32.mrb[0].mxu0
      %883 = vmatprep.mubr.bf16.mxu0 0
      %884 = vmatmul.mubr.bf16.gmra.mrb[0].mxu0 %v780
      %v885 = vpop.f32.mrb[0].mxu0
      %v886 = vadd.f32 %v693, %v885
      %v887 = vpop.f32.mrb[0].mxu0
      %v888 = vpop.f32.mrb[0].mxu0
      %v889 = vadd.f32 %v696, %v888
      %v890 = vpop.f32.mrb[0].mxu0
      %891 = vmatprep.mubr.bf16.mxu0 0
      %892 = vmatmul.mubr.bf16.gmra.mrb[0].mxu0 %v781
      %v893 = vpop.f32.mrb[0].mxu0
      %v894 = vadd.f32 %v701, %v893
      %v895 = vpop.f32.mrb[0].mxu0
      %v896 = vpop.f32.mrb[0].mxu0
      %v897 = vadd.f32 %v704, %v896
      %v898 = vpop.f32.mrb[0].mxu0
      %899 = vmatprep.mubr.bf16.mxu0 0
      %900 = vmatmul.mubr.bf16.gmra.mrb[0].mxu0 %v782
      %v901 = vpop.f32.mrb[0].mxu0
      %v902 = vadd.f32 %v709, %v901
      %v903 = vpop.f32.mrb[0].mxu0
      %v904 = vpop.f32.mrb[0].mxu0
      %v905 = vadd.f32 %v712, %v904
      %v906 = vpop.f32.mrb[0].mxu0
      %907 = vmatprep.mubr.bf16.mxu0 0
      %908 = vmatmul.mubr.bf16.gmra.mrb[0].mxu0 %v783
      %v909 = vpop.f32.mrb[0].mxu0
      %v910 = vadd.f32 %v717, %v909
      %v911 = vpop.f32.mrb[0].mxu0
      %v912 = vpop.f32.mrb[0].mxu0
      %v913 = vadd.f32 %v720, %v912
      %v914 = vpop.f32.mrb[0].mxu0
      %915 = vmatprep.mubr.bf16.mxu0 0
      %916 = vmatmul.mubr.bf16.gmra.mrb[0].mxu0 %v784
      %v917 = vpop.f32.mrb[0].mxu0
      %v918 = vadd.f32 %v725, %v917
      %v919 = vpop.f32.mrb[0].mxu0
      %v920 = vpop.f32.mrb[0].mxu0
      %v921 = vadd.f32 %v728, %v920
      %v922 = vpop.f32.mrb[0].mxu0
      %923 = vmatprep.mubr.bf16.mxu0 0
      %924 = vmatmul.mubr.bf16.gmra.mrb[0].mxu0 %v785
      %v925 = vpop.f32.mrb[0].mxu0
      %v926 = vadd.f32 %v733, %v925
      %v927 = vpop.f32.mrb[0].mxu0
      %v928 = vpop.f32.mrb[0].mxu0
      %v929 = vadd.f32 %v736, %v928
      %v930 = vpop.f32.mrb[0].mxu0
      %931 = vmatprep.mubr.bf16.mxu0 0
      %932 = vmatmul.mubr.bf16.gmra.mrb[0].mxu0 %v786
      %v933 = vpop.f32.mrb[0].mxu0
      %v934 = vadd.f32 %v741, %v933
      %v935 = vpop.f32.mrb[0].mxu0
      %v936 = vpop.f32.mrb[0].mxu0
      %v937 = vadd.f32 %v744, %v936
      %v938 = vpop.f32.mrb[0].mxu0
      %939 = vdwg.mxu0
      %v940 = vld [vmem:[#allocation17] sm:$0x1]
      %v942 = vlaneseq
      %v943 = vshrl.u32 %v942, 7
      %v944 = vsub.s32 0, %v943
      %v945 = vrot.slane %v940, %v944
      %v947 = vadd.f32 %v878, %v945
      %v948 = vadd.f32 %v881, %v945
      %v949 = vadd.f32 %v886, %v945
      %v950 = vadd.f32 %v889, %v945
      %v951 = vadd.f32 %v894, %v945
      %v952 = vadd.f32 %v897, %v945
      %v953 = vadd.f32 %v902, %v945
      %v954 = vadd.f32 %v905, %v945
      %v955 = vadd.f32 %v910, %v945
      %v956 = vadd.f32 %v913, %v945
      %v957 = vadd.f32 %v918, %v945
      %v958 = vadd.f32 %v921, %v945
      %v959 = vadd.f32 %v926, %v945
      %v960 = vadd.f32 %v929, %v945
      %v961 = vadd.f32 %v934, %v945
      %v962 = vadd.f32 %v937, %v945
      %v963 = vmax.f32 %v947, 0.0
      %v964 = vmax.f32 %v948, 0.0
      %v965 = vmax.f32 %v949, 0.0
      %v966 = vmax.f32 %v950, 0.0
      %v967 = vmax.f32 %v951, 0.0
      %v968 = vmax.f32 %v952, 0.0
      %v969 = vmax.f32 %v953, 0.0
      %v970 = vmax.f32 %v954, 0.0
      %v971 = vmax.f32 %v955, 0.0
      %v972 = vmax.f32 %v956, 0.0
      %v973 = vmax.f32 %v957, 0.0
      %v974 = vmax.f32 %v958, 0.0
      %v975 = vmax.f32 %v959, 0.0
      %v976 = vmax.f32 %v960, 0.0
      %v977 = vmax.f32 %v961, 0.0
      %v978 = vmax.f32 %v962, 0.0
      %v979 = vld [vmem:[#allocation12] sm:$0xff]
      %v980 = vld [vmem:[#allocation12 + $0x8] sm:$0xff]
      %v981 = vld [vmem:[#allocation12 + $0x10] sm:$0xff]
      %v982 = vld [vmem:[#allocation12 + $0x18] sm:$0xff]
      %v983 = vld [vmem:[#allocation12 + $0x20] sm:$0xff]
      %v984 = vld [vmem:[#allocation12 + $0x28] sm:$0xff]
      %v985 = vld [vmem:[#allocation12 + $0x30] sm:$0xff]
      %v986 = vld [vmem:[#allocation12 + $0x38] sm:$0xff]
      %v987 = vld [vmem:[#allocation12 + $0x40] sm:$0xff]
      %v988 = vld [vmem:[#allocation12 + $0x48] sm:$0xff]
      %v989 = vld [vmem:[#allocation12 + $0x50] sm:$0xff]
      %v990 = vld [vmem:[#allocation12 + $0x58] sm:$0xff]
      %v991 = vld [vmem:[#allocation12 + $0x60] sm:$0xff]
      %v992 = vld [vmem:[#allocation12 + $0x68] sm:$0xff]
      %v993 = vld [vmem:[#allocation12 + $0x70] sm:$0xff]
      %v994 = vld [vmem:[#allocation12 + $0x78] sm:$0xff]
      %996 = vset.pattern.permute.xlu0 0
      %997 = vperm.xlu0 %996, %v979
      %v998 = vpop.permute.xlu0 %997
      %1001 = vset.pattern.permute.xlu0 0
      %1002 = vperm.xlu0 %1001, %v980
      %v1003 = vpop.permute.xlu0 %1002
      %1006 = vset.pattern.permute.xlu0 0
      %1007 = vperm.xlu0 %1006, %v981
      %v1008 = vpop.permute.xlu0 %1007
      %1011 = vset.pattern.permute.xlu0 0
      %1012 = vperm.xlu0 %1011, %v982
      %v1013 = vpop.permute.xlu0 %1012
      %1016 = vset.pattern.permute.xlu0 0
      %1017 = vperm.xlu0 %1016, %v983
      %v1018 = vpop.permute.xlu0 %1017
      %1021 = vset.pattern.permute.xlu0 0
      %1022 = vperm.xlu0 %1021, %v984
      %v1023 = vpop.permute.xlu0 %1022
      %1026 = vset.pattern.permute.xlu0 0
      %1027 = vperm.xlu0 %1026, %v985
      %v1028 = vpop.permute.xlu0 %1027
      %1031 = vset.pattern.permute.xlu0 0
      %1032 = vperm.xlu0 %1031, %v986
      %v1033 = vpop.permute.xlu0 %1032
      %1036 = vset.pattern.permute.xlu0 0
      %1037 = vperm.xlu0 %1036, %v987
      %v1038 = vpop.permute.xlu0 %1037
      %1041 = vset.pattern.permute.xlu0 0
      %1042 = vperm.xlu0 %1041, %v988
      %v1043 = vpop.permute.xlu0 %1042
      %1046 = vset.pattern.permute.xlu0 0
      %1047 = vperm.xlu0 %1046, %v989
      %v1048 = vpop.permute.xlu0 %1047
      %1051 = vset.pattern.permute.xlu0 0
      %1052 = vperm.xlu0 %1051, %v990
      %v1053 = vpop.permute.xlu0 %1052
      %1056 = vset.pattern.permute.xlu0 0
      %1057 = vperm.xlu0 %1056, %v991
      %v1058 = vpop.permute.xlu0 %1057
      %1061 = vset.pattern.permute.xlu0 0
      %1062 = vperm.xlu0 %1061, %v992
      %v1063 = vpop.permute.xlu0 %1062
      %1066 = vset.pattern.permute.xlu0 0
      %1067 = vperm.xlu0 %1066, %v993
      %v1068 = vpop.permute.xlu0 %1067
      %1071 = vset.pattern.permute.xlu0 0
      %1072 = vperm.xlu0 %1071, %v994
      %v1073 = vpop.permute.xlu0 %1072
      %v1075 = vmul.f32 %v963, %v998
      %v1076 = vmul.f32 %v964, %v1003
      %v1077 = vmul.f32 %v965, %v1008
      %v1078 = vmul.f32 %v966, %v1013
      %v1079 = vmul.f32 %v967, %v1018
      %v1080 = vmul.f32 %v968, %v1023
      %v1081 = vmul.f32 %v969, %v1028
      %v1082 = vmul.f32 %v970, %v1033
      %v1083 = vmul.f32 %v971, %v1038
      %v1084 = vmul.f32 %v972, %v1043
      %v1085 = vmul.f32 %v973, %v1048
      %v1086 = vmul.f32 %v974, %v1053
      %v1087 = vmul.f32 %v975, %v1058
      %v1088 = vmul.f32 %v976, %v1063
      %v1089 = vmul.f32 %v977, %v1068
      %v1090 = vmul.f32 %v978, %v1073
      %v1091 = vadd.f32 %v1075, %v1076
      %v1092 = vadd.f32 %v1091, %v1077
      %v1093 = vadd.f32 %v1092, %v1078
      %v1094 = vadd.f32 %v1093, %v1079
      %v1095 = vadd.f32 %v1094, %v1080
      %v1096 = vadd.f32 %v1095, %v1081
      %v1097 = vadd.f32 %v1096, %v1082
      %v1098 = vadd.f32 %v1097, %v1083
      %v1099 = vadd.f32 %v1098, %v1084
      %v1100 = vadd.f32 %v1099, %v1085
      %v1101 = vadd.f32 %v1100, %v1086
      %v1102 = vadd.f32 %v1101, %v1087
      %v1103 = vadd.f32 %v1102, %v1088
      %v1104 = vadd.f32 %v1103, %v1089
      %v1105 = vadd.f32 %v1104, %v1090
      %v1106 = vrot.slane %v1105, 4
      %v1107 = vadd.f32 %v1105, %v1106
      %v1108 = vrot.slane %v1107, 2
      %v1109 = vadd.f32 %v1107, %v1108
      %v1110 = vrot.slane %v1109, 1
      %v1111 = vadd.f32 %v1109, %v1110
      %v1112 = vlaneseq
      %v1113 = vshrl.u32 %v1112, 7
      %vm1114 = vcmp.eq.s32.totalorder %v1113, 0
      %v1115 = vsel %vm1114, %v1111, 0.0
      %1116 = vst [vmem:[#allocation21] sm:$0xff] %v1115
      %v1117 = vpack.c.bf16 %v964, %v963
      %v1118 = vpack.c.bf16 %v966, %v965
      %v1119 = vpack.c.bf16 %v968, %v967
      %v1120 = vpack.c.bf16 %v970, %v969
      %v1121 = vpack.c.bf16 %v972, %v971
      %v1122 = vpack.c.bf16 %v974, %v973
      %v1123 = vpack.c.bf16 %v976, %v975
      %v1124 = vpack.c.bf16 %v978, %v977
      %v1125 = vld [vmem:[#allocation18] sm:$0xf]
      %v1126 = vld [vmem:[#allocation18 + $0x4] sm:$0xf]
      %v1127 = vld [vmem:[#allocation18 + $0x8] sm:$0xf]
      %v1128 = vld [vmem:[#allocation18 + $0xc] sm:$0xf]
      %v1129 = vld [vmem:[#allocation18 + $0x10] sm:$0xf]
      %v1130 = vld [vmem:[#allocation18 + $0x14] sm:$0xf]
      %v1131 = vld [vmem:[#allocation18 + $0x18] sm:$0xf]
      %v1132 = vld [vmem:[#allocation18 + $0x1c] sm:$0xf]
      %v1133 = vld [vmem:[#allocation18 + $0x20] sm:$0xf]
      %v1134 = vld [vmem:[#allocation18 + $0x24] sm:$0xf]
      %v1135 = vld [vmem:[#allocation18 + $0x28] sm:$0xf]
      %v1136 = vld [vmem:[#allocation18 + $0x2c] sm:$0xf]
      %v1137 = vld [vmem:[#allocation18 + $0x30] sm:$0xf]
      %v1138 = vld [vmem:[#allocation18 + $0x34] sm:$0xf]
      %v1139 = vld [vmem:[#allocation18 + $0x38] sm:$0xf]
      %v1140 = vld [vmem:[#allocation18 + $0x3c] sm:$0xf]
      %v1157 = vunpack.c.l.b16 %v1125
      %v1158 = vunpack.c.l.b16 %v1126
      %v1159 = vunpack.c.l.b16 %v1127
      %v1160 = vunpack.c.l.b16 %v1128
      %v1161 = vunpack.c.l.b16 %v1129
      %v1162 = vunpack.c.l.b16 %v1130
      %v1163 = vunpack.c.l.b16 %v1131
      %v1164 = vunpack.c.l.b16 %v1132
      %v1165 = vunpack.c.l.b16 %v1133
      %v1166 = vunpack.c.l.b16 %v1134
      %v1167 = vunpack.c.l.b16 %v1135
      %v1168 = vunpack.c.l.b16 %v1136
      %v1169 = vunpack.c.l.b16 %v1137
      %v1170 = vunpack.c.l.b16 %v1138
      %v1171 = vunpack.c.l.b16 %v1139
      %v1172 = vunpack.c.l.b16 %v1140
      %v1173 = vpack.c.b16 %v1158, %v1157
      %v1174 = vpack.c.b16 %v1160, %v1159
      %v1175 = vpack.c.b16 %v1162, %v1161
      %v1176 = vpack.c.b16 %v1164, %v1163
      %v1177 = vpack.c.b16 %v1166, %v1165
      %v1178 = vpack.c.b16 %v1168, %v1167
      %v1179 = vpack.c.b16 %v1170, %v1169
      %v1180 = vpack.c.b16 %v1172, %v1171
      %1189 = vmatprep.subr.bf16.mxu0 0
      %1190 = vmatpush1.bf16.msra.mxu0 %v1173
      %1191 = vmatprep.subr.bf16.mxu0 0
      %1192 = vmatpush1.bf16.msra.mxu0 %v1174
      %1193 = vmatprep.subr.bf16.mxu0 0
      %1194 = vmatpush1.bf16.msra.mxu0 %v1175
      %1195 = vmatprep.subr.bf16.mxu0 0
      %1196 = vmatpush1.bf16.msra.mxu0 %v1176
      %1197 = vmatprep.subr.bf16.mxu0 0
      %1198 = vmatpush1.bf16.msra.mxu0 %v1177
      %1199 = vmatprep.subr.bf16.mxu0 0
      %1200 = vmatpush1.bf16.msra.mxu0 %v1178
      %1201 = vmatprep.subr.bf16.mxu0 0
      %1202 = vmatpush1.bf16.msra.mxu0 %v1179
      %1203 = vmatprep.subr.bf16.mxu0 0
      %1204 = vmatpush1.bf16.msra.mxu0 %v1180
      %1205 = vmatprep.subr.bf16.mxu0 0
      %1206 = vmatpush1.bf16.msra.mxu0 0
      %1207 = vmatprep.subr.bf16.mxu0 0
      %1208 = vmatpush1.bf16.msra.mxu0 0
      %1209 = vmatprep.subr.bf16.mxu0 0
      %1210 = vmatpush1.bf16.msra.mxu0 0
      %1211 = vmatprep.subr.bf16.mxu0 0
      %1212 = vmatpush1.bf16.msra.mxu0 0
      %1213 = vmatprep.subr.bf16.mxu0 0
      %1214 = vmatpush1.bf16.msra.mxu0 0
      %1215 = vmatprep.subr.bf16.mxu0 0
      %1216 = vmatpush1.bf16.msra.mxu0 0
      %1217 = vmatprep.subr.bf16.mxu0 0
      %1218 = vmatpush1.bf16.msra.mxu0 0
      %1219 = vmatprep.subr.bf16.mxu0 0
      %1220 = vmatpush1.bf16.msra.mxu0 0
      %1221 = vmatprep.mubr.bf16.mxu0 0
      %1222 = vmatmul.mubr.bf16.gmra.mrb[0].mxu0 %v1117
      %v1223 = vpop.f32.mrb[0].mxu0
      %v1224 = vadd.f32 0.0, %v1223
      %v1225 = vpop.f32.mrb[0].mxu0
      %v1226 = vpop.f32.mrb[0].mxu0
      %v1227 = vadd.f32 0.0, %v1226
      %v1228 = vpop.f32.mrb[0].mxu0
      %1229 = vmatprep.mubr.bf16.mxu0 0
      %1230 = vmatmul.mubr.bf16.gmra.mrb[0].mxu0 %v1118
      %v1231 = vpop.f32.mrb[0].mxu0
      %v1232 = vadd.f32 0.0, %v1231
      %v1233 = vpop.f32.mrb[0].mxu0
      %v1234 = vpop.f32.mrb[0].mxu0
      %v1235 = vadd.f32 0.0, %v1234
      %v1236 = vpop.f32.mrb[0].mxu0
      %1237 = vmatprep.mubr.bf16.mxu0 0
      %1238 = vmatmul.mubr.bf16.gmra.mrb[0].mxu0 %v1119
      %v1239 = vpop.f32.mrb[0].mxu0
      %v1240 = vadd.f32 0.0, %v1239
      %v1241 = vpop.f32.mrb[0].mxu0
      %v1242 = vpop.f32.mrb[0].mxu0
      %v1243 = vadd.f32 0.0, %v1242
      %v1244 = vpop.f32.mrb[0].mxu0
      %1245 = vmatprep.mubr.bf16.mxu0 0
      %1246 = vmatmul.mubr.bf16.gmra.mrb[0].mxu0 %v1120
      %v1247 = vpop.f32.mrb[0].mxu0
      %v1248 = vadd.f32 0.0, %v1247
      %v1249 = vpop.f32.mrb[0].mxu0
      %v1250 = vpop.f32.mrb[0].mxu0
      %v1251 = vadd.f32 0.0, %v1250
      %v1252 = vpop.f32.mrb[0].mxu0
      %1253 = vmatprep.mubr.bf16.mxu0 0
      %1254 = vmatmul.mubr.bf16.gmra.mrb[0].mxu0 %v1121
      %v1255 = vpop.f32.mrb[0].mxu0
      %v1256 = vadd.f32 0.0, %v1255
      %v1257 = vpop.f32.mrb[0].mxu0
      %v1258 = vpop.f32.mrb[0].mxu0
      %v1259 = vadd.f32 0.0, %v1258
      %v1260 = vpop.f32.mrb[0].mxu0
      %1261 = vmatprep.mubr.bf16.mxu0 0
      %1262 = vmatmul.mubr.bf16.gmra.mrb[0].mxu0 %v1122
      %v1263 = vpop.f32.mrb[0].mxu0
      %v1264 = vadd.f32 0.0, %v1263
      %v1265 = vpop.f32.mrb[0].mxu0
      %v1266 = vpop.f32.mrb[0].mxu0
      %v1267 = vadd.f32 0.0, %v1266
      %v1268 = vpop.f32.mrb[0].mxu0
      %1269 = vmatprep.mubr.bf16.mxu0 0
      %1270 = vmatmul.mubr.bf16.gmra.mrb[0].mxu0 %v1123
      %v1271 = vpop.f32.mrb[0].mxu0
      %v1272 = vadd.f32 0.0, %v1271
      %v1273 = vpop.f32.mrb[0].mxu0
      %v1274 = vpop.f32.mrb[0].mxu0
      %v1275 = vadd.f32 0.0, %v1274
      %v1276 = vpop.f32.mrb[0].mxu0
      %1277 = vmatprep.mubr.bf16.mxu0 0
      %1278 = vmatmul.mubr.bf16.gmra.mrb[0].mxu0 %v1124
      %v1279 = vpop.f32.mrb[0].mxu0
      %v1280 = vadd.f32 0.0, %v1279
      %v1281 = vpop.f32.mrb[0].mxu0
      %v1282 = vpop.f32.mrb[0].mxu0
      %v1283 = vadd.f32 0.0, %v1282
      %v1284 = vpop.f32.mrb[0].mxu0
      %1285 = vdwg.mxu0
      %v1286 = vld [vmem:[#allocation11] sm:$0xff]
      %v1287 = vld [vmem:[#allocation11 + $0x8] sm:$0xff]
      %v1288 = vld [vmem:[#allocation11 + $0x10] sm:$0xff]
      %v1289 = vld [vmem:[#allocation11 + $0x18] sm:$0xff]
      %v1290 = vld [vmem:[#allocation11 + $0x20] sm:$0xff]
      %v1291 = vld [vmem:[#allocation11 + $0x28] sm:$0xff]
      %v1292 = vld [vmem:[#allocation11 + $0x30] sm:$0xff]
      %v1293 = vld [vmem:[#allocation11 + $0x38] sm:$0xff]
      %v1294 = vld [vmem:[#allocation11 + $0x40] sm:$0xff]
      %v1295 = vld [vmem:[#allocation11 + $0x48] sm:$0xff]
      %v1296 = vld [vmem:[#allocation11 + $0x50] sm:$0xff]
      %v1297 = vld [vmem:[#allocation11 + $0x58] sm:$0xff]
      %v1298 = vld [vmem:[#allocation11 + $0x60] sm:$0xff]
      %v1299 = vld [vmem:[#allocation11 + $0x68] sm:$0xff]
      %v1300 = vld [vmem:[#allocation11 + $0x70] sm:$0xff]
      %v1301 = vld [vmem:[#allocation11 + $0x78] sm:$0xff]
      %1303 = vset.pattern.permute.xlu0 0
      %1304 = vperm.xlu0 %1303, %v1286
      %v1305 = vpop.permute.xlu0 %1304
      %1308 = vset.pattern.permute.xlu0 0
      %1309 = vperm.xlu0 %1308, %v1287
      %v1310 = vpop.permute.xlu0 %1309
      %1313 = vset.pattern.permute.xlu0 0
      %1314 = vperm.xlu0 %1313, %v1288
      %v1315 = vpop.permute.xlu0 %1314
      %1318 = vset.pattern.permute.xlu0 0
      %1319 = vperm.xlu0 %1318, %v1289
      %v1320 = vpop.permute.xlu0 %1319
      %1323 = vset.pattern.permute.xlu0 0
      %1324 = vperm.xlu0 %1323, %v1290
      %v1325 = vpop.permute.xlu0 %1324
      %1328 = vset.pattern.permute.xlu0 0
      %1329 = vperm.xlu0 %1328, %v1291
      %v1330 = vpop.permute.xlu0 %1329
      %1333 = vset.pattern.permute.xlu0 0
      %1334 = vperm.xlu0 %1333, %v1292
      %v1335 = vpop.permute.xlu0 %1334
      %1338 = vset.pattern.permute.xlu0 0
      %1339 = vperm.xlu0 %1338, %v1293
      %v1340 = vpop.permute.xlu0 %1339
      %1343 = vset.pattern.permute.xlu0 0
      %1344 = vperm.xlu0 %1343, %v1294
      %v1345 = vpop.permute.xlu0 %1344
      %1348 = vset.pattern.permute.xlu0 0
      %1349 = vperm.xlu0 %1348, %v1295
      %v1350 = vpop.permute.xlu0 %1349
      %1353 = vset.pattern.permute.xlu0 0
      %1354 = vperm.xlu0 %1353, %v1296
      %v1355 = vpop.permute.xlu0 %1354
      %1358 = vset.pattern.permute.xlu0 0
      %1359 = vperm.xlu0 %1358, %v1297
      %v1360 = vpop.permute.xlu0 %1359
      %1363 = vset.pattern.permute.xlu0 0
      %1364 = vperm.xlu0 %1363, %v1298
      %v1365 = vpop.permute.xlu0 %1364
      %1368 = vset.pattern.permute.xlu0 0
      %1369 = vperm.xlu0 %1368, %v1299
      %v1370 = vpop.permute.xlu0 %1369
      %1373 = vset.pattern.permute.xlu0 0
      %1374 = vperm.xlu0 %1373, %v1300
      %v1375 = vpop.permute.xlu0 %1374
      %1378 = vset.pattern.permute.xlu0 0
      %1379 = vperm.xlu0 %1378, %v1301
      %v1380 = vpop.permute.xlu0 %1379
      %v1382 = vmul.f32 %v1224, %v1305
      %v1383 = vmul.f32 %v1227, %v1310
      %v1384 = vmul.f32 %v1232, %v1315
      %v1385 = vmul.f32 %v1235, %v1320
      %v1386 = vmul.f32 %v1240, %v1325
      %v1387 = vmul.f32 %v1243, %v1330
      %v1388 = vmul.f32 %v1248, %v1335
      %v1389 = vmul.f32 %v1251, %v1340
      %v1390 = vmul.f32 %v1256, %v1345
      %v1391 = vmul.f32 %v1259, %v1350
      %v1392 = vmul.f32 %v1264, %v1355
      %v1393 = vmul.f32 %v1267, %v1360
      %v1394 = vmul.f32 %v1272, %v1365
      %v1395 = vmul.f32 %v1275, %v1370
      %v1396 = vmul.f32 %v1280, %v1375
      %v1397 = vmul.f32 %v1283, %v1380
      %v1398 = vpack.c.bf16 %v1383, %v1382
      %v1399 = vpack.c.bf16 %v1385, %v1384
      %v1400 = vpack.c.bf16 %v1387, %v1386
      %v1401 = vpack.c.bf16 %v1389, %v1388
      %v1402 = vpack.c.bf16 %v1391, %v1390
      %v1403 = vpack.c.bf16 %v1393, %v1392
      %v1404 = vpack.c.bf16 %v1395, %v1394
      %v1405 = vpack.c.bf16 %v1397, %v1396
      %v1414 = vunpack.c.l.b16 %v1398
      %v1415 = vunpack.c.h.b16 %v1398
      %v1416 = vunpack.c.l.b16 %v1399
      %v1417 = vunpack.c.h.b16 %v1399
      %v1418 = vunpack.c.l.b16 %v1400
      %v1419 = vunpack.c.h.b16 %v1400
      %v1420 = vunpack.c.l.b16 %v1401
      %v1421 = vunpack.c.h.b16 %v1401
      %v1422 = vunpack.c.l.b16 %v1402
      %v1423 = vunpack.c.h.b16 %v1402
      %v1424 = vunpack.c.l.b16 %v1403
      %v1425 = vunpack.c.h.b16 %v1403
      %v1426 = vunpack.c.l.b16 %v1404
      %v1427 = vunpack.c.h.b16 %v1404
      %v1428 = vunpack.c.l.b16 %v1405
      %v1429 = vunpack.c.h.b16 %v1405
      %v1430 = vpack.c.b16 %v1414, %v1414
      %v1431 = vpack.c.b16 %v1415, %v1415
      %v1432 = vpack.c.b16 %v1416, %v1416
      %v1433 = vpack.c.b16 %v1417, %v1417
      %v1434 = vpack.c.b16 %v1418, %v1418
      %v1435 = vpack.c.b16 %v1419, %v1419
      %v1436 = vpack.c.b16 %v1420, %v1420
      %v1437 = vpack.c.b16 %v1421, %v1421
      %v1438 = vpack.c.b16 %v1422, %v1422
      %v1439 = vpack.c.b16 %v1423, %v1423
      %v1440 = vpack.c.b16 %v1424, %v1424
      %v1441 = vpack.c.b16 %v1425, %v1425
      %v1442 = vpack.c.b16 %v1426, %v1426
      %v1443 = vpack.c.b16 %v1427, %v1427
      %v1444 = vpack.c.b16 %v1428, %v1428
      %v1445 = vpack.c.b16 %v1429, %v1429
      %1462 = vst [vmem:[#allocation20] sm:$0xf] %v1430
      %1463 = vst [vmem:[#allocation20 + $0x4] sm:$0xf] %v1431
      %1464 = vst [vmem:[#allocation20 + $0x8] sm:$0xf] %v1432
      %1465 = vst [vmem:[#allocation20 + $0xc] sm:$0xf] %v1433
      %1466 = vst [vmem:[#allocation20 + $0x10] sm:$0xf] %v1434
      %1467 = vst [vmem:[#allocation20 + $0x14] sm:$0xf] %v1435
      %1468 = vst [vmem:[#allocation20 + $0x18] sm:$0xf] %v1436
      %1469 = vst [vmem:[#allocation20 + $0x1c] sm:$0xf] %v1437
      %1470 = vst [vmem:[#allocation20 + $0x20] sm:$0xf] %v1438
      %1471 = vst [vmem:[#allocation20 + $0x24] sm:$0xf] %v1439
      %1472 = vst [vmem:[#allocation20 + $0x28] sm:$0xf] %v1440
      %1473 = vst [vmem:[#allocation20 + $0x2c] sm:$0xf] %v1441
      %1474 = vst [vmem:[#allocation20 + $0x30] sm:$0xf] %v1442
      %1475 = vst [vmem:[#allocation20 + $0x34] sm:$0xf] %v1443
      %1476 = vst [vmem:[#allocation20 + $0x38] sm:$0xf] %v1444
      %1477 = vst [vmem:[#allocation20 + $0x3c] sm:$0xf] %v1445
    $region89: #{premodel_forward.4} parent=1 // pred_fallthru
      _
    // Predicated region
    $region90: #{premodel_forward.4} parent=1 // pred_check
      _
    $region91: #{premodel_forward.4} parent=1 // pred_check_branch
      %1479 = sbr.rel (0) target = $region93
    $region92: #{premodel_forward.4} parent=1 // pred_region
      %s1481 = ssub.s32 1024, 1024
      %1482 = vsyncadd [#allocation5], %s1481
      %s1483 = sshll.u32 [#allocation20], 4
      %s1484 = int_to_ptr.vmem [resolvable:$true] %s1483
      %1489 = dma.vmem_to_hbm [thread:$0]  %s1484, 1024, %s10, [#allocation5], 64, 64, 4
    $region93: #{premodel_forward.4} parent=1 // pred_fallthru
      _
    // Predicated region
    $region94: #{premodel_forward.4} parent=1 // pred_check
      _
    $region95: #{premodel_forward.4} parent=1 // pred_check_branch
      %1491 = sbr.rel (0) target = $region97
    $region96: #{premodel_forward.4} parent=1 // pred_region
      %s1493 = ssub.s32 128, 128
      %1494 = vsyncadd [#allocation22], %s1493
      %s1496 = sshll.u32 [#allocation21], 4
      %s1497 = int_to_ptr.vmem [resolvable:$true] %s1496
      %1499 = dma.vmem_to_hbm [thread:$0]  %s1497, 128, %s11, [#allocation22]
    $region97: #{premodel_forward.4} parent=1 // pred_fallthru
      _
    // Predicated region
    $region98: #{premodel_forward.4} parent=1 // pred_check
      _
    $region99: #{premodel_forward.4} parent=1 // pred_check_branch
      %1501 = sbr.rel (0) target = $region101
    $region100: #{premodel_forward.4} parent=1 // pred_region
      %1502 = dma.done [#allocation5], 1024
    $region101: #{premodel_forward.4} parent=1 // pred_fallthru
      _
    // Predicated region
    $region102: #{premodel_forward.4} parent=1 // pred_check
      _
    $region103: #{premodel_forward.4} parent=1 // pred_check_branch
      %1504 = sbr.rel (0) target = $region105
    $region104: #{premodel_forward.4} parent=1 // pred_region
      %1505 = dma.done [#allocation22], 128
    $region105: #{premodel_forward.4} parent=1 // pred_fallthru
      _
    %1506 = vsyncpa [#allocation4], 1
    %1507 = vsyncpa [#allocation7], 1
    %1508 = vsyncpa [#allocation10], 1
    %1509 = vsyncpa [#allocation13], 1
    %1510 = vsyncpa [#allocation16], 1
    %1511 = vsyncpa [#allocation19], 1
    %1512 = vsyncpa [#allocation5], 1
    %1513 = vsyncpa [#allocation22], 1

// kernel: premodel_forward.5
$region0: #{premodel_forward.5}
  #allocation0 [shape = 'u32[]', space=smem, size = 0x4, offset = 0x4, fixed_abs, tag = 'smem constant byte address 0x4 - core index']
  #allocation1 [shape = 'u32[144,128]{1,0:T(1,128)}', space=vmem, size = 0x12000, scoped, tag = 'internal scratch']
  #allocation2 [shape = 'f32[128,128]{1,0:T(8,128)}', space=vmem, size = 0x10000, scoped, tag = 'scratch operand']
  %s0 = inlined_call_operand.hbm [shape: bf16[128,128], index: 0, kind: input, shape index: {}, may-alias: {0,1}]
  %s1 = inlined_call_operand.hbm [shape: bf16[128,128], index: 1, kind: input, shape index: {}, may-alias: {0,1}]
  %s2 = inlined_call_operand.hbm [shape: s8[128,128], index: 2, kind: input, shape index: {}]
  %s3 = inlined_call_operand.hbm [shape: f32[128,1], index: 3, kind: input, shape index: {}]
  %s4 = inlined_call_operand.hbm [shape: f32[128,128], index: 4, kind: input, shape index: {}]
  %s5 = inlined_call_operand.hbm [shape: f32[128,1], index: 5, kind: input, shape index: {}]
  %s6 = inlined_call_operand.hbm [shape: bf16[128,128], index: 6, kind: input, shape index: {}]
  %s7 = inlined_call_operand.hbm [shape: bf16[128,128], index: 7, kind: input, shape index: {}]
  %s8 = inlined_call_operand.hbm [shape: f32[1,128], index: 8, kind: input, shape index: {}]
  %s9 = inlined_call_operand.hbm [shape: f32[8,128], index: 9, kind: output, shape index: {}]
  %s10 = sld [smem:[#allocation0]]
  $region90: #{premodel_forward.5} parent=0
    _
  %s12 = ssub.s32 1, %s10
  %s13 = scalar_select 0, %s12, %s10
  $region1: #{premodel_forward.5} parent=0
    #allocation3 [shape = 'u8[32768]{0}', space=vmem, size = 0x8000, scoped, tag = 'input window, operand 0, single buffered']
    #allocation4 [shape = 's32[1]{0}', space=sflag, size = 0x4, scoped, tag = 'scoped memory for premodel_forward.5']
    #allocation5 [shape = 's32[1]{0}', space=sflag, size = 0x4, scoped, tag = 'scoped memory for premodel_forward.5']
    #allocation6 [shape = 'u8[32768]{0}', space=vmem, size = 0x8000, scoped, tag = 'input window, operand 1, single buffered']
    #allocation7 [shape = 's32[1]{0}', space=sflag, size = 0x4, scoped, tag = 'scoped memory for premodel_forward.5']
    #allocation8 [shape = 'u8[16384]{0}', space=vmem, size = 0x4000, scoped, tag = 'input window, operand 2, single buffered']
    #allocation9 [shape = 'u8[65536]{0}', space=vmem, size = 0x10000, scoped, tag = 'input window, operand 3, single buffered']
    #allocation10 [shape = 's32[1]{0}', space=sflag, size = 0x4, scoped, tag = 'scoped memory for premodel_forward.5']
    #allocation11 [shape = 'u8[65536]{0}', space=vmem, size = 0x10000, scoped, tag = 'input window, operand 4, single buffered']
    #allocation12 [shape = 'u8[65536]{0}', space=vmem, size = 0x10000, scoped, tag = 'input window, operand 5, single buffered']
    #allocation13 [shape = 's32[1]{0}', space=sflag, size = 0x4, scoped, tag = 'scoped memory for premodel_forward.5']
    #allocation14 [shape = 'u8[32768]{0}', space=vmem, size = 0x8000, scoped, tag = 'input window, operand 6, single buffered']
    #allocation15 [shape = 'u8[32768]{0}', space=vmem, size = 0x8000, scoped, tag = 'input window, operand 7, single buffered']
    #allocation16 [shape = 's32[1]{0}', space=sflag, size = 0x4, scoped, tag = 'scoped memory for premodel_forward.5']
    #allocation17 [shape = 'u8[512]{0}', space=vmem, size = 0x400, scoped, tag = 'input window, operand 8, single buffered']
    #allocation18 [shape = 'u8[4096]{0}', space=vmem, size = 0x1000, scoped, tag = 'output window, operand 0, single buffered']
    %14 = vsyncpa [#allocation4], 0
    %15 = vsyncpa [#allocation7], 0
    %16 = vsyncpa [#allocation10], 0
    %17 = vsyncpa [#allocation13], 0
    %18 = vsyncpa [#allocation16], 0
    %19 = vsyncpa [#allocation5], 0
    // Predicated region
    $region2: #{premodel_forward.5} parent=1 // pred_check
      _
    $region3: #{premodel_forward.5} parent=1 // pred_check_branch
      %21 = sbr.rel (0) target = $region5
    $region4: #{premodel_forward.5} parent=1 // pred_region
      %s23 = ssub.s32 1024, 1024
      %24 = vsyncadd [#allocation4], %s23
      %s25 = sshll.u32 [#allocation3], 4
      %s26 = int_to_ptr.vmem [resolvable:$true] %s25
      %31 = dma.hbm_to_vmem [thread:$0]  %s0, 1024, %s26, [#allocation4], 64, 64, 4
    $region5: #{premodel_forward.5} parent=1 // pred_fallthru
      _
    // Predicated region
    $region6: #{premodel_forward.5} parent=1 // pred_check
      _
    $region7: #{premodel_forward.5} parent=1 // pred_check_branch
      %33 = sbr.rel (0) target = $region9
    $region8: #{premodel_forward.5} parent=1 // pred_region
      %s35 = ssub.s32 1024, 1024
      %36 = vsyncadd [#allocation7], %s35
      %s37 = sshll.u32 [#allocation6], 4
      %s38 = int_to_ptr.vmem [resolvable:$true] %s37
      %43 = dma.hbm_to_vmem [thread:$0]  %s1, 1024, %s38, [#allocation7], 64, 64, 4
    $region9: #{premodel_forward.5} parent=1 // pred_fallthru
      _
    // Predicated region
    $region10: #{premodel_forward.5} parent=1 // pred_check
      _
    $region11: #{premodel_forward.5} parent=1 // pred_check_branch
      %45 = sbr.rel (0) target = $region13
    $region12: #{premodel_forward.5} parent=1 // pred_region
      %s47 = ssub.s32 512, 512
      %48 = vsyncadd [#allocation7], %s47
      %s49 = sshll.u32 [#allocation8], 4
      %s50 = int_to_ptr.vmem [resolvable:$true] %s49
      %55 = dma.hbm_to_vmem [thread:$0]  %s2, 512, %s50, [#allocation7], 128, 128, 8
    $region13: #{premodel_forward.5} parent=1 // pred_fallthru
      _
    // Predicated region
    $region14: #{premodel_forward.5} parent=1 // pred_check
      _
    $region15: #{premodel_forward.5} parent=1 // pred_check_branch
      %57 = sbr.rel (0) target = $region17
    $region16: #{premodel_forward.5} parent=1 // pred_region
      %s59 = ssub.s32 2048, 2048
      %60 = vsyncadd [#allocation10], %s59
      %s61 = sshll.u32 [#allocation9], 4
      %s62 = int_to_ptr.vmem [resolvable:$true] %s61
      %67 = dma.hbm_to_vmem [thread:$0]  %s3, 2048, %s62, [#allocation10], 128, 128, 8
    $region17: #{premodel_forward.5} parent=1 // pred_fallthru
      _
    // Predicated region
    $region18: #{premodel_forward.5} parent=1 // pred_check
      _
    $region19: #{premodel_forward.5} parent=1 // pred_check_branch
      %69 = sbr.rel (0) target = $region21
    $region20: #{premodel_forward.5} parent=1 // pred_region
      %s71 = ssub.s32 2048, 2048
      %72 = vsyncadd [#allocation10], %s71
      %s73 = sshll.u32 [#allocation11], 4
      %s74 = int_to_ptr.vmem [resolvable:$true] %s73
      %79 = dma.hbm_to_vmem [thread:$0]  %s4, 2048, %s74, [#allocation10], 128, 128, 8
    $region21: #{premodel_forward.5} parent=1 // pred_fallthru
      _
    // Predicated region
    $region22: #{premodel_forward.5} parent=1 // pred_check
      _
    $region23: #{premodel_forward.5} parent=1 // pred_check_branch
      %81 = sbr.rel (0) target = $region25
    $region24: #{premodel_forward.5} parent=1 // pred_region
      %s83 = ssub.s32 2048, 2048
      %84 = vsyncadd [#allocation13], %s83
      %s85 = sshll.u32 [#allocation12], 4
      %s86 = int_to_ptr.vmem [resolvable:$true] %s85
      %91 = dma.hbm_to_vmem [thread:$0]  %s5, 2048, %s86, [#allocation13], 128, 128, 8
    $region25: #{premodel_forward.5} parent=1 // pred_fallthru
      _
    // Predicated region
    $region26: #{premodel_forward.5} parent=1 // pred_check
      _
    $region27: #{premodel_forward.5} parent=1 // pred_check_branch
      %93 = sbr.rel (0) target = $region29
    $region28: #{premodel_forward.5} parent=1 // pred_region
      %s95 = ssub.s32 1024, 1024
      %96 = vsyncadd [#allocation13], %s95
      %s97 = sshll.u32 [#allocation14], 4
      %s98 = int_to_ptr.vmem [resolvable:$true] %s97
      %103 = dma.hbm_to_vmem [thread:$0]  %s6, 1024, %s98, [#allocation13], 64, 64, 4
    $region29: #{premodel_forward.5} parent=1 // pred_fallthru
      _
    // Predicated region
    $region30: #{premodel_forward.5} parent=1 // pred_check
      _
    $region31: #{premodel_forward.5} parent=1 // pred_check_branch
      %105 = sbr.rel (0) target = $region33
    $region32: #{premodel_forward.5} parent=1 // pred_region
      %s107 = ssub.s32 1024, 1024
      %108 = vsyncadd [#allocation16], %s107
      %s109 = sshll.u32 [#allocation15], 4
      %s110 = int_to_ptr.vmem [resolvable:$true] %s109
      %115 = dma.hbm_to_vmem [thread:$0]  %s7, 1024, %s110, [#allocation16], 64, 64, 4
    $region33: #{premodel_forward.5} parent=1 // pred_fallthru
      _
    // Predicated region
    $region34: #{premodel_forward.5} parent=1 // pred_check
      _
    $region35: #{premodel_forward.5} parent=1 // pred_check_branch
      %117 = sbr.rel (0) target = $region37
    $region36: #{premodel_forward.5} parent=1 // pred_region
      %s119 = ssub.s32 16, 16
      %120 = vsyncadd [#allocation16], %s119
      %s122 = sshll.u32 [#allocation17], 4
      %s123 = int_to_ptr.vmem [resolvable:$true] %s122
      %125 = dma.hbm_to_vmem [thread:$0]  %s8, 16, %s123, [#allocation16]
    $region37: #{premodel_forward.5} parent=1 // pred_fallthru
      _
    // Predicated region
    $region38: #{premodel_forward.5} parent=1 // pred_check
      _
    $region39: #{premodel_forward.5} parent=1 // pred_check_branch
      %127 = sbr.rel (0) target = $region41
    $region40: #{premodel_forward.5} parent=1 // pred_region
      %128 = dma.done [#allocation4], 1024
    $region41: #{premodel_forward.5} parent=1 // pred_fallthru
      _
    // Predicated region
    $region42: #{premodel_forward.5} parent=1 // pred_check
      _
    $region43: #{premodel_forward.5} parent=1 // pred_check_branch
      %130 = sbr.rel (0) target = $region45
    $region44: #{premodel_forward.5} parent=1 // pred_region
      %131 = dma.done [#allocation7], 1024
    $region45: #{premodel_forward.5} parent=1 // pred_fallthru
      _
    // Predicated region
    $region46: #{premodel_forward.5} parent=1 // pred_check
      _
    $region47: #{premodel_forward.5} parent=1 // pred_check_branch
      %133 = sbr.rel (0) target = $region49
    $region48: #{premodel_forward.5} parent=1 // pred_region
      %134 = dma.done [#allocation7], 512
    $region49: #{premodel_forward.5} parent=1 // pred_fallthru
      _
    // Predicated region
    $region50: #{premodel_forward.5} parent=1 // pred_check
      _
    $region51: #{premodel_forward.5} parent=1 // pred_check_branch
      %136 = sbr.rel (0) target = $region53
    $region52: #{premodel_forward.5} parent=1 // pred_region
      %137 = dma.done [#allocation10], 2048
    $region53: #{premodel_forward.5} parent=1 // pred_fallthru
      _
    // Predicated region
    $region54: #{premodel_forward.5} parent=1 // pred_check
      _
    $region55: #{premodel_forward.5} parent=1 // pred_check_branch
      %139 = sbr.rel (0) target = $region57
    $region56: #{premodel_forward.5} parent=1 // pred_region
      %140 = dma.done [#allocation10], 2048
    $region57: #{premodel_forward.5} parent=1 // pred_fallthru
      _
    // Predicated region
    $region58: #{premodel_forward.5} parent=1 // pred_check
      _
    $region59: #{premodel_forward.5} parent=1 // pred_check_branch
      %142 = sbr.rel (0) target = $region61
    $region60: #{premodel_forward.5} parent=1 // pred_region
      %143 = dma.done [#allocation13], 2048
    $region61: #{premodel_forward.5} parent=1 // pred_fallthru
      _
    // Predicated region
    $region62: #{premodel_forward.5} parent=1 // pred_check
      _
    $region63: #{premodel_forward.5} parent=1 // pred_check_branch
      %145 = sbr.rel (0) target = $region65
    $region64: #{premodel_forward.5} parent=1 // pred_region
      %146 = dma.done [#allocation13], 1024
    $region65: #{premodel_forward.5} parent=1 // pred_fallthru
      _
    // Predicated region
    $region66: #{premodel_forward.5} parent=1 // pred_check
      _
    $region67: #{premodel_forward.5} parent=1 // pred_check_branch
      %148 = sbr.rel (0) target = $region69
    $region68: #{premodel_forward.5} parent=1 // pred_region
      %149 = dma.done [#allocation16], 1024
    $region69: #{premodel_forward.5} parent=1 // pred_fallthru
      _
    // Predicated region
    $region70: #{premodel_forward.5} parent=1 // pred_check
      _
    $region71: #{premodel_forward.5} parent=1 // pred_check_branch
      %151 = sbr.rel (0) target = $region73
    $region72: #{premodel_forward.5} parent=1 // pred_region
      %152 = dma.done [#allocation16], 16
    $region73: #{premodel_forward.5} parent=1 // pred_fallthru
      _
    %p154 = scmp.eq.s32.totalorder 0, 0
    // Predicated region
    $region74: #{premodel_forward.5} parent=1 // pred_check
      %p155 = pneg %p154
    $region75: #{premodel_forward.5} parent=1 // pred_check_branch
      %157 = sbr.rel (%p155) target = $region77
    $region76: #{premodel_forward.5} parent=1 // pred_region
      %158 = vst [vmem:[#allocation2] sm:$0xff] 0.0
      %159 = vst [vmem:[#allocation2 + $0x8] sm:$0xff] 0.0
      %160 = vst [vmem:[#allocation2 + $0x10] sm:$0xff] 0.0
      %161 = vst [vmem:[#allocation2 + $0x18] sm:$0xff] 0.0
      %162 = vst [vmem:[#allocation2 + $0x20] sm:$0xff] 0.0
      %163 = vst [vmem:[#allocation2 + $0x28] sm:$0xff] 0.0
      %164 = vst [vmem:[#allocation2 + $0x30] sm:$0xff] 0.0
      %165 = vst [vmem:[#allocation2 + $0x38] sm:$0xff] 0.0
      %166 = vst [vmem:[#allocation2 + $0x40] sm:$0xff] 0.0
      %167 = vst [vmem:[#allocation2 + $0x48] sm:$0xff] 0.0
      %168 = vst [vmem:[#allocation2 + $0x50] sm:$0xff] 0.0
      %169 = vst [vmem:[#allocation2 + $0x58] sm:$0xff] 0.0
      %170 = vst [vmem:[#allocation2 + $0x60] sm:$0xff] 0.0
      %171 = vst [vmem:[#allocation2 + $0x68] sm:$0xff] 0.0
      %172 = vst [vmem:[#allocation2 + $0x70] sm:$0xff] 0.0
      %173 = vst [vmem:[#allocation2 + $0x78] sm:$0xff] 0.0
    $region77: #{premodel_forward.5} parent=1 // pred_fallthru
      _
    %v174 = vld [vmem:[#allocation8] sm:$0xff]
    %v175 = vld [vmem:[#allocation8 + $0x8] sm:$0xff]
    %v176 = vld [vmem:[#allocation8 + $0x10] sm:$0xff]
    %v177 = vld [vmem:[#allocation8 + $0x18] sm:$0xff]
    %v178 = vunpack.c.l.s8.bf16 %v174
    %v179 = vunpack.c.h.s8.bf16 %v174
    %v180 = vunpack.c.l.s8.bf16 %v175
    %v181 = vunpack.c.h.s8.bf16 %v175
    %v182 = vunpack.c.l.s8.bf16 %v176
    %v183 = vunpack.c.h.s8.bf16 %v176
    %v184 = vunpack.c.l.s8.bf16 %v177
    %v185 = vunpack.c.h.s8.bf16 %v177
    %v186 = vld [vmem:[#allocation2] sm:$0xff]
    %v187 = vld [vmem:[#allocation2 + $0x8] sm:$0xff]
    %v188 = vld [vmem:[#allocation2 + $0x10] sm:$0xff]
    %v189 = vld [vmem:[#allocation2 + $0x18] sm:$0xff]
    %v190 = vld [vmem:[#allocation2 + $0x20] sm:$0xff]
    %v191 = vld [vmem:[#allocation2 + $0x28] sm:$0xff]
    %v192 = vld [vmem:[#allocation2 + $0x30] sm:$0xff]
    %v193 = vld [vmem:[#allocation2 + $0x38] sm:$0xff]
    %v194 = vld [vmem:[#allocation2 + $0x40] sm:$0xff]
    %v195 = vld [vmem:[#allocation2 + $0x48] sm:$0xff]
    %v196 = vld [vmem:[#allocation2 + $0x50] sm:$0xff]
    %v197 = vld [vmem:[#allocation2 + $0x58] sm:$0xff]
    %v198 = vld [vmem:[#allocation2 + $0x60] sm:$0xff]
    %v199 = vld [vmem:[#allocation2 + $0x68] sm:$0xff]
    %v200 = vld [vmem:[#allocation2 + $0x70] sm:$0xff]
    %v201 = vld [vmem:[#allocation2 + $0x78] sm:$0xff]
    %v202 = vld [vmem:[#allocation3] sm:$0xf]
    %v203 = vld [vmem:[#allocation3 + $0x4] sm:$0xf]
    %v204 = vld [vmem:[#allocation3 + $0x8] sm:$0xf]
    %v205 = vld [vmem:[#allocation3 + $0xc] sm:$0xf]
    %v206 = vld [vmem:[#allocation3 + $0x10] sm:$0xf]
    %v207 = vld [vmem:[#allocation3 + $0x14] sm:$0xf]
    %v208 = vld [vmem:[#allocation3 + $0x18] sm:$0xf]
    %v209 = vld [vmem:[#allocation3 + $0x1c] sm:$0xf]
    %v210 = vld [vmem:[#allocation3 + $0x20] sm:$0xf]
    %v211 = vld [vmem:[#allocation3 + $0x24] sm:$0xf]
    %v212 = vld [vmem:[#allocation3 + $0x28] sm:$0xf]
    %v213 = vld [vmem:[#allocation3 + $0x2c] sm:$0xf]
    %v214 = vld [vmem:[#allocation3 + $0x30] sm:$0xf]
    %v215 = vld [vmem:[#allocation3 + $0x34] sm:$0xf]
    %v216 = vld [vmem:[#allocation3 + $0x38] sm:$0xf]
    %v217 = vld [vmem:[#allocation3 + $0x3c] sm:$0xf]
    %v234 = vunpack.c.l.b16 %v202
    %v235 = vunpack.c.l.b16 %v203
    %v236 = vunpack.c.l.b16 %v204
    %v237 = vunpack.c.l.b16 %v205
    %v238 = vunpack.c.l.b16 %v206
    %v239 = vunpack.c.l.b16 %v207
    %v240 = vunpack.c.l.b16 %v208
    %v241 = vunpack.c.l.b16 %v209
    %v242 = vunpack.c.l.b16 %v210
    %v243 = vunpack.c.l.b16 %v211
    %v244 = vunpack.c.l.b16 %v212
    %v245 = vunpack.c.l.b16 %v213
    %v246 = vunpack.c.l.b16 %v214
    %v247 = vunpack.c.l.b16 %v215
    %v248 = vunpack.c.l.b16 %v216
    %v249 = vunpack.c.l.b16 %v217
    %v250 = vpack.c.b16 %v235, %v234
    %v251 = vpack.c.b16 %v237, %v236
    %v252 = vpack.c.b16 %v239, %v238
    %v253 = vpack.c.b16 %v241, %v240
    %v254 = vpack.c.b16 %v243, %v242
    %v255 = vpack.c.b16 %v245, %v244
    %v256 = vpack.c.b16 %v247, %v246
    %v257 = vpack.c.b16 %v249, %v248
    %266 = vmatprep.subr.bf16.mxu0 0
    %267 = vmatpush1.bf16.msra.mxu0 %v250
    %268 = vmatprep.subr.bf16.mxu0 0
    %269 = vmatpush1.bf16.msra.mxu0 %v251
    %270 = vmatprep.subr.bf16.mxu0 0
    %271 = vmatpush1.bf16.msra.mxu0 %v252
    %272 = vmatprep.subr.bf16.mxu0 0
    %273 = vmatpush1.bf16.msra.mxu0 %v253
    %274 = vmatprep.subr.bf16.mxu0 0
    %275 = vmatpush1.bf16.msra.mxu0 %v254
    %276 = vmatprep.subr.bf16.mxu0 0
    %277 = vmatpush1.bf16.msra.mxu0 %v255
    %278 = vmatprep.subr.bf16.mxu0 0
    %279 = vmatpush1.bf16.msra.mxu0 %v256
    %280 = vmatprep.subr.bf16.mxu0 0
    %281 = vmatpush1.bf16.msra.mxu0 %v257
    %282 = vmatprep.subr.bf16.mxu0 0
    %283 = vmatpush1.bf16.msra.mxu0 0
    %284 = vmatprep.subr.bf16.mxu0 0
    %285 = vmatpush1.bf16.msra.mxu0 0
    %286 = vmatprep.subr.bf16.mxu0 0
    %287 = vmatpush1.bf16.msra.mxu0 0
    %288 = vmatprep.subr.bf16.mxu0 0
    %289 = vmatpush1.bf16.msra.mxu0 0
    %290 = vmatprep.subr.bf16.mxu0 0
    %291 = vmatpush1.bf16.msra.mxu0 0
    %292 = vmatprep.subr.bf16.mxu0 0
    %293 = vmatpush1.bf16.msra.mxu0 0
    %294 = vmatprep.subr.bf16.mxu0 0
    %295 = vmatpush1.bf16.msra.mxu0 0
    %296 = vmatprep.subr.bf16.mxu0 0
    %297 = vmatpush1.bf16.msra.mxu0 0
    %298 = vmatprep.mubr.bf16.mxu0 0
    %299 = vmatmul.mubr.bf16.gmra.mrb[0].mxu0 %v178
    %v300 = vpop.f32.mrb[0].mxu0
    %v301 = vadd.f32 0.0, %v300
    %v302 = vpop.f32.mrb[0].mxu0
    %v303 = vpop.f32.mrb[0].mxu0
    %v304 = vadd.f32 0.0, %v303
    %v305 = vpop.f32.mrb[0].mxu0
    %306 = vmatprep.mubr.bf16.mxu0 0
    %307 = vmatmul.mubr.bf16.gmra.mrb[0].mxu0 %v179
    %v308 = vpop.f32.mrb[0].mxu0
    %v309 = vadd.f32 0.0, %v308
    %v310 = vpop.f32.mrb[0].mxu0
    %v311 = vpop.f32.mrb[0].mxu0
    %v312 = vadd.f32 0.0, %v311
    %v313 = vpop.f32.mrb[0].mxu0
    %314 = vmatprep.mubr.bf16.mxu0 0
    %315 = vmatmul.mubr.bf16.gmra.mrb[0].mxu0 %v180
    %v316 = vpop.f32.mrb[0].mxu0
    %v317 = vadd.f32 0.0, %v316
    %v318 = vpop.f32.mrb[0].mxu0
    %v319 = vpop.f32.mrb[0].mxu0
    %v320 = vadd.f32 0.0, %v319
    %v321 = vpop.f32.mrb[0].mxu0
    %322 = vmatprep.mubr.bf16.mxu0 0
    %323 = vmatmul.mubr.bf16.gmra.mrb[0].mxu0 %v181
    %v324 = vpop.f32.mrb[0].mxu0
    %v325 = vadd.f32 0.0, %v324
    %v326 = vpop.f32.mrb[0].mxu0
    %v327 = vpop.f32.mrb[0].mxu0
    %v328 = vadd.f32 0.0, %v327
    %v329 = vpop.f32.mrb[0].mxu0
    %330 = vmatprep.mubr.bf16.mxu0 0
    %331 = vmatmul.mubr.bf16.gmra.mrb[0].mxu0 %v182
    %v332 = vpop.f32.mrb[0].mxu0
    %v333 = vadd.f32 0.0, %v332
    %v334 = vpop.f32.mrb[0].mxu0
    %v335 = vpop.f32.mrb[0].mxu0
    %v336 = vadd.f32 0.0, %v335
    %v337 = vpop.f32.mrb[0].mxu0
    %338 = vmatprep.mubr.bf16.mxu0 0
    %339 = vmatmul.mubr.bf16.gmra.mrb[0].mxu0 %v183
    %v340 = vpop.f32.mrb[0].mxu0
    %v341 = vadd.f32 0.0, %v340
    %v342 = vpop.f32.mrb[0].mxu0
    %v343 = vpop.f32.mrb[0].mxu0
    %v344 = vadd.f32 0.0, %v343
    %v345 = vpop.f32.mrb[0].mxu0
    %346 = vmatprep.mubr.bf16.mxu0 0
    %347 = vmatmul.mubr.bf16.gmra.mrb[0].mxu0 %v184
    %v348 = vpop.f32.mrb[0].mxu0
    %v349 = vadd.f32 0.0, %v348
    %v350 = vpop.f32.mrb[0].mxu0
    %v351 = vpop.f32.mrb[0].mxu0
    %v352 = vadd.f32 0.0, %v351
    %v353 = vpop.f32.mrb[0].mxu0
    %354 = vmatprep.mubr.bf16.mxu0 0
    %355 = vmatmul.mubr.bf16.gmra.mrb[0].mxu0 %v185
    %v356 = vpop.f32.mrb[0].mxu0
    %v357 = vadd.f32 0.0, %v356
    %v358 = vpop.f32.mrb[0].mxu0
    %v359 = vpop.f32.mrb[0].mxu0
    %v360 = vadd.f32 0.0, %v359
    %v361 = vpop.f32.mrb[0].mxu0
    %362 = vdwg.mxu0
    %v363 = vadd.f32 %v186, %v301
    %v364 = vadd.f32 %v187, %v304
    %v365 = vadd.f32 %v188, %v309
    %v366 = vadd.f32 %v189, %v312
    %v367 = vadd.f32 %v190, %v317
    %v368 = vadd.f32 %v191, %v320
    %v369 = vadd.f32 %v192, %v325
    %v370 = vadd.f32 %v193, %v328
    %v371 = vadd.f32 %v194, %v333
    %v372 = vadd.f32 %v195, %v336
    %v373 = vadd.f32 %v196, %v341
    %v374 = vadd.f32 %v197, %v344
    %v375 = vadd.f32 %v198, %v349
    %v376 = vadd.f32 %v199, %v352
    %v377 = vadd.f32 %v200, %v357
    %v378 = vadd.f32 %v201, %v360
    %379 = vst [vmem:[#allocation2] sm:$0xff] %v363
    %380 = vst [vmem:[#allocation2 + $0x8] sm:$0xff] %v364
    %381 = vst [vmem:[#allocation2 + $0x10] sm:$0xff] %v365
    %382 = vst [vmem:[#allocation2 + $0x18] sm:$0xff] %v366
    %383 = vst [vmem:[#allocation2 + $0x20] sm:$0xff] %v367
    %384 = vst [vmem:[#allocation2 + $0x28] sm:$0xff] %v368
    %385 = vst [vmem:[#allocation2 + $0x30] sm:$0xff] %v369
    %386 = vst [vmem:[#allocation2 + $0x38] sm:$0xff] %v370
    %387 = vst [vmem:[#allocation2 + $0x40] sm:$0xff] %v371
    %388 = vst [vmem:[#allocation2 + $0x48] sm:$0xff] %v372
    %389 = vst [vmem:[#allocation2 + $0x50] sm:$0xff] %v373
    %390 = vst [vmem:[#allocation2 + $0x58] sm:$0xff] %v374
    %391 = vst [vmem:[#allocation2 + $0x60] sm:$0xff] %v375
    %392 = vst [vmem:[#allocation2 + $0x68] sm:$0xff] %v376
    %393 = vst [vmem:[#allocation2 + $0x70] sm:$0xff] %v377
    %394 = vst [vmem:[#allocation2 + $0x78] sm:$0xff] %v378
    // Predicated region
    $region78: #{premodel_forward.5} parent=1 // pred_check
      %p395 = pneg %p154
    $region79: #{premodel_forward.5} parent=1 // pred_check_branch
      %397 = sbr.rel (%p395) target = $region81
    $region80: #{premodel_forward.5} parent=1 // pred_region
      %v398 = vld [vmem:[#allocation2] sm:$0xff]
      %v399 = vld [vmem:[#allocation2 + $0x8] sm:$0xff]
      %v400 = vld [vmem:[#allocation2 + $0x10] sm:$0xff]
      %v401 = vld [vmem:[#allocation2 + $0x18] sm:$0xff]
      %v402 = vld [vmem:[#allocation2 + $0x20] sm:$0xff]
      %v403 = vld [vmem:[#allocation2 + $0x28] sm:$0xff]
      %v404 = vld [vmem:[#allocation2 + $0x30] sm:$0xff]
      %v405 = vld [vmem:[#allocation2 + $0x38] sm:$0xff]
      %v406 = vld [vmem:[#allocation2 + $0x40] sm:$0xff]
      %v407 = vld [vmem:[#allocation2 + $0x48] sm:$0xff]
      %v408 = vld [vmem:[#allocation2 + $0x50] sm:$0xff]
      %v409 = vld [vmem:[#allocation2 + $0x58] sm:$0xff]
      %v410 = vld [vmem:[#allocation2 + $0x60] sm:$0xff]
      %v411 = vld [vmem:[#allocation2 + $0x68] sm:$0xff]
      %v412 = vld [vmem:[#allocation2 + $0x70] sm:$0xff]
      %v413 = vld [vmem:[#allocation2 + $0x78] sm:$0xff]
      %v414 = vld [vmem:[#allocation9] sm:$0xff]
      %v415 = vld [vmem:[#allocation9 + $0x8] sm:$0xff]
      %v416 = vld [vmem:[#allocation9 + $0x10] sm:$0xff]
      %v417 = vld [vmem:[#allocation9 + $0x18] sm:$0xff]
      %v418 = vld [vmem:[#allocation9 + $0x20] sm:$0xff]
      %v419 = vld [vmem:[#allocation9 + $0x28] sm:$0xff]
      %v420 = vld [vmem:[#allocation9 + $0x30] sm:$0xff]
      %v421 = vld [vmem:[#allocation9 + $0x38] sm:$0xff]
      %v422 = vld [vmem:[#allocation9 + $0x40] sm:$0xff]
      %v423 = vld [vmem:[#allocation9 + $0x48] sm:$0xff]
      %v424 = vld [vmem:[#allocation9 + $0x50] sm:$0xff]
      %v425 = vld [vmem:[#allocation9 + $0x58] sm:$0xff]
      %v426 = vld [vmem:[#allocation9 + $0x60] sm:$0xff]
      %v427 = vld [vmem:[#allocation9 + $0x68] sm:$0xff]
      %v428 = vld [vmem:[#allocation9 + $0x70] sm:$0xff]
      %v429 = vld [vmem:[#allocation9 + $0x78] sm:$0xff]
      %431 = vset.pattern.permute.xlu0 0
      %432 = vperm.xlu0 %431, %v414
      %v433 = vpop.permute.xlu0 %432
      %436 = vset.pattern.permute.xlu0 0
      %437 = vperm.xlu0 %436, %v415
      %v438 = vpop.permute.xlu0 %437
      %441 = vset.pattern.permute.xlu0 0
      %442 = vperm.xlu0 %441, %v416
      %v443 = vpop.permute.xlu0 %442
      %446 = vset.pattern.permute.xlu0 0
      %447 = vperm.xlu0 %446, %v417
      %v448 = vpop.permute.xlu0 %447
      %451 = vset.pattern.permute.xlu0 0
      %452 = vperm.xlu0 %451, %v418
      %v453 = vpop.permute.xlu0 %452
      %456 = vset.pattern.permute.xlu0 0
      %457 = vperm.xlu0 %456, %v419
      %v458 = vpop.permute.xlu0 %457
      %461 = vset.pattern.permute.xlu0 0
      %462 = vperm.xlu0 %461, %v420
      %v463 = vpop.permute.xlu0 %462
      %466 = vset.pattern.permute.xlu0 0
      %467 = vperm.xlu0 %466, %v421
      %v468 = vpop.permute.xlu0 %467
      %471 = vset.pattern.permute.xlu0 0
      %472 = vperm.xlu0 %471, %v422
      %v473 = vpop.permute.xlu0 %472
      %476 = vset.pattern.permute.xlu0 0
      %477 = vperm.xlu0 %476, %v423
      %v478 = vpop.permute.xlu0 %477
      %481 = vset.pattern.permute.xlu0 0
      %482 = vperm.xlu0 %481, %v424
      %v483 = vpop.permute.xlu0 %482
      %486 = vset.pattern.permute.xlu0 0
      %487 = vperm.xlu0 %486, %v425
      %v488 = vpop.permute.xlu0 %487
      %491 = vset.pattern.permute.xlu0 0
      %492 = vperm.xlu0 %491, %v426
      %v493 = vpop.permute.xlu0 %492
      %496 = vset.pattern.permute.xlu0 0
      %497 = vperm.xlu0 %496, %v427
      %v498 = vpop.permute.xlu0 %497
      %501 = vset.pattern.permute.xlu0 0
      %502 = vperm.xlu0 %501, %v428
      %v503 = vpop.permute.xlu0 %502
      %506 = vset.pattern.permute.xlu0 0
      %507 = vperm.xlu0 %506, %v429
      %v508 = vpop.permute.xlu0 %507
      %v510 = vmul.f32 %v398, %v433
      %v511 = vmul.f32 %v399, %v438
      %v512 = vmul.f32 %v400, %v443
      %v513 = vmul.f32 %v401, %v448
      %v514 = vmul.f32 %v402, %v453
      %v515 = vmul.f32 %v403, %v458
      %v516 = vmul.f32 %v404, %v463
      %v517 = vmul.f32 %v405, %v468
      %v518 = vmul.f32 %v406, %v473
      %v519 = vmul.f32 %v407, %v478
      %v520 = vmul.f32 %v408, %v483
      %v521 = vmul.f32 %v409, %v488
      %v522 = vmul.f32 %v410, %v493
      %v523 = vmul.f32 %v411, %v498
      %v524 = vmul.f32 %v412, %v503
      %v525 = vmul.f32 %v413, %v508
      %v526 = vpack.c.bf16 %v511, %v510
      %v527 = vpack.c.bf16 %v513, %v512
      %v528 = vpack.c.bf16 %v515, %v514
      %v529 = vpack.c.bf16 %v517, %v516
      %v530 = vpack.c.bf16 %v519, %v518
      %v531 = vpack.c.bf16 %v521, %v520
      %v532 = vpack.c.bf16 %v523, %v522
      %v533 = vpack.c.bf16 %v525, %v524
      %v534 = vld [vmem:[#allocation6] sm:$0xf]
      %v535 = vld [vmem:[#allocation6 + $0x4] sm:$0xf]
      %v536 = vld [vmem:[#allocation6 + $0x8] sm:$0xf]
      %v537 = vld [vmem:[#allocation6 + $0xc] sm:$0xf]
      %v538 = vld [vmem:[#allocation6 + $0x10] sm:$0xf]
      %v539 = vld [vmem:[#allocation6 + $0x14] sm:$0xf]
      %v540 = vld [vmem:[#allocation6 + $0x18] sm:$0xf]
      %v541 = vld [vmem:[#allocation6 + $0x1c] sm:$0xf]
      %v542 = vld [vmem:[#allocation6 + $0x20] sm:$0xf]
      %v543 = vld [vmem:[#allocation6 + $0x24] sm:$0xf]
      %v544 = vld [vmem:[#allocation6 + $0x28] sm:$0xf]
      %v545 = vld [vmem:[#allocation6 + $0x2c] sm:$0xf]
      %v546 = vld [vmem:[#allocation6 + $0x30] sm:$0xf]
      %v547 = vld [vmem:[#allocation6 + $0x34] sm:$0xf]
      %v548 = vld [vmem:[#allocation6 + $0x38] sm:$0xf]
      %v549 = vld [vmem:[#allocation6 + $0x3c] sm:$0xf]
      %v550 = vld [vmem:[#allocation14] sm:$0xf]
      %v551 = vld [vmem:[#allocation14 + $0x4] sm:$0xf]
      %v552 = vld [vmem:[#allocation14 + $0x8] sm:$0xf]
      %v553 = vld [vmem:[#allocation14 + $0xc] sm:$0xf]
      %v554 = vld [vmem:[#allocation14 + $0x10] sm:$0xf]
      %v555 = vld [vmem:[#allocation14 + $0x14] sm:$0xf]
      %v556 = vld [vmem:[#allocation14 + $0x18] sm:$0xf]
      %v557 = vld [vmem:[#allocation14 + $0x1c] sm:$0xf]
      %v558 = vld [vmem:[#allocation14 + $0x20] sm:$0xf]
      %v559 = vld [vmem:[#allocation14 + $0x24] sm:$0xf]
      %v560 = vld [vmem:[#allocation14 + $0x28] sm:$0xf]
      %v561 = vld [vmem:[#allocation14 + $0x2c] sm:$0xf]
      %v562 = vld [vmem:[#allocation14 + $0x30] sm:$0xf]
      %v563 = vld [vmem:[#allocation14 + $0x34] sm:$0xf]
      %v564 = vld [vmem:[#allocation14 + $0x38] sm:$0xf]
      %v565 = vld [vmem:[#allocation14 + $0x3c] sm:$0xf]
      %v566 = vld [vmem:[#allocation15] sm:$0xf]
      %v567 = vld [vmem:[#allocation15 + $0x4] sm:$0xf]
      %v568 = vld [vmem:[#allocation15 + $0x8] sm:$0xf]
      %v569 = vld [vmem:[#allocation15 + $0xc] sm:$0xf]
      %v570 = vld [vmem:[#allocation15 + $0x10] sm:$0xf]
      %v571 = vld [vmem:[#allocation15 + $0x14] sm:$0xf]
      %v572 = vld [vmem:[#allocation15 + $0x18] sm:$0xf]
      %v573 = vld [vmem:[#allocation15 + $0x1c] sm:$0xf]
      %v574 = vld [vmem:[#allocation15 + $0x20] sm:$0xf]
      %v575 = vld [vmem:[#allocation15 + $0x24] sm:$0xf]
      %v576 = vld [vmem:[#allocation15 + $0x28] sm:$0xf]
      %v577 = vld [vmem:[#allocation15 + $0x2c] sm:$0xf]
      %v578 = vld [vmem:[#allocation15 + $0x30] sm:$0xf]
      %v579 = vld [vmem:[#allocation15 + $0x34] sm:$0xf]
      %v580 = vld [vmem:[#allocation15 + $0x38] sm:$0xf]
      %v581 = vld [vmem:[#allocation15 + $0x3c] sm:$0xf]
      %v598 = vunpack.c.l.b16 %v566
      %v599 = vunpack.c.l.b16 %v567
      %v600 = vunpack.c.l.b16 %v568
      %v601 = vunpack.c.l.b16 %v569
      %v602 = vunpack.c.l.b16 %v570
      %v603 = vunpack.c.l.b16 %v571
      %v604 = vunpack.c.l.b16 %v572
      %v605 = vunpack.c.l.b16 %v573
      %v606 = vunpack.c.l.b16 %v574
      %v607 = vunpack.c.l.b16 %v575
      %v608 = vunpack.c.l.b16 %v576
      %v609 = vunpack.c.l.b16 %v577
      %v610 = vunpack.c.l.b16 %v578
      %v611 = vunpack.c.l.b16 %v579
      %v612 = vunpack.c.l.b16 %v580
      %v613 = vunpack.c.l.b16 %v581
      %v614 = vpack.c.b16 %v599, %v598
      %v615 = vpack.c.b16 %v601, %v600
      %v616 = vpack.c.b16 %v603, %v602
      %v617 = vpack.c.b16 %v605, %v604
      %v618 = vpack.c.b16 %v607, %v606
      %v619 = vpack.c.b16 %v609, %v608
      %v620 = vpack.c.b16 %v611, %v610
      %v621 = vpack.c.b16 %v613, %v612
      %630 = vmatprep.subr.bf16.mxu0 0
      %631 = vmatpush1.bf16.msra.mxu0 %v614
      %632 = vmatprep.subr.bf16.mxu0 0
      %633 = vmatpush1.bf16.msra.mxu0 %v615
      %634 = vmatprep.subr.bf16.mxu0 0
      %635 = vmatpush1.bf16.msra.mxu0 %v616
      %636 = vmatprep.subr.bf16.mxu0 0
      %637 = vmatpush1.bf16.msra.mxu0 %v617
      %638 = vmatprep.subr.bf16.mxu0 0
      %639 = vmatpush1.bf16.msra.mxu0 %v618
      %640 = vmatprep.subr.bf16.mxu0 0
      %641 = vmatpush1.bf16.msra.mxu0 %v619
      %642 = vmatprep.subr.bf16.mxu0 0
      %643 = vmatpush1.bf16.msra.mxu0 %v620
      %644 = vmatprep.subr.bf16.mxu0 0
      %645 = vmatpush1.bf16.msra.mxu0 %v621
      %646 = vmatprep.subr.bf16.mxu0 0
      %647 = vmatpush1.bf16.msra.mxu0 0
      %648 = vmatprep.subr.bf16.mxu0 0
      %649 = vmatpush1.bf16.msra.mxu0 0
      %650 = vmatprep.subr.bf16.mxu0 0
      %651 = vmatpush1.bf16.msra.mxu0 0
      %652 = vmatprep.subr.bf16.mxu0 0
      %653 = vmatpush1.bf16.msra.mxu0 0
      %654 = vmatprep.subr.bf16.mxu0 0
      %655 = vmatpush1.bf16.msra.mxu0 0
      %656 = vmatprep.subr.bf16.mxu0 0
      %657 = vmatpush1.bf16.msra.mxu0 0
      %658 = vmatprep.subr.bf16.mxu0 0
      %659 = vmatpush1.bf16.msra.mxu0 0
      %660 = vmatprep.subr.bf16.mxu0 0
      %661 = vmatpush1.bf16.msra.mxu0 0
      %662 = vmatprep.mubr.bf16.mxu0 0
      %663 = vmatmul.mubr.bf16.gmra.mrb[0].mxu0 %v526
      %v664 = vpop.f32.mrb[0].mxu0
      %v665 = vadd.f32 0.0, %v664
      %v666 = vpop.f32.mrb[0].mxu0
      %v667 = vpop.f32.mrb[0].mxu0
      %v668 = vadd.f32 0.0, %v667
      %v669 = vpop.f32.mrb[0].mxu0
      %670 = vmatprep.mubr.bf16.mxu0 0
      %671 = vmatmul.mubr.bf16.gmra.mrb[0].mxu0 %v527
      %v672 = vpop.f32.mrb[0].mxu0
      %v673 = vadd.f32 0.0, %v672
      %v674 = vpop.f32.mrb[0].mxu0
      %v675 = vpop.f32.mrb[0].mxu0
      %v676 = vadd.f32 0.0, %v675
      %v677 = vpop.f32.mrb[0].mxu0
      %678 = vmatprep.mubr.bf16.mxu0 0
      %679 = vmatmul.mubr.bf16.gmra.mrb[0].mxu0 %v528
      %v680 = vpop.f32.mrb[0].mxu0
      %v681 = vadd.f32 0.0, %v680
      %v682 = vpop.f32.mrb[0].mxu0
      %v683 = vpop.f32.mrb[0].mxu0
      %v684 = vadd.f32 0.0, %v683
      %v685 = vpop.f32.mrb[0].mxu0
      %686 = vmatprep.mubr.bf16.mxu0 0
      %687 = vmatmul.mubr.bf16.gmra.mrb[0].mxu0 %v529
      %v688 = vpop.f32.mrb[0].mxu0
      %v689 = vadd.f32 0.0, %v688
      %v690 = vpop.f32.mrb[0].mxu0
      %v691 = vpop.f32.mrb[0].mxu0
      %v692 = vadd.f32 0.0, %v691
      %v693 = vpop.f32.mrb[0].mxu0
      %694 = vmatprep.mubr.bf16.mxu0 0
      %695 = vmatmul.mubr.bf16.gmra.mrb[0].mxu0 %v530
      %v696 = vpop.f32.mrb[0].mxu0
      %v697 = vadd.f32 0.0, %v696
      %v698 = vpop.f32.mrb[0].mxu0
      %v699 = vpop.f32.mrb[0].mxu0
      %v700 = vadd.f32 0.0, %v699
      %v701 = vpop.f32.mrb[0].mxu0
      %702 = vmatprep.mubr.bf16.mxu0 0
      %703 = vmatmul.mubr.bf16.gmra.mrb[0].mxu0 %v531
      %v704 = vpop.f32.mrb[0].mxu0
      %v705 = vadd.f32 0.0, %v704
      %v706 = vpop.f32.mrb[0].mxu0
      %v707 = vpop.f32.mrb[0].mxu0
      %v708 = vadd.f32 0.0, %v707
      %v709 = vpop.f32.mrb[0].mxu0
      %710 = vmatprep.mubr.bf16.mxu0 0
      %711 = vmatmul.mubr.bf16.gmra.mrb[0].mxu0 %v532
      %v712 = vpop.f32.mrb[0].mxu0
      %v713 = vadd.f32 0.0, %v712
      %v714 = vpop.f32.mrb[0].mxu0
      %v715 = vpop.f32.mrb[0].mxu0
      %v716 = vadd.f32 0.0, %v715
      %v717 = vpop.f32.mrb[0].mxu0
      %718 = vmatprep.mubr.bf16.mxu0 0
      %719 = vmatmul.mubr.bf16.gmra.mrb[0].mxu0 %v533
      %v720 = vpop.f32.mrb[0].mxu0
      %v721 = vadd.f32 0.0, %v720
      %v722 = vpop.f32.mrb[0].mxu0
      %v723 = vpop.f32.mrb[0].mxu0
      %v724 = vadd.f32 0.0, %v723
      %v725 = vpop.f32.mrb[0].mxu0
      %726 = vdwg.mxu0
      %v743 = vunpack.c.l.b16 %v534
      %v744 = vunpack.c.l.b16 %v535
      %v745 = vunpack.c.l.b16 %v536
      %v746 = vunpack.c.l.b16 %v537
      %v747 = vunpack.c.l.b16 %v538
      %v748 = vunpack.c.l.b16 %v539
      %v749 = vunpack.c.l.b16 %v540
      %v750 = vunpack.c.l.b16 %v541
      %v751 = vunpack.c.l.b16 %v542
      %v752 = vunpack.c.l.b16 %v543
      %v753 = vunpack.c.l.b16 %v544
      %v754 = vunpack.c.l.b16 %v545
      %v755 = vunpack.c.l.b16 %v546
      %v756 = vunpack.c.l.b16 %v547
      %v757 = vunpack.c.l.b16 %v548
      %v758 = vunpack.c.l.b16 %v549
      %v759 = vpack.c.b16 %v744, %v743
      %v760 = vpack.c.b16 %v746, %v745
      %v761 = vpack.c.b16 %v748, %v747
      %v762 = vpack.c.b16 %v750, %v749
      %v763 = vpack.c.b16 %v752, %v751
      %v764 = vpack.c.b16 %v754, %v753
      %v765 = vpack.c.b16 %v756, %v755
      %v766 = vpack.c.b16 %v758, %v757
      %v791 = vunpack.c.l.b16 %v550
      %v792 = vunpack.c.l.b16 %v551
      %v793 = vunpack.c.l.b16 %v552
      %v794 = vunpack.c.l.b16 %v553
      %v795 = vunpack.c.l.b16 %v554
      %v796 = vunpack.c.l.b16 %v555
      %v797 = vunpack.c.l.b16 %v556
      %v798 = vunpack.c.l.b16 %v557
      %v799 = vunpack.c.l.b16 %v558
      %v800 = vunpack.c.l.b16 %v559
      %v801 = vunpack.c.l.b16 %v560
      %v802 = vunpack.c.l.b16 %v561
      %v803 = vunpack.c.l.b16 %v562
      %v804 = vunpack.c.l.b16 %v563
      %v805 = vunpack.c.l.b16 %v564
      %v806 = vunpack.c.l.b16 %v565
      %v807 = vpack.c.b16 %v792, %v791
      %v808 = vpack.c.b16 %v794, %v793
      %v809 = vpack.c.b16 %v796, %v795
      %v810 = vpack.c.b16 %v798, %v797
      %v811 = vpack.c.b16 %v800, %v799
      %v812 = vpack.c.b16 %v802, %v801
      %v813 = vpack.c.b16 %v804, %v803
      %v814 = vpack.c.b16 %v806, %v805
      %823 = vmatprep.subr.bf16.mxu0 0
      %824 = vmatpush1.bf16.msra.mxu0 %v807
      %825 = vmatprep.subr.bf16.mxu0 0
      %826 = vmatpush1.bf16.msra.mxu0 %v808
      %827 = vmatprep.subr.bf16.mxu0 0
      %828 = vmatpush1.bf16.msra.mxu0 %v809
      %829 = vmatprep.subr.bf16.mxu0 0
      %830 = vmatpush1.bf16.msra.mxu0 %v810
      %831 = vmatprep.subr.bf16.mxu0 0
      %832 = vmatpush1.bf16.msra.mxu0 %v811
      %833 = vmatprep.subr.bf16.mxu0 0
      %834 = vmatpush1.bf16.msra.mxu0 %v812
      %835 = vmatprep.subr.bf16.mxu0 0
      %836 = vmatpush1.bf16.msra.mxu0 %v813
      %837 = vmatprep.subr.bf16.mxu0 0
      %838 = vmatpush1.bf16.msra.mxu0 %v814
      %839 = vmatprep.subr.bf16.mxu0 0
      %840 = vmatpush1.bf16.msra.mxu0 0
      %841 = vmatprep.subr.bf16.mxu0 0
      %842 = vmatpush1.bf16.msra.mxu0 0
      %843 = vmatprep.subr.bf16.mxu0 0
      %844 = vmatpush1.bf16.msra.mxu0 0
      %845 = vmatprep.subr.bf16.mxu0 0
      %846 = vmatpush1.bf16.msra.mxu0 0
      %847 = vmatprep.subr.bf16.mxu0 0
      %848 = vmatpush1.bf16.msra.mxu0 0
      %849 = vmatprep.subr.bf16.mxu0 0
      %850 = vmatpush1.bf16.msra.mxu0 0
      %851 = vmatprep.subr.bf16.mxu0 0
      %852 = vmatpush1.bf16.msra.mxu0 0
      %853 = vmatprep.subr.bf16.mxu0 0
      %854 = vmatpush1.bf16.msra.mxu0 0
      %855 = vmatprep.mubr.bf16.mxu0 0
      %856 = vmatmul.mubr.bf16.gmra.mrb[0].mxu0 %v759
      %v857 = vpop.f32.mrb[0].mxu0
      %v858 = vadd.f32 %v665, %v857
      %v859 = vpop.f32.mrb[0].mxu0
      %v860 = vpop.f32.mrb[0].mxu0
      %v861 = vadd.f32 %v668, %v860
      %v862 = vpop.f32.mrb[0].mxu0
      %863 = vmatprep.mubr.bf16.mxu0 0
      %864 = vmatmul.mubr.bf16.gmra.mrb[0].mxu0 %v760
      %v865 = vpop.f32.mrb[0].mxu0
      %v866 = vadd.f32 %v673, %v865
      %v867 = vpop.f32.mrb[0].mxu0
      %v868 = vpop.f32.mrb[0].mxu0
      %v869 = vadd.f32 %v676, %v868
      %v870 = vpop.f32.mrb[0].mxu0
      %871 = vmatprep.mubr.bf16.mxu0 0
      %872 = vmatmul.mubr.bf16.gmra.mrb[0].mxu0 %v761
      %v873 = vpop.f32.mrb[0].mxu0
      %v874 = vadd.f32 %v681, %v873
      %v875 = vpop.f32.mrb[0].mxu0
      %v876 = vpop.f32.mrb[0].mxu0
      %v877 = vadd.f32 %v684, %v876
      %v878 = vpop.f32.mrb[0].mxu0
      %879 = vmatprep.mubr.bf16.mxu0 0
      %880 = vmatmul.mubr.bf16.gmra.mrb[0].mxu0 %v762
      %v881 = vpop.f32.mrb[0].mxu0
      %v882 = vadd.f32 %v689, %v881
      %v883 = vpop.f32.mrb[0].mxu0
      %v884 = vpop.f32.mrb[0].mxu0
      %v885 = vadd.f32 %v692, %v884
      %v886 = vpop.f32.mrb[0].mxu0
      %887 = vmatprep.mubr.bf16.mxu0 0
      %888 = vmatmul.mubr.bf16.gmra.mrb[0].mxu0 %v763
      %v889 = vpop.f32.mrb[0].mxu0
      %v890 = vadd.f32 %v697, %v889
      %v891 = vpop.f32.mrb[0].mxu0
      %v892 = vpop.f32.mrb[0].mxu0
      %v893 = vadd.f32 %v700, %v892
      %v894 = vpop.f32.mrb[0].mxu0
      %895 = vmatprep.mubr.bf16.mxu0 0
      %896 = vmatmul.mubr.bf16.gmra.mrb[0].mxu0 %v764
      %v897 = vpop.f32.mrb[0].mxu0
      %v898 = vadd.f32 %v705, %v897
      %v899 = vpop.f32.mrb[0].mxu0
      %v900 = vpop.f32.mrb[0].mxu0
      %v901 = vadd.f32 %v708, %v900
      %v902 = vpop.f32.mrb[0].mxu0
      %903 = vmatprep.mubr.bf16.mxu0 0
      %904 = vmatmul.mubr.bf16.gmra.mrb[0].mxu0 %v765
      %v905 = vpop.f32.mrb[0].mxu0
      %v906 = vadd.f32 %v713, %v905
      %v907 = vpop.f32.mrb[0].mxu0
      %v908 = vpop.f32.mrb[0].mxu0
      %v909 = vadd.f32 %v716, %v908
      %v910 = vpop.f32.mrb[0].mxu0
      %911 = vmatprep.mubr.bf16.mxu0 0
      %912 = vmatmul.mubr.bf16.gmra.mrb[0].mxu0 %v766
      %v913 = vpop.f32.mrb[0].mxu0
      %v914 = vadd.f32 %v721, %v913
      %v915 = vpop.f32.mrb[0].mxu0
      %v916 = vpop.f32.mrb[0].mxu0
      %v917 = vadd.f32 %v724, %v916
      %v918 = vpop.f32.mrb[0].mxu0
      %919 = vdwg.mxu0
      %v920 = vld [vmem:[#allocation17] sm:$0x1]
      %v922 = vlaneseq
      %v923 = vshrl.u32 %v922, 7
      %v924 = vsub.s32 0, %v923
      %v925 = vrot.slane %v920, %v924
      %v927 = vadd.f32 %v858, %v925
      %v928 = vadd.f32 %v861, %v925
      %v929 = vadd.f32 %v866, %v925
      %v930 = vadd.f32 %v869, %v925
      %v931 = vadd.f32 %v874, %v925
      %v932 = vadd.f32 %v877, %v925
      %v933 = vadd.f32 %v882, %v925
      %v934 = vadd.f32 %v885, %v925
      %v935 = vadd.f32 %v890, %v925
      %v936 = vadd.f32 %v893, %v925
      %v937 = vadd.f32 %v898, %v925
      %v938 = vadd.f32 %v901, %v925
      %v939 = vadd.f32 %v906, %v925
      %v940 = vadd.f32 %v909, %v925
      %v941 = vadd.f32 %v914, %v925
      %v942 = vadd.f32 %v917, %v925
      %v943 = vld [vmem:[#allocation11] sm:$0xff]
      %v944 = vld [vmem:[#allocation11 + $0x8] sm:$0xff]
      %v945 = vld [vmem:[#allocation11 + $0x10] sm:$0xff]
      %v946 = vld [vmem:[#allocation11 + $0x18] sm:$0xff]
      %v947 = vld [vmem:[#allocation11 + $0x20] sm:$0xff]
      %v948 = vld [vmem:[#allocation11 + $0x28] sm:$0xff]
      %v949 = vld [vmem:[#allocation11 + $0x30] sm:$0xff]
      %v950 = vld [vmem:[#allocation11 + $0x38] sm:$0xff]
      %v951 = vld [vmem:[#allocation11 + $0x40] sm:$0xff]
      %v952 = vld [vmem:[#allocation11 + $0x48] sm:$0xff]
      %v953 = vld [vmem:[#allocation11 + $0x50] sm:$0xff]
      %v954 = vld [vmem:[#allocation11 + $0x58] sm:$0xff]
      %v955 = vld [vmem:[#allocation11 + $0x60] sm:$0xff]
      %v956 = vld [vmem:[#allocation11 + $0x68] sm:$0xff]
      %v957 = vld [vmem:[#allocation11 + $0x70] sm:$0xff]
      %v958 = vld [vmem:[#allocation11 + $0x78] sm:$0xff]
      %v959 = vmul.f32 %v927, %v927
      %v960 = vmul.f32 %v928, %v928
      %v961 = vmul.f32 %v929, %v929
      %v962 = vmul.f32 %v930, %v930
      %v963 = vmul.f32 %v931, %v931
      %v964 = vmul.f32 %v932, %v932
      %v965 = vmul.f32 %v933, %v933
      %v966 = vmul.f32 %v934, %v934
      %v967 = vmul.f32 %v935, %v935
      %v968 = vmul.f32 %v936, %v936
      %v969 = vmul.f32 %v937, %v937
      %v970 = vmul.f32 %v938, %v938
      %v971 = vmul.f32 %v939, %v939
      %v972 = vmul.f32 %v940, %v940
      %v973 = vmul.f32 %v941, %v941
      %v974 = vmul.f32 %v942, %v942
      %975 = vadd.xlane.f32.xlu0 %v959
      %v976 = vpop.xlane.xlu0 %975
      %977 = vadd.xlane.f32.xlu0 %v960
      %v978 = vpop.xlane.xlu0 %977
      %979 = vadd.xlane.f32.xlu0 %v961
      %v980 = vpop.xlane.xlu0 %979
      %981 = vadd.xlane.f32.xlu0 %v962
      %v982 = vpop.xlane.xlu0 %981
      %983 = vadd.xlane.f32.xlu0 %v963
      %v984 = vpop.xlane.xlu0 %983
      %985 = vadd.xlane.f32.xlu0 %v964
      %v986 = vpop.xlane.xlu0 %985
      %987 = vadd.xlane.f32.xlu0 %v965
      %v988 = vpop.xlane.xlu0 %987
      %989 = vadd.xlane.f32.xlu0 %v966
      %v990 = vpop.xlane.xlu0 %989
      %991 = vadd.xlane.f32.xlu0 %v967
      %v992 = vpop.xlane.xlu0 %991
      %993 = vadd.xlane.f32.xlu0 %v968
      %v994 = vpop.xlane.xlu0 %993
      %995 = vadd.xlane.f32.xlu0 %v969
      %v996 = vpop.xlane.xlu0 %995
      %997 = vadd.xlane.f32.xlu0 %v970
      %v998 = vpop.xlane.xlu0 %997
      %999 = vadd.xlane.f32.xlu0 %v971
      %v1000 = vpop.xlane.xlu0 %999
      %1001 = vadd.xlane.f32.xlu0 %v972
      %v1002 = vpop.xlane.xlu0 %1001
      %1003 = vadd.xlane.f32.xlu0 %v973
      %v1004 = vpop.xlane.xlu0 %1003
      %1005 = vadd.xlane.f32.xlu0 %v974
      %v1006 = vpop.xlane.xlu0 %1005
      %v1007 = vmax.f32 %v976, 1e-24
      %v1008 = vmax.f32 %v978, 1e-24
      %v1009 = vmax.f32 %v980, 1e-24
      %v1010 = vmax.f32 %v982, 1e-24
      %v1011 = vmax.f32 %v984, 1e-24
      %v1012 = vmax.f32 %v986, 1e-24
      %v1013 = vmax.f32 %v988, 1e-24
      %v1014 = vmax.f32 %v990, 1e-24
      %v1015 = vmax.f32 %v992, 1e-24
      %v1016 = vmax.f32 %v994, 1e-24
      %v1017 = vmax.f32 %v996, 1e-24
      %v1018 = vmax.f32 %v998, 1e-24
      %v1019 = vmax.f32 %v1000, 1e-24
      %v1020 = vmax.f32 %v1002, 1e-24
      %v1021 = vmax.f32 %v1004, 1e-24
      %v1022 = vmax.f32 %v1006, 1e-24
      %v1023 = vrsqrt.pop %v1007
      %v1024 = vrsqrt.pop %v1008
      %v1025 = vrsqrt.pop %v1009
      %v1026 = vrsqrt.pop %v1010
      %v1027 = vrsqrt.pop %v1011
      %v1028 = vrsqrt.pop %v1012
      %v1029 = vrsqrt.pop %v1013
      %v1030 = vrsqrt.pop %v1014
      %v1031 = vrsqrt.pop %v1015
      %v1032 = vrsqrt.pop %v1016
      %v1033 = vrsqrt.pop %v1017
      %v1034 = vrsqrt.pop %v1018
      %v1035 = vrsqrt.pop %v1019
      %v1036 = vrsqrt.pop %v1020
      %v1037 = vrsqrt.pop %v1021
      %v1038 = vrsqrt.pop %v1022
      %v1039 = vmul.f32 %v927, %v1023
      %v1040 = vmul.f32 %v928, %v1024
      %v1041 = vmul.f32 %v929, %v1025
      %v1042 = vmul.f32 %v930, %v1026
      %v1043 = vmul.f32 %v931, %v1027
      %v1044 = vmul.f32 %v932, %v1028
      %v1045 = vmul.f32 %v933, %v1029
      %v1046 = vmul.f32 %v934, %v1030
      %v1047 = vmul.f32 %v935, %v1031
      %v1048 = vmul.f32 %v936, %v1032
      %v1049 = vmul.f32 %v937, %v1033
      %v1050 = vmul.f32 %v938, %v1034
      %v1051 = vmul.f32 %v939, %v1035
      %v1052 = vmul.f32 %v940, %v1036
      %v1053 = vmul.f32 %v941, %v1037
      %v1054 = vmul.f32 %v942, %v1038
      %v1055 = vmul.f32 %v943, %v943
      %v1056 = vmul.f32 %v944, %v944
      %v1057 = vmul.f32 %v945, %v945
      %v1058 = vmul.f32 %v946, %v946
      %v1059 = vmul.f32 %v947, %v947
      %v1060 = vmul.f32 %v948, %v948
      %v1061 = vmul.f32 %v949, %v949
      %v1062 = vmul.f32 %v950, %v950
      %v1063 = vmul.f32 %v951, %v951
      %v1064 = vmul.f32 %v952, %v952
      %v1065 = vmul.f32 %v953, %v953
      %v1066 = vmul.f32 %v954, %v954
      %v1067 = vmul.f32 %v955, %v955
      %v1068 = vmul.f32 %v956, %v956
      %v1069 = vmul.f32 %v957, %v957
      %v1070 = vmul.f32 %v958, %v958
      %1071 = vadd.xlane.f32.xlu0 %v1055
      %v1072 = vpop.xlane.xlu0 %1071
      %1073 = vadd.xlane.f32.xlu0 %v1056
      %v1074 = vpop.xlane.xlu0 %1073
      %1075 = vadd.xlane.f32.xlu0 %v1057
      %v1076 = vpop.xlane.xlu0 %1075
      %1077 = vadd.xlane.f32.xlu0 %v1058
      %v1078 = vpop.xlane.xlu0 %1077
      %1079 = vadd.xlane.f32.xlu0 %v1059
      %v1080 = vpop.xlane.xlu0 %1079
      %1081 = vadd.xlane.f32.xlu0 %v1060
      %v1082 = vpop.xlane.xlu0 %1081
      %1083 = vadd.xlane.f32.xlu0 %v1061
      %v1084 = vpop.xlane.xlu0 %1083
      %1085 = vadd.xlane.f32.xlu0 %v1062
      %v1086 = vpop.xlane.xlu0 %1085
      %1087 = vadd.xlane.f32.xlu0 %v1063
      %v1088 = vpop.xlane.xlu0 %1087
      %1089 = vadd.xlane.f32.xlu0 %v1064
      %v1090 = vpop.xlane.xlu0 %1089
      %1091 = vadd.xlane.f32.xlu0 %v1065
      %v1092 = vpop.xlane.xlu0 %1091
      %1093 = vadd.xlane.f32.xlu0 %v1066
      %v1094 = vpop.xlane.xlu0 %1093
      %1095 = vadd.xlane.f32.xlu0 %v1067
      %v1096 = vpop.xlane.xlu0 %1095
      %1097 = vadd.xlane.f32.xlu0 %v1068
      %v1098 = vpop.xlane.xlu0 %1097
      %1099 = vadd.xlane.f32.xlu0 %v1069
      %v1100 = vpop.xlane.xlu0 %1099
      %1101 = vadd.xlane.f32.xlu0 %v1070
      %v1102 = vpop.xlane.xlu0 %1101
      %v1103 = vmax.f32 %v1072, 1e-24
      %v1104 = vmax.f32 %v1074, 1e-24
      %v1105 = vmax.f32 %v1076, 1e-24
      %v1106 = vmax.f32 %v1078, 1e-24
      %v1107 = vmax.f32 %v1080, 1e-24
      %v1108 = vmax.f32 %v1082, 1e-24
      %v1109 = vmax.f32 %v1084, 1e-24
      %v1110 = vmax.f32 %v1086, 1e-24
      %v1111 = vmax.f32 %v1088, 1e-24
      %v1112 = vmax.f32 %v1090, 1e-24
      %v1113 = vmax.f32 %v1092, 1e-24
      %v1114 = vmax.f32 %v1094, 1e-24
      %v1115 = vmax.f32 %v1096, 1e-24
      %v1116 = vmax.f32 %v1098, 1e-24
      %v1117 = vmax.f32 %v1100, 1e-24
      %v1118 = vmax.f32 %v1102, 1e-24
      %v1119 = vrsqrt.pop %v1103
      %v1120 = vrsqrt.pop %v1104
      %v1121 = vrsqrt.pop %v1105
      %v1122 = vrsqrt.pop %v1106
      %v1123 = vrsqrt.pop %v1107
      %v1124 = vrsqrt.pop %v1108
      %v1125 = vrsqrt.pop %v1109
      %v1126 = vrsqrt.pop %v1110
      %v1127 = vrsqrt.pop %v1111
      %v1128 = vrsqrt.pop %v1112
      %v1129 = vrsqrt.pop %v1113
      %v1130 = vrsqrt.pop %v1114
      %v1131 = vrsqrt.pop %v1115
      %v1132 = vrsqrt.pop %v1116
      %v1133 = vrsqrt.pop %v1117
      %v1134 = vrsqrt.pop %v1118
      %v1135 = vmul.f32 %v943, %v1119
      %v1136 = vmul.f32 %v944, %v1120
      %v1137 = vmul.f32 %v945, %v1121
      %v1138 = vmul.f32 %v946, %v1122
      %v1139 = vmul.f32 %v947, %v1123
      %v1140 = vmul.f32 %v948, %v1124
      %v1141 = vmul.f32 %v949, %v1125
      %v1142 = vmul.f32 %v950, %v1126
      %v1143 = vmul.f32 %v951, %v1127
      %v1144 = vmul.f32 %v952, %v1128
      %v1145 = vmul.f32 %v953, %v1129
      %v1146 = vmul.f32 %v954, %v1130
      %v1147 = vmul.f32 %v955, %v1131
      %v1148 = vmul.f32 %v956, %v1132
      %v1149 = vmul.f32 %v957, %v1133
      %v1150 = vmul.f32 %v958, %v1134
      %v1151 = vmul.f32 %v1039, %v1135
      %v1152 = vmul.f32 %v1040, %v1136
      %v1153 = vmul.f32 %v1041, %v1137
      %v1154 = vmul.f32 %v1042, %v1138
      %v1155 = vmul.f32 %v1043, %v1139
      %v1156 = vmul.f32 %v1044, %v1140
      %v1157 = vmul.f32 %v1045, %v1141
      %v1158 = vmul.f32 %v1046, %v1142
      %v1159 = vmul.f32 %v1047, %v1143
      %v1160 = vmul.f32 %v1048, %v1144
      %v1161 = vmul.f32 %v1049, %v1145
      %v1162 = vmul.f32 %v1050, %v1146
      %v1163 = vmul.f32 %v1051, %v1147
      %v1164 = vmul.f32 %v1052, %v1148
      %v1165 = vmul.f32 %v1053, %v1149
      %v1166 = vmul.f32 %v1054, %v1150
      %1167 = vadd.xlane.f32.xlu0 %v1151
      %v1168 = vpop.xlane.xlu0 %1167
      %1169 = vadd.xlane.f32.xlu0 %v1152
      %v1170 = vpop.xlane.xlu0 %1169
      %1171 = vadd.xlane.f32.xlu0 %v1153
      %v1172 = vpop.xlane.xlu0 %1171
      %1173 = vadd.xlane.f32.xlu0 %v1154
      %v1174 = vpop.xlane.xlu0 %1173
      %1175 = vadd.xlane.f32.xlu0 %v1155
      %v1176 = vpop.xlane.xlu0 %1175
      %1177 = vadd.xlane.f32.xlu0 %v1156
      %v1178 = vpop.xlane.xlu0 %1177
      %1179 = vadd.xlane.f32.xlu0 %v1157
      %v1180 = vpop.xlane.xlu0 %1179
      %1181 = vadd.xlane.f32.xlu0 %v1158
      %v1182 = vpop.xlane.xlu0 %1181
      %1183 = vadd.xlane.f32.xlu0 %v1159
      %v1184 = vpop.xlane.xlu0 %1183
      %1185 = vadd.xlane.f32.xlu0 %v1160
      %v1186 = vpop.xlane.xlu0 %1185
      %1187 = vadd.xlane.f32.xlu0 %v1161
      %v1188 = vpop.xlane.xlu0 %1187
      %1189 = vadd.xlane.f32.xlu0 %v1162
      %v1190 = vpop.xlane.xlu0 %1189
      %1191 = vadd.xlane.f32.xlu0 %v1163
      %v1192 = vpop.xlane.xlu0 %1191
      %1193 = vadd.xlane.f32.xlu0 %v1164
      %v1194 = vpop.xlane.xlu0 %1193
      %1195 = vadd.xlane.f32.xlu0 %v1165
      %v1196 = vpop.xlane.xlu0 %1195
      %1197 = vadd.xlane.f32.xlu0 %v1166
      %v1198 = vpop.xlane.xlu0 %1197
      %v1199 = vsub.f32 1.0, %v1168
      %v1200 = vsub.f32 1.0, %v1170
      %v1201 = vsub.f32 1.0, %v1172
      %v1202 = vsub.f32 1.0, %v1174
      %v1203 = vsub.f32 1.0, %v1176
      %v1204 = vsub.f32 1.0, %v1178
      %v1205 = vsub.f32 1.0, %v1180
      %v1206 = vsub.f32 1.0, %v1182
      %v1207 = vsub.f32 1.0, %v1184
      %v1208 = vsub.f32 1.0, %v1186
      %v1209 = vsub.f32 1.0, %v1188
      %v1210 = vsub.f32 1.0, %v1190
      %v1211 = vsub.f32 1.0, %v1192
      %v1212 = vsub.f32 1.0, %v1194
      %v1213 = vsub.f32 1.0, %v1196
      %v1214 = vsub.f32 1.0, %v1198
      %v1215 = vmul.f32 %v1199, %v1199
      %v1216 = vmul.f32 %v1200, %v1200
      %v1217 = vmul.f32 %v1201, %v1201
      %v1218 = vmul.f32 %v1202, %v1202
      %v1219 = vmul.f32 %v1203, %v1203
      %v1220 = vmul.f32 %v1204, %v1204
      %v1221 = vmul.f32 %v1205, %v1205
      %v1222 = vmul.f32 %v1206, %v1206
      %v1223 = vmul.f32 %v1207, %v1207
      %v1224 = vmul.f32 %v1208, %v1208
      %v1225 = vmul.f32 %v1209, %v1209
      %v1226 = vmul.f32 %v1210, %v1210
      %v1227 = vmul.f32 %v1211, %v1211
      %v1228 = vmul.f32 %v1212, %v1212
      %v1229 = vmul.f32 %v1213, %v1213
      %v1230 = vmul.f32 %v1214, %v1214
      %v1231 = vld [vmem:[#allocation12] sm:$0xff]
      %v1232 = vld [vmem:[#allocation12 + $0x8] sm:$0xff]
      %v1233 = vld [vmem:[#allocation12 + $0x10] sm:$0xff]
      %v1234 = vld [vmem:[#allocation12 + $0x18] sm:$0xff]
      %v1235 = vld [vmem:[#allocation12 + $0x20] sm:$0xff]
      %v1236 = vld [vmem:[#allocation12 + $0x28] sm:$0xff]
      %v1237 = vld [vmem:[#allocation12 + $0x30] sm:$0xff]
      %v1238 = vld [vmem:[#allocation12 + $0x38] sm:$0xff]
      %v1239 = vld [vmem:[#allocation12 + $0x40] sm:$0xff]
      %v1240 = vld [vmem:[#allocation12 + $0x48] sm:$0xff]
      %v1241 = vld [vmem:[#allocation12 + $0x50] sm:$0xff]
      %v1242 = vld [vmem:[#allocation12 + $0x58] sm:$0xff]
      %v1243 = vld [vmem:[#allocation12 + $0x60] sm:$0xff]
      %v1244 = vld [vmem:[#allocation12 + $0x68] sm:$0xff]
      %v1245 = vld [vmem:[#allocation12 + $0x70] sm:$0xff]
      %v1246 = vld [vmem:[#allocation12 + $0x78] sm:$0xff]
      %v1247 = vmul.f32 %v1215, %v1231
      %v1248 = vmul.f32 %v1216, %v1232
      %v1249 = vmul.f32 %v1217, %v1233
      %v1250 = vmul.f32 %v1218, %v1234
      %v1251 = vmul.f32 %v1219, %v1235
      %v1252 = vmul.f32 %v1220, %v1236
      %v1253 = vmul.f32 %v1221, %v1237
      %v1254 = vmul.f32 %v1222, %v1238
      %v1255 = vmul.f32 %v1223, %v1239
      %v1256 = vmul.f32 %v1224, %v1240
      %v1257 = vmul.f32 %v1225, %v1241
      %v1258 = vmul.f32 %v1226, %v1242
      %v1259 = vmul.f32 %v1227, %v1243
      %v1260 = vmul.f32 %v1228, %v1244
      %v1261 = vmul.f32 %v1229, %v1245
      %v1262 = vmul.f32 %v1230, %v1246
      %vm1263 = vcmask 7168
      %v1264 = vsel %vm1263, %v1247, 0.0
      %v1265 = vsel %vm1263, %v1248, 0.0
      %v1266 = vadd.f32 %v1264, %v1265
      %v1267 = vsel %vm1263, %v1249, 0.0
      %v1268 = vadd.f32 %v1266, %v1267
      %v1269 = vsel %vm1263, %v1250, 0.0
      %v1270 = vadd.f32 %v1268, %v1269
      %v1271 = vsel %vm1263, %v1251, 0.0
      %v1272 = vadd.f32 %v1270, %v1271
      %v1273 = vsel %vm1263, %v1252, 0.0
      %v1274 = vadd.f32 %v1272, %v1273
      %v1275 = vsel %vm1263, %v1253, 0.0
      %v1276 = vadd.f32 %v1274, %v1275
      %v1277 = vsel %vm1263, %v1254, 0.0
      %v1278 = vadd.f32 %v1276, %v1277
      %v1279 = vsel %vm1263, %v1255, 0.0
      %v1280 = vadd.f32 %v1278, %v1279
      %v1281 = vsel %vm1263, %v1256, 0.0
      %v1282 = vadd.f32 %v1280, %v1281
      %v1283 = vsel %vm1263, %v1257, 0.0
      %v1284 = vadd.f32 %v1282, %v1283
      %v1285 = vsel %vm1263, %v1258, 0.0
      %v1286 = vadd.f32 %v1284, %v1285
      %v1287 = vsel %vm1263, %v1259, 0.0
      %v1288 = vadd.f32 %v1286, %v1287
      %v1289 = vsel %vm1263, %v1260, 0.0
      %v1290 = vadd.f32 %v1288, %v1289
      %v1291 = vsel %vm1263, %v1261, 0.0
      %v1292 = vadd.f32 %v1290, %v1291
      %v1293 = vsel %vm1263, %v1262, 0.0
      %v1294 = vadd.f32 %v1292, %v1293
      %v1295 = vrot.slane %v1294, 4
      %v1296 = vadd.f32 %v1294, %v1295
      %v1297 = vrot.slane %v1296, 2
      %v1298 = vadd.f32 %v1296, %v1297
      %v1299 = vrot.slane %v1298, 1
      %v1300 = vadd.f32 %v1298, %v1299
      %v1301 = vsel %vm1263, %v1231, 0.0
      %v1302 = vsel %vm1263, %v1232, 0.0
      %v1303 = vadd.f32 %v1301, %v1302
      %v1304 = vsel %vm1263, %v1233, 0.0
      %v1305 = vadd.f32 %v1303, %v1304
      %v1306 = vsel %vm1263, %v1234, 0.0
      %v1307 = vadd.f32 %v1305, %v1306
      %v1308 = vsel %vm1263, %v1235, 0.0
      %v1309 = vadd.f32 %v1307, %v1308
      %v1310 = vsel %vm1263, %v1236, 0.0
      %v1311 = vadd.f32 %v1309, %v1310
      %v1312 = vsel %vm1263, %v1237, 0.0
      %v1313 = vadd.f32 %v1311, %v1312
      %v1314 = vsel %vm1263, %v1238, 0.0
      %v1315 = vadd.f32 %v1313, %v1314
      %v1316 = vsel %vm1263, %v1239, 0.0
      %v1317 = vadd.f32 %v1315, %v1316
      %v1318 = vsel %vm1263, %v1240, 0.0
      %v1319 = vadd.f32 %v1317, %v1318
      %v1320 = vsel %vm1263, %v1241, 0.0
      %v1321 = vadd.f32 %v1319, %v1320
      %v1322 = vsel %vm1263, %v1242, 0.0
      %v1323 = vadd.f32 %v1321, %v1322
      %v1324 = vsel %vm1263, %v1243, 0.0
      %v1325 = vadd.f32 %v1323, %v1324
      %v1326 = vsel %vm1263, %v1244, 0.0
      %v1327 = vadd.f32 %v1325, %v1326
      %v1328 = vsel %vm1263, %v1245, 0.0
      %v1329 = vadd.f32 %v1327, %v1328
      %v1330 = vsel %vm1263, %v1246, 0.0
      %v1331 = vadd.f32 %v1329, %v1330
      %v1332 = vrot.slane %v1331, 4
      %v1333 = vadd.f32 %v1331, %v1332
      %v1334 = vrot.slane %v1333, 2
      %v1335 = vadd.f32 %v1333, %v1334
      %v1336 = vrot.slane %v1335, 1
      %v1337 = vadd.f32 %v1335, %v1336
      %v1338 = vlaneseq
      %v1339 = vshrl.u32 %v1338, 7
      %v1340 = vlaneseq
      %v1341 = vand.u32 %v1340, 127
      %vm1342 = vcmp.eq.s32.totalorder %v1339, 0
      %vm1343 = vcmp.eq.s32.totalorder %v1341, 0
      %vm1344 = vmand %vm1342, %vm1343
      %1346 = vset.pattern.permute.xlu0 0
      %1347 = vperm.xlu0 %1346, %v1300
      %v1348 = vpop.permute.xlu0 %1347
      %v1350 = vsel %vm1344, %v1348, 0.0
      %vm1351 = vcmp.eq.s32.totalorder %v1341, 1
      %vm1352 = vmand %vm1342, %vm1351
      %1354 = vset.pattern.permute.xlu0 0
      %1355 = vperm.xlu0 %1354, %v1337
      %v1356 = vpop.permute.xlu0 %1355
      %v1358 = vsel %vm1352, %v1356, 0.0
      %v1359 = vadd.f32 %v1350, %v1358
      %1360 = vst [vmem:[#allocation18] sm:$0xff] %v1359
    $region81: #{premodel_forward.5} parent=1 // pred_fallthru
      _
    // Predicated region
    $region82: #{premodel_forward.5} parent=1 // pred_check
      _
    $region83: #{premodel_forward.5} parent=1 // pred_check_branch
      %1362 = sbr.rel (0) target = $region85
    $region84: #{premodel_forward.5} parent=1 // pred_region
      %s1364 = ssub.s32 128, 128
      %1365 = vsyncadd [#allocation5], %s1364
      %s1367 = sshll.u32 [#allocation18], 4
      %s1368 = int_to_ptr.vmem [resolvable:$true] %s1367
      %1370 = dma.vmem_to_hbm [thread:$0]  %s1368, 128, %s9, [#allocation5]
    $region85: #{premodel_forward.5} parent=1 // pred_fallthru
      _
    // Predicated region
    $region86: #{premodel_forward.5} parent=1 // pred_check
      _
    $region87: #{premodel_forward.5} parent=1 // pred_check_branch
      %1372 = sbr.rel (0) target = $region89
    $region88: #{premodel_forward.5} parent=1 // pred_region
      %1373 = dma.done [#allocation5], 128
    $region89: #{premodel_forward.5} parent=1 // pred_fallthru
      _
    %1374 = vsyncpa [#allocation4], 1
    %1375 = vsyncpa [#allocation7], 1
    %1376 = vsyncpa [#allocation10], 1
    %1377 = vsyncpa [#allocation13], 1
    %1378 = vsyncpa [#allocation16], 1
    %1379 = vsyncpa [#allocation5], 1

</llo_original>
